<compile_context>
chip_gen: v7x
topology: tpu7x:2x2x1
jax: 0.10.0
libtpu: 0.0.40
codegen_flags: <defaults>
</compile_context>

<pallas_src>
import functools
import numpy as np
import jax
import jax.numpy as jnp
from jax.experimental import pallas as pl
from jax.experimental.pallas import tpu as pltpu

C = 408          # channels
G = 17           # conv groups
Cg = C // G      # 24 channels per group
KH = KW = 3
STRIDE = 2
PAD = 1
EPS = 1e-5


def _num_parallel_steps():
    """2 grid steps only on 2-TensorCore chips (v7x); 1 step on v5e/v6e."""
    try:
        kind = jax.devices()[0].device_kind.lower()
    except Exception:
        kind = ""
    return 2 if "v7" in kind else 1


def _fused_kernel(p_ref, w_ref, gb_ref, o_ref, *, inv_n):
    # relu19 (padding zeros are ReLU fixed points, so ReLU commutes with im2col)
    p = jnp.maximum(p_ref[...], 0.0)                                  # (GB, K, OHWP)
    # grouped conv as one batched MXU matmul; lane axis = OHWP (dense stores)
    y = jax.lax.dot_general(
        w_ref[...], p,
        dimension_numbers=(((2,), (1,)), ((0,), (0,))),
        preferred_element_type=jnp.float32)                           # (GB, Cg, OHWP)
    # batchnorm2d (training mode): biased per-channel batch stats over the OHW
    # valid columns.  Padded lanes of y are exactly zero, so plain sums are exact;
    # divide by the true element count instead of jnp.mean over the padded axis.
    s1 = jnp.sum(y, axis=2, keepdims=True)                            # (GB, Cg, 1)
    s2 = jnp.sum(y * y, axis=2, keepdims=True)                        # (GB, Cg, 1)
    mean = s1 * inv_n
    var = s2 * inv_n - mean * mean
    inv = jax.lax.rsqrt(var + EPS)                                    # EUP
    gb = gb_ref[...]                                                  # (GB, Cg, 2)
    scale = inv * gb[..., 0:1]                                        # gamma * inv
    shift = gb[..., 1:2] - mean * scale                               # beta - mean*scale
    # relu20; padded lanes become max(shift, 0) and are trimmed in the wrapper
    o_ref[...] = jnp.maximum(y * scale + shift, 0.0)


def fused_relu_gconv_bn_relu(x, weight, gamma, beta):
    """x: (1, C, H, W) f32 NCHW; weight: (C, Cg, 3, 3) OIHW; gamma/beta: (C,)."""
    N, Cin, H, W = x.shape
    assert N == 1 and Cin == C
    OH = (H + 2 * PAD - KH) // STRIDE + 1
    OW = (W + 2 * PAD - KW) // STRIDE + 1
    OHW = OH * OW
    OHWP = ((OHW + 127) // 128) * 128          # lane-dense width (196 -> 256)
    K = Cg * KH * KW

    nsteps = _num_parallel_steps()
    GB = -(-G // nsteps)                        # groups per grid step
    GP = GB * nsteps                            # 17 (v5e/v6e) or 18 (v7x)

    # ---- glue: im2col in plain JAX, built straight into the padded lane-dense
    # (G, K, OHWP) layout so the layout cost is paid exactly once.
    # TODO(synk): folding im2col into the kernel (stride-2 slices from the padded
    # 30x30 input) would remove the pat HBM round-trip but needs lane-strided
    # in-kernel gathers / reshapes; kept in XLA glue for lowering robustness.
    xp = jnp.pad(x[0], ((0, 0), (PAD, PAD), (PAD, PAD)))              # (C, H+2, W+2)
    xg = xp.reshape(G, Cg, H + 2 * PAD, W + 2 * PAD)
    taps = [xg[:, :, kh:kh + STRIDE * OH:STRIDE, kw:kw + STRIDE * OW:STRIDE]
            for kh in range(KH) for kw in range(KW)]                  # each (G,Cg,OH,OW)
    pat = jnp.stack(taps, axis=2).reshape(G, K, OHW)                  # k = ic*9+kh*3+kw
    pat = jnp.pad(pat, ((0, GP - G), (0, 0), (0, OHWP - OHW)))        # (GP, K, OHWP)

    wk = weight.reshape(G, Cg, K)                                     # (G, Cg_out, K)
    gb = jnp.stack([gamma.astype(jnp.float32),
                    beta.astype(jnp.float32)], axis=-1).reshape(G, Cg, 2)
    if GP > G:                                                        # v7x path only
        wk = jnp.pad(wk, ((0, GP - G), (0, 0), (0, 0)))
        gb = jnp.pad(gb, ((0, GP - G), (0, 0), (0, 0)))

    kernel = functools.partial(_fused_kernel, inv_n=1.0 / OHW)
    bytes_accessed = 4 * (pat.size + wk.size + gb.size + GP * Cg * OHWP)
    cost = pl.CostEstimate(flops=2 * C * K * OHW,
                           transcendentals=C,
                           bytes_accessed=int(bytes_accessed))

    out = pl.pallas_call(
        kernel,
        out_shape=jax.ShapeDtypeStruct((GP, Cg, OHWP), jnp.float32),
        grid_spec=pltpu.PrefetchScalarGridSpec(
            num_scalar_prefetch=0,
            grid=(nsteps,),
            in_specs=[
                pl.BlockSpec((GB, K, OHWP), lambda i: (i, 0, 0)),
                pl.BlockSpec((GB, Cg, K), lambda i: (i, 0, 0)),
                pl.BlockSpec((GB, Cg, 2), lambda i: (i, 0, 0)),
            ],
            out_specs=pl.BlockSpec((GB, Cg, OHWP), lambda i: (i, 0, 0)),
        ),
        compiler_params=pltpu.CompilerParams(
            dimension_semantics=("parallel",)),
        cost_estimate=cost,
    )(pat, wk, gb)

    # ---- glue: (G, Cg, OH, OW) is already group-major NCHW — slice + reshape only
    return out[:G, :, :OHW].reshape(C, OH, OW)[None]


def _reference(x, weight, gamma, beta):
    """Pure-JAX reference mirroring the PyTorch module (training-mode BN)."""
    x = jnp.maximum(x, 0.0)
    y = jax.lax.conv_general_dilated(
        x, weight, window_strides=(STRIDE, STRIDE),
        padding=((PAD, PAD), (PAD, PAD)),
        dimension_numbers=("NCHW", "OIHW", "NCHW"),
        feature_group_count=G,
        precision=jax.lax.Precision.HIGHEST)
    mean = y.mean(axis=(0, 2, 3), keepdims=True)
    var = ((y - mean) ** 2).mean(axis=(0, 2, 3), keepdims=True)
    yn = (y - mean) * jax.lax.rsqrt(var + EPS) \
        * gamma.reshape(1, -1, 1, 1) + beta.reshape(1, -1, 1, 1)
    return jnp.maximum(yn, 0.0)


if __name__ == "__main__":
    # TODO(synk): BatchNorm running_mean/running_var momentum updates are a side
    # effect not reflected in the returned value and are not modeled here.
    key = jax.random.PRNGKey(0)
    k1, k2, k3, k4 = jax.random.split(key, 4)
    x = jax.random.normal(k1, (1, C, 28, 28), jnp.float32)
    weight = jax.random.normal(k2, (C, Cg, KH, KW), jnp.float32) * 0.05
    gamma = 1.0 + 0.1 * jax.random.normal(k3, (C,), jnp.float32)
    beta = 0.1 * jax.random.normal(k4, (C,), jnp.float32)

    out = jax.jit(fused_relu_gconv_bn_relu)(x, weight, gamma, beta)
    out = jax.block_until_ready(out)
    assert out.shape == (1, C, 14, 14)

    ref = _reference(x, weight, gamma, beta)
    np.testing.assert_allclose(np.asarray(out), np.asarray(ref),
                               atol=1e-3, rtol=1e-3)
    print("KERNEL_OK")
</pallas_src>

<mosaic_0001>
module attributes {stable_mosaic.version = 11 : i64} {
  func.func @_fused_kernel(%arg0: i32, %arg1: memref<17x216x256xf32, #tpu.memory_space<vmem>>, %arg2: memref<17x24x216xf32, #tpu.memory_space<vmem>>, %arg3: memref<17x24x2xf32, #tpu.memory_space<vmem>>, %arg4: memref<17x24x256xf32, #tpu.memory_space<vmem>>) attributes {dimension_semantics = [#tpu.dimension_semantics<parallel>], iteration_bounds = array<i64: 1>, scalar_prefetch = 0 : i64, scratch_operands = 0 : i64, tpu.core_type = #tpu.core_type<tc>, window_params = [{transform_indices = @transform_0, window_bounds = array<i64: 17, 216, 256>}, {transform_indices = @transform_1, window_bounds = array<i64: 17, 24, 216>}, {transform_indices = @transform_2, window_bounds = array<i64: 17, 24, 2>}, {transform_indices = @transform_3, window_bounds = array<i64: 17, 24, 256>}]} {
    %c0 = arith.constant 0 : index
    %c0_0 = arith.constant 0 : index
    %c0_1 = arith.constant 0 : index
    %0 = vector.load %arg1[%c0, %c0_0, %c0_1] : memref<17x216x256xf32, #tpu.memory_space<vmem>>, vector<17x216x256xf32>
    %cst = arith.constant 0.000000e+00 : f32
    %1 = vector.broadcast %cst : f32 to vector<17x216x256xf32>
    %2 = arith.maximumf %0, %1 : vector<17x216x256xf32>
    %c0_2 = arith.constant 0 : index
    %c0_3 = arith.constant 0 : index
    %c0_4 = arith.constant 0 : index
    %3 = vector.load %arg2[%c0_2, %c0_3, %c0_4] : memref<17x24x216xf32, #tpu.memory_space<vmem>>, vector<17x24x216xf32>
    %cst_5 = arith.constant dense<0.000000e+00> : vector<17x24x256xf32>
    %4 = tpu.matmul %3, %2, %cst_5 {dimension_numbers = #tpu.dot_dimension_numbers<[2], [1], [1], [2], [0, 0, 0, 1, 1, 2], [0], [0]>} : vector<17x24x216xf32>, vector<17x216x256xf32>, vector<17x24x256xf32> -> vector<17x24x256xf32>
    %cst_6 = arith.constant dense<0.000000e+00> : vector<17x24xf32>
    %5 = vector.multi_reduction <add>, %4, %cst_6 [2] : vector<17x24x256xf32> to vector<17x24xf32>
    %6 = vector.shape_cast %5 : vector<17x24xf32> to vector<17x24x1xf32>
    %7 = arith.mulf %4, %4 : vector<17x24x256xf32>
    %cst_7 = arith.constant dense<0.000000e+00> : vector<17x24xf32>
    %8 = vector.multi_reduction <add>, %7, %cst_7 [2] : vector<17x24x256xf32> to vector<17x24xf32>
    %9 = vector.shape_cast %8 : vector<17x24xf32> to vector<17x24x1xf32>
    %cst_8 = arith.constant 0.00510204071 : f32
    %10 = vector.broadcast %cst_8 : f32 to vector<17x24x1xf32>
    %11 = arith.mulf %6, %10 : vector<17x24x1xf32>
    %cst_9 = arith.constant 0.00510204071 : f32
    %12 = vector.broadcast %cst_9 : f32 to vector<17x24x1xf32>
    %13 = arith.mulf %9, %12 : vector<17x24x1xf32>
    %14 = arith.mulf %11, %11 : vector<17x24x1xf32>
    %15 = arith.subf %13, %14 : vector<17x24x1xf32>
    %cst_10 = arith.constant 9.99999974E-6 : f32
    %16 = vector.broadcast %cst_10 : f32 to vector<17x24x1xf32>
    %17 = arith.addf %15, %16 : vector<17x24x1xf32>
    %18 = math.rsqrt %17 : vector<17x24x1xf32>
    %c0_11 = arith.constant 0 : index
    %c0_12 = arith.constant 0 : index
    %c0_13 = arith.constant 0 : index
    %19 = vector.load %arg3[%c0_11, %c0_12, %c0_13] : memref<17x24x2xf32, #tpu.memory_space<vmem>>, vector<17x24x2xf32>
    %20 = vector.extract_strided_slice %19 {offsets = [0, 0, 0], sizes = [17, 24, 1], strides = [1, 1, 1]} : vector<17x24x2xf32> to vector<17x24x1xf32>
    %21 = arith.mulf %18, %20 : vector<17x24x1xf32>
    %22 = vector.extract_strided_slice %19 {offsets = [0, 0, 1], sizes = [17, 24, 1], strides = [1, 1, 1]} : vector<17x24x2xf32> to vector<17x24x1xf32>
    %23 = arith.mulf %11, %21 : vector<17x24x1xf32>
    %24 = arith.subf %22, %23 : vector<17x24x1xf32>
    %25 = vector.broadcast %21 : vector<17x24x1xf32> to vector<17x24x256xf32>
    %26 = arith.mulf %4, %25 : vector<17x24x256xf32>
    %27 = vector.broadcast %24 : vector<17x24x1xf32> to vector<17x24x256xf32>
    %28 = arith.addf %26, %27 : vector<17x24x256xf32>
    %cst_14 = arith.constant 0.000000e+00 : f32
    %29 = vector.broadcast %cst_14 : f32 to vector<17x24x256xf32>
    %30 = arith.maximumf %28, %29 : vector<17x24x256xf32>
    %c0_15 = arith.constant 0 : index
    %c0_16 = arith.constant 0 : index
    %c0_17 = arith.constant 0 : index
    %31 = vector.load %arg4[%c0_15, %c0_16, %c0_17] : memref<17x24x256xf32, #tpu.memory_space<vmem>>, vector<17x24x256xf32>
    tpu.vector_store %arg4[%c0_15, %c0_16, %c0_17], %30 {strides = array<i32>} : memref<17x24x256xf32, #tpu.memory_space<vmem>>, vector<17x24x256xf32>,
    return
  }
  func.func @transform_0(%arg0: i32) -> (i32, i32, i32) {
    %c0_i32 = arith.constant 0 : i32
    %c0_i32_0 = arith.constant 0 : i32
    %c0_i32_1 = arith.constant 0 : i32
    return %arg0, %c0_i32, %c0_i32_0 : i32, i32, i32
  }
  func.func @transform_1(%arg0: i32) -> (i32, i32, i32) {
    %c0_i32 = arith.constant 0 : i32
    %c0_i32_0 = arith.constant 0 : i32
    %c0_i32_1 = arith.constant 0 : i32
    return %arg0, %c0_i32, %c0_i32_0 : i32, i32, i32
  }
  func.func @transform_2(%arg0: i32) -> (i32, i32, i32) {
    %c0_i32 = arith.constant 0 : i32
    %c0_i32_0 = arith.constant 0 : i32
    %c0_i32_1 = arith.constant 0 : i32
    return %arg0, %c0_i32, %c0_i32_0 : i32, i32, i32
  }
  func.func @transform_3(%arg0: i32) -> (i32, i32, i32) {
    %c0_i32 = arith.constant 0 : i32
    %c0_i32_0 = arith.constant 0 : i32
    %c0_i32_1 = arith.constant 0 : i32
    return %arg0, %c0_i32, %c0_i32_0 : i32, i32, i32
  }
}

</mosaic_0001>

<llo_original>
// kernel: fused_relu_gconv_bn_relu.1
$region0: #{fused_relu_gconv_bn_relu.1}
  #allocation0 [shape = 'u32[]', space=smem, size = 0x4, offset = 0x4, fixed_abs, tag = 'smem constant byte address 0x4 - core index']
  #allocation1 [shape = 'u32[144,128]{1,0:T(1,128)}', space=vmem, size = 0x12000, scoped, tag = 'internal scratch']
  %s0 = inlined_call_operand.vmem [shape: f32[17,216,256], index: 0, kind: input, shape index: {}]
  %s1 = inlined_call_operand.vmem [shape: f32[17,24,216], index: 1, kind: input, shape index: {}]
  %s2 = inlined_call_operand.vmem [shape: f32[17,24,2], index: 2, kind: input, shape index: {}]
  %s3 = inlined_call_operand.vmem [shape: f32[17,24,256], index: 3, kind: output, shape index: {}]
  %s4 = sld [smem:[#allocation0]]
  $region22: #{fused_relu_gconv_bn_relu.1} parent=0
    _
  %s6 = ssub.s32 1, %s4
  %s7 = scalar_select 0, %s6, %s4
  // Predicated region
  $region2: #{fused_relu_gconv_bn_relu.1} parent=0 // pred_check
    _
  $region3: #{fused_relu_gconv_bn_relu.1} parent=0 // pred_check_branch
    %9 = sbr.rel (0) target = $region5
  $region4: #{fused_relu_gconv_bn_relu.1} parent=0 // pred_region
    _
  $region5: #{fused_relu_gconv_bn_relu.1} parent=0 // pred_fallthru
    _
  // Predicated region
  $region6: #{fused_relu_gconv_bn_relu.1} parent=0 // pred_check
    _
  $region7: #{fused_relu_gconv_bn_relu.1} parent=0 // pred_check_branch
    %11 = sbr.rel (0) target = $region9
  $region8: #{fused_relu_gconv_bn_relu.1} parent=0 // pred_region
    _
  $region9: #{fused_relu_gconv_bn_relu.1} parent=0 // pred_fallthru
    _
  // Predicated region
  $region10: #{fused_relu_gconv_bn_relu.1} parent=0 // pred_check
    _
  $region11: #{fused_relu_gconv_bn_relu.1} parent=0 // pred_check_branch
    %13 = sbr.rel (0) target = $region13
  $region12: #{fused_relu_gconv_bn_relu.1} parent=0 // pred_region
    _
  $region13: #{fused_relu_gconv_bn_relu.1} parent=0 // pred_fallthru
    _
  %v14 = vld [vmem:[%s0] sm:$0xff]
  %v15 = vld [vmem:[%s0 + $0x8] sm:$0xff]
  %v16 = vld [vmem:[%s0 + $0x10] sm:$0xff]
  %v17 = vld [vmem:[%s0 + $0x18] sm:$0xff]
  %v18 = vld [vmem:[%s0 + $0x20] sm:$0xff]
  %v19 = vld [vmem:[%s0 + $0x28] sm:$0xff]
  %v20 = vld [vmem:[%s0 + $0x30] sm:$0xff]
  %v21 = vld [vmem:[%s0 + $0x38] sm:$0xff]
  %v22 = vld [vmem:[%s0 + $0x40] sm:$0xff]
  %v23 = vld [vmem:[%s0 + $0x48] sm:$0xff]
  %v24 = vld [vmem:[%s0 + $0x50] sm:$0xff]
  %v25 = vld [vmem:[%s0 + $0x58] sm:$0xff]
  %v26 = vld [vmem:[%s0 + $0x60] sm:$0xff]
  %v27 = vld [vmem:[%s0 + $0x68] sm:$0xff]
  %v28 = vld [vmem:[%s0 + $0x70] sm:$0xff]
  %v29 = vld [vmem:[%s0 + $0x78] sm:$0xff]
  %v30 = vld [vmem:[%s0 + $0x80] sm:$0xff]
  %v31 = vld [vmem:[%s0 + $0x88] sm:$0xff]
  %v32 = vld [vmem:[%s0 + $0x90] sm:$0xff]
  %v33 = vld [vmem:[%s0 + $0x98] sm:$0xff]
  %v34 = vld [vmem:[%s0 + $0xa0] sm:$0xff]
  %v35 = vld [vmem:[%s0 + $0xa8] sm:$0xff]
  %v36 = vld [vmem:[%s0 + $0xb0] sm:$0xff]
  %v37 = vld [vmem:[%s0 + $0xb8] sm:$0xff]
  %v38 = vld [vmem:[%s0 + $0xc0] sm:$0xff]
  %v39 = vld [vmem:[%s0 + $0xc8] sm:$0xff]
  %v40 = vld [vmem:[%s0 + $0xd0] sm:$0xff]
  %v41 = vld [vmem:[%s0 + $0xd8] sm:$0xff]
  %v42 = vld [vmem:[%s0 + $0xe0] sm:$0xff]
  %v43 = vld [vmem:[%s0 + $0xe8] sm:$0xff]
  %v44 = vld [vmem:[%s0 + $0xf0] sm:$0xff]
  %v45 = vld [vmem:[%s0 + $0xf8] sm:$0xff]
  %v46 = vld [vmem:[%s0 + $0x100] sm:$0xff]
  %v47 = vld [vmem:[%s0 + $0x108] sm:$0xff]
  %v48 = vld [vmem:[%s0 + $0x110] sm:$0xff]
  %v49 = vld [vmem:[%s0 + $0x118] sm:$0xff]
  %v50 = vld [vmem:[%s0 + $0x120] sm:$0xff]
  %v51 = vld [vmem:[%s0 + $0x128] sm:$0xff]
  %v52 = vld [vmem:[%s0 + $0x130] sm:$0xff]
  %v53 = vld [vmem:[%s0 + $0x138] sm:$0xff]
  %v54 = vld [vmem:[%s0 + $0x140] sm:$0xff]
  %v55 = vld [vmem:[%s0 + $0x148] sm:$0xff]
  %v56 = vld [vmem:[%s0 + $0x150] sm:$0xff]
  %v57 = vld [vmem:[%s0 + $0x158] sm:$0xff]
  %v58 = vld [vmem:[%s0 + $0x160] sm:$0xff]
  %v59 = vld [vmem:[%s0 + $0x168] sm:$0xff]
  %v60 = vld [vmem:[%s0 + $0x170] sm:$0xff]
  %v61 = vld [vmem:[%s0 + $0x178] sm:$0xff]
  %v62 = vld [vmem:[%s0 + $0x180] sm:$0xff]
  %v63 = vld [vmem:[%s0 + $0x188] sm:$0xff]
  %v64 = vld [vmem:[%s0 + $0x190] sm:$0xff]
  %v65 = vld [vmem:[%s0 + $0x198] sm:$0xff]
  %v66 = vld [vmem:[%s0 + $0x1a0] sm:$0xff]
  %v67 = vld [vmem:[%s0 + $0x1a8] sm:$0xff]
  %v68 = vld [vmem:[%s0 + $0x1b0] sm:$0xff]
  %v69 = vld [vmem:[%s0 + $0x1b8] sm:$0xff]
  %v70 = vld [vmem:[%s0 + $0x1c0] sm:$0xff]
  %v71 = vld [vmem:[%s0 + $0x1c8] sm:$0xff]
  %v72 = vld [vmem:[%s0 + $0x1d0] sm:$0xff]
  %v73 = vld [vmem:[%s0 + $0x1d8] sm:$0xff]
  %v74 = vld [vmem:[%s0 + $0x1e0] sm:$0xff]
  %v75 = vld [vmem:[%s0 + $0x1e8] sm:$0xff]
  %v76 = vld [vmem:[%s0 + $0x1f0] sm:$0xff]
  %v77 = vld [vmem:[%s0 + $0x1f8] sm:$0xff]
  %v78 = vld [vmem:[%s0 + $0x200] sm:$0xff]
  %v79 = vld [vmem:[%s0 + $0x208] sm:$0xff]
  %v80 = vld [vmem:[%s0 + $0x210] sm:$0xff]
  %v81 = vld [vmem:[%s0 + $0x218] sm:$0xff]
  %v82 = vld [vmem:[%s0 + $0x220] sm:$0xff]
  %v83 = vld [vmem:[%s0 + $0x228] sm:$0xff]
  %v84 = vld [vmem:[%s0 + $0x230] sm:$0xff]
  %v85 = vld [vmem:[%s0 + $0x238] sm:$0xff]
  %v86 = vld [vmem:[%s0 + $0x240] sm:$0xff]
  %v87 = vld [vmem:[%s0 + $0x248] sm:$0xff]
  %v88 = vld [vmem:[%s0 + $0x250] sm:$0xff]
  %v89 = vld [vmem:[%s0 + $0x258] sm:$0xff]
  %v90 = vld [vmem:[%s0 + $0x260] sm:$0xff]
  %v91 = vld [vmem:[%s0 + $0x268] sm:$0xff]
  %v92 = vld [vmem:[%s0 + $0x270] sm:$0xff]
  %v93 = vld [vmem:[%s0 + $0x278] sm:$0xff]
  %v94 = vld [vmem:[%s0 + $0x280] sm:$0xff]
  %v95 = vld [vmem:[%s0 + $0x288] sm:$0xff]
  %v96 = vld [vmem:[%s0 + $0x290] sm:$0xff]
  %v97 = vld [vmem:[%s0 + $0x298] sm:$0xff]
  %v98 = vld [vmem:[%s0 + $0x2a0] sm:$0xff]
  %v99 = vld [vmem:[%s0 + $0x2a8] sm:$0xff]
  %v100 = vld [vmem:[%s0 + $0x2b0] sm:$0xff]
  %v101 = vld [vmem:[%s0 + $0x2b8] sm:$0xff]
  %v102 = vld [vmem:[%s0 + $0x2c0] sm:$0xff]
  %v103 = vld [vmem:[%s0 + $0x2c8] sm:$0xff]
  %v104 = vld [vmem:[%s0 + $0x2d0] sm:$0xff]
  %v105 = vld [vmem:[%s0 + $0x2d8] sm:$0xff]
  %v106 = vld [vmem:[%s0 + $0x2e0] sm:$0xff]
  %v107 = vld [vmem:[%s0 + $0x2e8] sm:$0xff]
  %v108 = vld [vmem:[%s0 + $0x2f0] sm:$0xff]
  %v109 = vld [vmem:[%s0 + $0x2f8] sm:$0xff]
  %v110 = vld [vmem:[%s0 + $0x300] sm:$0xff]
  %v111 = vld [vmem:[%s0 + $0x308] sm:$0xff]
  %v112 = vld [vmem:[%s0 + $0x310] sm:$0xff]
  %v113 = vld [vmem:[%s0 + $0x318] sm:$0xff]
  %v114 = vld [vmem:[%s0 + $0x320] sm:$0xff]
  %v115 = vld [vmem:[%s0 + $0x328] sm:$0xff]
  %v116 = vld [vmem:[%s0 + $0x330] sm:$0xff]
  %v117 = vld [vmem:[%s0 + $0x338] sm:$0xff]
  %v118 = vld [vmem:[%s0 + $0x340] sm:$0xff]
  %v119 = vld [vmem:[%s0 + $0x348] sm:$0xff]
  %v120 = vld [vmem:[%s0 + $0x350] sm:$0xff]
  %v121 = vld [vmem:[%s0 + $0x358] sm:$0xff]
  %v122 = vld [vmem:[%s0 + $0x360] sm:$0xff]
  %v123 = vld [vmem:[%s0 + $0x368] sm:$0xff]
  %v124 = vld [vmem:[%s0 + $0x370] sm:$0xff]
  %v125 = vld [vmem:[%s0 + $0x378] sm:$0xff]
  %v126 = vld [vmem:[%s0 + $0x380] sm:$0xff]
  %v127 = vld [vmem:[%s0 + $0x388] sm:$0xff]
  %v128 = vld [vmem:[%s0 + $0x390] sm:$0xff]
  %v129 = vld [vmem:[%s0 + $0x398] sm:$0xff]
  %v130 = vld [vmem:[%s0 + $0x3a0] sm:$0xff]
  %v131 = vld [vmem:[%s0 + $0x3a8] sm:$0xff]
  %v132 = vld [vmem:[%s0 + $0x3b0] sm:$0xff]
  %v133 = vld [vmem:[%s0 + $0x3b8] sm:$0xff]
  %v134 = vld [vmem:[%s0 + $0x3c0] sm:$0xff]
  %v135 = vld [vmem:[%s0 + $0x3c8] sm:$0xff]
  %v136 = vld [vmem:[%s0 + $0x3d0] sm:$0xff]
  %v137 = vld [vmem:[%s0 + $0x3d8] sm:$0xff]
  %v138 = vld [vmem:[%s0 + $0x3e0] sm:$0xff]
  %v139 = vld [vmem:[%s0 + $0x3e8] sm:$0xff]
  %v140 = vld [vmem:[%s0 + $0x3f0] sm:$0xff]
  %v141 = vld [vmem:[%s0 + $0x3f8] sm:$0xff]
  %v142 = vld [vmem:[%s0 + $0x400] sm:$0xff]
  %v143 = vld [vmem:[%s0 + $0x408] sm:$0xff]
  %v144 = vld [vmem:[%s0 + $0x410] sm:$0xff]
  %v145 = vld [vmem:[%s0 + $0x418] sm:$0xff]
  %v146 = vld [vmem:[%s0 + $0x420] sm:$0xff]
  %v147 = vld [vmem:[%s0 + $0x428] sm:$0xff]
  %v148 = vld [vmem:[%s0 + $0x430] sm:$0xff]
  %v149 = vld [vmem:[%s0 + $0x438] sm:$0xff]
  %v150 = vld [vmem:[%s0 + $0x440] sm:$0xff]
  %v151 = vld [vmem:[%s0 + $0x448] sm:$0xff]
  %v152 = vld [vmem:[%s0 + $0x450] sm:$0xff]
  %v153 = vld [vmem:[%s0 + $0x458] sm:$0xff]
  %v154 = vld [vmem:[%s0 + $0x460] sm:$0xff]
  %v155 = vld [vmem:[%s0 + $0x468] sm:$0xff]
  %v156 = vld [vmem:[%s0 + $0x470] sm:$0xff]
  %v157 = vld [vmem:[%s0 + $0x478] sm:$0xff]
  %v158 = vld [vmem:[%s0 + $0x480] sm:$0xff]
  %v159 = vld [vmem:[%s0 + $0x488] sm:$0xff]
  %v160 = vld [vmem:[%s0 + $0x490] sm:$0xff]
  %v161 = vld [vmem:[%s0 + $0x498] sm:$0xff]
  %v162 = vld [vmem:[%s0 + $0x4a0] sm:$0xff]
  %v163 = vld [vmem:[%s0 + $0x4a8] sm:$0xff]
  %v164 = vld [vmem:[%s0 + $0x4b0] sm:$0xff]
  %v165 = vld [vmem:[%s0 + $0x4b8] sm:$0xff]
  %v166 = vld [vmem:[%s0 + $0x4c0] sm:$0xff]
  %v167 = vld [vmem:[%s0 + $0x4c8] sm:$0xff]
  %v168 = vld [vmem:[%s0 + $0x4d0] sm:$0xff]
  %v169 = vld [vmem:[%s0 + $0x4d8] sm:$0xff]
  %v170 = vld [vmem:[%s0 + $0x4e0] sm:$0xff]
  %v171 = vld [vmem:[%s0 + $0x4e8] sm:$0xff]
  %v172 = vld [vmem:[%s0 + $0x4f0] sm:$0xff]
  %v173 = vld [vmem:[%s0 + $0x4f8] sm:$0xff]
  %v174 = vld [vmem:[%s0 + $0x500] sm:$0xff]
  %v175 = vld [vmem:[%s0 + $0x508] sm:$0xff]
  %v176 = vld [vmem:[%s0 + $0x510] sm:$0xff]
  %v177 = vld [vmem:[%s0 + $0x518] sm:$0xff]
  %v178 = vld [vmem:[%s0 + $0x520] sm:$0xff]
  %v179 = vld [vmem:[%s0 + $0x528] sm:$0xff]
  %v180 = vld [vmem:[%s0 + $0x530] sm:$0xff]
  %v181 = vld [vmem:[%s0 + $0x538] sm:$0xff]
  %v182 = vld [vmem:[%s0 + $0x540] sm:$0xff]
  %v183 = vld [vmem:[%s0 + $0x548] sm:$0xff]
  %v184 = vld [vmem:[%s0 + $0x550] sm:$0xff]
  %v185 = vld [vmem:[%s0 + $0x558] sm:$0xff]
  %v186 = vld [vmem:[%s0 + $0x560] sm:$0xff]
  %v187 = vld [vmem:[%s0 + $0x568] sm:$0xff]
  %v188 = vld [vmem:[%s0 + $0x570] sm:$0xff]
  %v189 = vld [vmem:[%s0 + $0x578] sm:$0xff]
  %v190 = vld [vmem:[%s0 + $0x580] sm:$0xff]
  %v191 = vld [vmem:[%s0 + $0x588] sm:$0xff]
  %v192 = vld [vmem:[%s0 + $0x590] sm:$0xff]
  %v193 = vld [vmem:[%s0 + $0x598] sm:$0xff]
  %v194 = vld [vmem:[%s0 + $0x5a0] sm:$0xff]
  %v195 = vld [vmem:[%s0 + $0x5a8] sm:$0xff]
  %v196 = vld [vmem:[%s0 + $0x5b0] sm:$0xff]
  %v197 = vld [vmem:[%s0 + $0x5b8] sm:$0xff]
  %v198 = vld [vmem:[%s0 + $0x5c0] sm:$0xff]
  %v199 = vld [vmem:[%s0 + $0x5c8] sm:$0xff]
  %v200 = vld [vmem:[%s0 + $0x5d0] sm:$0xff]
  %v201 = vld [vmem:[%s0 + $0x5d8] sm:$0xff]
  %v202 = vld [vmem:[%s0 + $0x5e0] sm:$0xff]
  %v203 = vld [vmem:[%s0 + $0x5e8] sm:$0xff]
  %v204 = vld [vmem:[%s0 + $0x5f0] sm:$0xff]
  %v205 = vld [vmem:[%s0 + $0x5f8] sm:$0xff]
  %v206 = vld [vmem:[%s0 + $0x600] sm:$0xff]
  %v207 = vld [vmem:[%s0 + $0x608] sm:$0xff]
  %v208 = vld [vmem:[%s0 + $0x610] sm:$0xff]
  %v209 = vld [vmem:[%s0 + $0x618] sm:$0xff]
  %v210 = vld [vmem:[%s0 + $0x620] sm:$0xff]
  %v211 = vld [vmem:[%s0 + $0x628] sm:$0xff]
  %v212 = vld [vmem:[%s0 + $0x630] sm:$0xff]
  %v213 = vld [vmem:[%s0 + $0x638] sm:$0xff]
  %v214 = vld [vmem:[%s0 + $0x640] sm:$0xff]
  %v215 = vld [vmem:[%s0 + $0x648] sm:$0xff]
  %v216 = vld [vmem:[%s0 + $0x650] sm:$0xff]
  %v217 = vld [vmem:[%s0 + $0x658] sm:$0xff]
  %v218 = vld [vmem:[%s0 + $0x660] sm:$0xff]
  %v219 = vld [vmem:[%s0 + $0x668] sm:$0xff]
  %v220 = vld [vmem:[%s0 + $0x670] sm:$0xff]
  %v221 = vld [vmem:[%s0 + $0x678] sm:$0xff]
  %v222 = vld [vmem:[%s0 + $0x680] sm:$0xff]
  %v223 = vld [vmem:[%s0 + $0x688] sm:$0xff]
  %v224 = vld [vmem:[%s0 + $0x690] sm:$0xff]
  %v225 = vld [vmem:[%s0 + $0x698] sm:$0xff]
  %v226 = vld [vmem:[%s0 + $0x6a0] sm:$0xff]
  %v227 = vld [vmem:[%s0 + $0x6a8] sm:$0xff]
  %v228 = vld [vmem:[%s0 + $0x6b0] sm:$0xff]
  %v229 = vld [vmem:[%s0 + $0x6b8] sm:$0xff]
  %v230 = vld [vmem:[%s0 + $0x6c0] sm:$0xff]
  %v231 = vld [vmem:[%s0 + $0x6c8] sm:$0xff]
  %v232 = vld [vmem:[%s0 + $0x6d0] sm:$0xff]
  %v233 = vld [vmem:[%s0 + $0x6d8] sm:$0xff]
  %v234 = vld [vmem:[%s0 + $0x6e0] sm:$0xff]
  %v235 = vld [vmem:[%s0 + $0x6e8] sm:$0xff]
  %v236 = vld [vmem:[%s0 + $0x6f0] sm:$0xff]
  %v237 = vld [vmem:[%s0 + $0x6f8] sm:$0xff]
  %v238 = vld [vmem:[%s0 + $0x700] sm:$0xff]
  %v239 = vld [vmem:[%s0 + $0x708] sm:$0xff]
  %v240 = vld [vmem:[%s0 + $0x710] sm:$0xff]
  %v241 = vld [vmem:[%s0 + $0x718] sm:$0xff]
  %v242 = vld [vmem:[%s0 + $0x720] sm:$0xff]
  %v243 = vld [vmem:[%s0 + $0x728] sm:$0xff]
  %v244 = vld [vmem:[%s0 + $0x730] sm:$0xff]
  %v245 = vld [vmem:[%s0 + $0x738] sm:$0xff]
  %v246 = vld [vmem:[%s0 + $0x740] sm:$0xff]
  %v247 = vld [vmem:[%s0 + $0x748] sm:$0xff]
  %v248 = vld [vmem:[%s0 + $0x750] sm:$0xff]
  %v249 = vld [vmem:[%s0 + $0x758] sm:$0xff]
  %v250 = vld [vmem:[%s0 + $0x760] sm:$0xff]
  %v251 = vld [vmem:[%s0 + $0x768] sm:$0xff]
  %v252 = vld [vmem:[%s0 + $0x770] sm:$0xff]
  %v253 = vld [vmem:[%s0 + $0x778] sm:$0xff]
  %v254 = vld [vmem:[%s0 + $0x780] sm:$0xff]
  %v255 = vld [vmem:[%s0 + $0x788] sm:$0xff]
  %v256 = vld [vmem:[%s0 + $0x790] sm:$0xff]
  %v257 = vld [vmem:[%s0 + $0x798] sm:$0xff]
  %v258 = vld [vmem:[%s0 + $0x7a0] sm:$0xff]
  %v259 = vld [vmem:[%s0 + $0x7a8] sm:$0xff]
  %v260 = vld [vmem:[%s0 + $0x7b0] sm:$0xff]
  %v261 = vld [vmem:[%s0 + $0x7b8] sm:$0xff]
  %v262 = vld [vmem:[%s0 + $0x7c0] sm:$0xff]
  %v263 = vld [vmem:[%s0 + $0x7c8] sm:$0xff]
  %v264 = vld [vmem:[%s0 + $0x7d0] sm:$0xff]
  %v265 = vld [vmem:[%s0 + $0x7d8] sm:$0xff]
  %v266 = vld [vmem:[%s0 + $0x7e0] sm:$0xff]
  %v267 = vld [vmem:[%s0 + $0x7e8] sm:$0xff]
  %v268 = vld [vmem:[%s0 + $0x7f0] sm:$0xff]
  %v269 = vld [vmem:[%s0 + $0x7f8] sm:$0xff]
  %v270 = vld [vmem:[%s0 + $0x800] sm:$0xff]
  %v271 = vld [vmem:[%s0 + $0x808] sm:$0xff]
  %v272 = vld [vmem:[%s0 + $0x810] sm:$0xff]
  %v273 = vld [vmem:[%s0 + $0x818] sm:$0xff]
  %v274 = vld [vmem:[%s0 + $0x820] sm:$0xff]
  %v275 = vld [vmem:[%s0 + $0x828] sm:$0xff]
  %v276 = vld [vmem:[%s0 + $0x830] sm:$0xff]
  %v277 = vld [vmem:[%s0 + $0x838] sm:$0xff]
  %v278 = vld [vmem:[%s0 + $0x840] sm:$0xff]
  %v279 = vld [vmem:[%s0 + $0x848] sm:$0xff]
  %v280 = vld [vmem:[%s0 + $0x850] sm:$0xff]
  %v281 = vld [vmem:[%s0 + $0x858] sm:$0xff]
  %v282 = vld [vmem:[%s0 + $0x860] sm:$0xff]
  %v283 = vld [vmem:[%s0 + $0x868] sm:$0xff]
  %v284 = vld [vmem:[%s0 + $0x870] sm:$0xff]
  %v285 = vld [vmem:[%s0 + $0x878] sm:$0xff]
  %v286 = vld [vmem:[%s0 + $0x880] sm:$0xff]
  %v287 = vld [vmem:[%s0 + $0x888] sm:$0xff]
  %v288 = vld [vmem:[%s0 + $0x890] sm:$0xff]
  %v289 = vld [vmem:[%s0 + $0x898] sm:$0xff]
  %v290 = vld [vmem:[%s0 + $0x8a0] sm:$0xff]
  %v291 = vld [vmem:[%s0 + $0x8a8] sm:$0xff]
  %v292 = vld [vmem:[%s0 + $0x8b0] sm:$0xff]
  %v293 = vld [vmem:[%s0 + $0x8b8] sm:$0xff]
  %v294 = vld [vmem:[%s0 + $0x8c0] sm:$0xff]
  %v295 = vld [vmem:[%s0 + $0x8c8] sm:$0xff]
  %v296 = vld [vmem:[%s0 + $0x8d0] sm:$0xff]
  %v297 = vld [vmem:[%s0 + $0x8d8] sm:$0xff]
  %v298 = vld [vmem:[%s0 + $0x8e0] sm:$0xff]
  %v299 = vld [vmem:[%s0 + $0x8e8] sm:$0xff]
  %v300 = vld [vmem:[%s0 + $0x8f0] sm:$0xff]
  %v301 = vld [vmem:[%s0 + $0x8f8] sm:$0xff]
  %v302 = vld [vmem:[%s0 + $0x900] sm:$0xff]
  %v303 = vld [vmem:[%s0 + $0x908] sm:$0xff]
  %v304 = vld [vmem:[%s0 + $0x910] sm:$0xff]
  %v305 = vld [vmem:[%s0 + $0x918] sm:$0xff]
  %v306 = vld [vmem:[%s0 + $0x920] sm:$0xff]
  %v307 = vld [vmem:[%s0 + $0x928] sm:$0xff]
  %v308 = vld [vmem:[%s0 + $0x930] sm:$0xff]
  %v309 = vld [vmem:[%s0 + $0x938] sm:$0xff]
  %v310 = vld [vmem:[%s0 + $0x940] sm:$0xff]
  %v311 = vld [vmem:[%s0 + $0x948] sm:$0xff]
  %v312 = vld [vmem:[%s0 + $0x950] sm:$0xff]
  %v313 = vld [vmem:[%s0 + $0x958] sm:$0xff]
  %v314 = vld [vmem:[%s0 + $0x960] sm:$0xff]
  %v315 = vld [vmem:[%s0 + $0x968] sm:$0xff]
  %v316 = vld [vmem:[%s0 + $0x970] sm:$0xff]
  %v317 = vld [vmem:[%s0 + $0x978] sm:$0xff]
  %v318 = vld [vmem:[%s0 + $0x980] sm:$0xff]
  %v319 = vld [vmem:[%s0 + $0x988] sm:$0xff]
  %v320 = vld [vmem:[%s0 + $0x990] sm:$0xff]
  %v321 = vld [vmem:[%s0 + $0x998] sm:$0xff]
  %v322 = vld [vmem:[%s0 + $0x9a0] sm:$0xff]
  %v323 = vld [vmem:[%s0 + $0x9a8] sm:$0xff]
  %v324 = vld [vmem:[%s0 + $0x9b0] sm:$0xff]
  %v325 = vld [vmem:[%s0 + $0x9b8] sm:$0xff]
  %v326 = vld [vmem:[%s0 + $0x9c0] sm:$0xff]
  %v327 = vld [vmem:[%s0 + $0x9c8] sm:$0xff]
  %v328 = vld [vmem:[%s0 + $0x9d0] sm:$0xff]
  %v329 = vld [vmem:[%s0 + $0x9d8] sm:$0xff]
  %v330 = vld [vmem:[%s0 + $0x9e0] sm:$0xff]
  %v331 = vld [vmem:[%s0 + $0x9e8] sm:$0xff]
  %v332 = vld [vmem:[%s0 + $0x9f0] sm:$0xff]
  %v333 = vld [vmem:[%s0 + $0x9f8] sm:$0xff]
  %v334 = vld [vmem:[%s0 + $0xa00] sm:$0xff]
  %v335 = vld [vmem:[%s0 + $0xa08] sm:$0xff]
  %v336 = vld [vmem:[%s0 + $0xa10] sm:$0xff]
  %v337 = vld [vmem:[%s0 + $0xa18] sm:$0xff]
  %v338 = vld [vmem:[%s0 + $0xa20] sm:$0xff]
  %v339 = vld [vmem:[%s0 + $0xa28] sm:$0xff]
  %v340 = vld [vmem:[%s0 + $0xa30] sm:$0xff]
  %v341 = vld [vmem:[%s0 + $0xa38] sm:$0xff]
  %v342 = vld [vmem:[%s0 + $0xa40] sm:$0xff]
  %v343 = vld [vmem:[%s0 + $0xa48] sm:$0xff]
  %v344 = vld [vmem:[%s0 + $0xa50] sm:$0xff]
  %v345 = vld [vmem:[%s0 + $0xa58] sm:$0xff]
  %v346 = vld [vmem:[%s0 + $0xa60] sm:$0xff]
  %v347 = vld [vmem:[%s0 + $0xa68] sm:$0xff]
  %v348 = vld [vmem:[%s0 + $0xa70] sm:$0xff]
  %v349 = vld [vmem:[%s0 + $0xa78] sm:$0xff]
  %v350 = vld [vmem:[%s0 + $0xa80] sm:$0xff]
  %v351 = vld [vmem:[%s0 + $0xa88] sm:$0xff]
  %v352 = vld [vmem:[%s0 + $0xa90] sm:$0xff]
  %v353 = vld [vmem:[%s0 + $0xa98] sm:$0xff]
  %v354 = vld [vmem:[%s0 + $0xaa0] sm:$0xff]
  %v355 = vld [vmem:[%s0 + $0xaa8] sm:$0xff]
  %v356 = vld [vmem:[%s0 + $0xab0] sm:$0xff]
  %v357 = vld [vmem:[%s0 + $0xab8] sm:$0xff]
  %v358 = vld [vmem:[%s0 + $0xac0] sm:$0xff]
  %v359 = vld [vmem:[%s0 + $0xac8] sm:$0xff]
  %v360 = vld [vmem:[%s0 + $0xad0] sm:$0xff]
  %v361 = vld [vmem:[%s0 + $0xad8] sm:$0xff]
  %v362 = vld [vmem:[%s0 + $0xae0] sm:$0xff]
  %v363 = vld [vmem:[%s0 + $0xae8] sm:$0xff]
  %v364 = vld [vmem:[%s0 + $0xaf0] sm:$0xff]
  %v365 = vld [vmem:[%s0 + $0xaf8] sm:$0xff]
  %v366 = vld [vmem:[%s0 + $0xb00] sm:$0xff]
  %v367 = vld [vmem:[%s0 + $0xb08] sm:$0xff]
  %v368 = vld [vmem:[%s0 + $0xb10] sm:$0xff]
  %v369 = vld [vmem:[%s0 + $0xb18] sm:$0xff]
  %v370 = vld [vmem:[%s0 + $0xb20] sm:$0xff]
  %v371 = vld [vmem:[%s0 + $0xb28] sm:$0xff]
  %v372 = vld [vmem:[%s0 + $0xb30] sm:$0xff]
  %v373 = vld [vmem:[%s0 + $0xb38] sm:$0xff]
  %v374 = vld [vmem:[%s0 + $0xb40] sm:$0xff]
  %v375 = vld [vmem:[%s0 + $0xb48] sm:$0xff]
  %v376 = vld [vmem:[%s0 + $0xb50] sm:$0xff]
  %v377 = vld [vmem:[%s0 + $0xb58] sm:$0xff]
  %v378 = vld [vmem:[%s0 + $0xb60] sm:$0xff]
  %v379 = vld [vmem:[%s0 + $0xb68] sm:$0xff]
  %v380 = vld [vmem:[%s0 + $0xb70] sm:$0xff]
  %v381 = vld [vmem:[%s0 + $0xb78] sm:$0xff]
  %v382 = vld [vmem:[%s0 + $0xb80] sm:$0xff]
  %v383 = vld [vmem:[%s0 + $0xb88] sm:$0xff]
  %v384 = vld [vmem:[%s0 + $0xb90] sm:$0xff]
  %v385 = vld [vmem:[%s0 + $0xb98] sm:$0xff]
  %v386 = vld [vmem:[%s0 + $0xba0] sm:$0xff]
  %v387 = vld [vmem:[%s0 + $0xba8] sm:$0xff]
  %v388 = vld [vmem:[%s0 + $0xbb0] sm:$0xff]
  %v389 = vld [vmem:[%s0 + $0xbb8] sm:$0xff]
  %v390 = vld [vmem:[%s0 + $0xbc0] sm:$0xff]
  %v391 = vld [vmem:[%s0 + $0xbc8] sm:$0xff]
  %v392 = vld [vmem:[%s0 + $0xbd0] sm:$0xff]
  %v393 = vld [vmem:[%s0 + $0xbd8] sm:$0xff]
  %v394 = vld [vmem:[%s0 + $0xbe0] sm:$0xff]
  %v395 = vld [vmem:[%s0 + $0xbe8] sm:$0xff]
  %v396 = vld [vmem:[%s0 + $0xbf0] sm:$0xff]
  %v397 = vld [vmem:[%s0 + $0xbf8] sm:$0xff]
  %v398 = vld [vmem:[%s0 + $0xc00] sm:$0xff]
  %v399 = vld [vmem:[%s0 + $0xc08] sm:$0xff]
  %v400 = vld [vmem:[%s0 + $0xc10] sm:$0xff]
  %v401 = vld [vmem:[%s0 + $0xc18] sm:$0xff]
  %v402 = vld [vmem:[%s0 + $0xc20] sm:$0xff]
  %v403 = vld [vmem:[%s0 + $0xc28] sm:$0xff]
  %v404 = vld [vmem:[%s0 + $0xc30] sm:$0xff]
  %v405 = vld [vmem:[%s0 + $0xc38] sm:$0xff]
  %v406 = vld [vmem:[%s0 + $0xc40] sm:$0xff]
  %v407 = vld [vmem:[%s0 + $0xc48] sm:$0xff]
  %v408 = vld [vmem:[%s0 + $0xc50] sm:$0xff]
  %v409 = vld [vmem:[%s0 + $0xc58] sm:$0xff]
  %v410 = vld [vmem:[%s0 + $0xc60] sm:$0xff]
  %v411 = vld [vmem:[%s0 + $0xc68] sm:$0xff]
  %v412 = vld [vmem:[%s0 + $0xc70] sm:$0xff]
  %v413 = vld [vmem:[%s0 + $0xc78] sm:$0xff]
  %v414 = vld [vmem:[%s0 + $0xc80] sm:$0xff]
  %v415 = vld [vmem:[%s0 + $0xc88] sm:$0xff]
  %v416 = vld [vmem:[%s0 + $0xc90] sm:$0xff]
  %v417 = vld [vmem:[%s0 + $0xc98] sm:$0xff]
  %v418 = vld [vmem:[%s0 + $0xca0] sm:$0xff]
  %v419 = vld [vmem:[%s0 + $0xca8] sm:$0xff]
  %v420 = vld [vmem:[%s0 + $0xcb0] sm:$0xff]
  %v421 = vld [vmem:[%s0 + $0xcb8] sm:$0xff]
  %v422 = vld [vmem:[%s0 + $0xcc0] sm:$0xff]
  %v423 = vld [vmem:[%s0 + $0xcc8] sm:$0xff]
  %v424 = vld [vmem:[%s0 + $0xcd0] sm:$0xff]
  %v425 = vld [vmem:[%s0 + $0xcd8] sm:$0xff]
  %v426 = vld [vmem:[%s0 + $0xce0] sm:$0xff]
  %v427 = vld [vmem:[%s0 + $0xce8] sm:$0xff]
  %v428 = vld [vmem:[%s0 + $0xcf0] sm:$0xff]
  %v429 = vld [vmem:[%s0 + $0xcf8] sm:$0xff]
  %v430 = vld [vmem:[%s0 + $0xd00] sm:$0xff]
  %v431 = vld [vmem:[%s0 + $0xd08] sm:$0xff]
  %v432 = vld [vmem:[%s0 + $0xd10] sm:$0xff]
  %v433 = vld [vmem:[%s0 + $0xd18] sm:$0xff]
  %v434 = vld [vmem:[%s0 + $0xd20] sm:$0xff]
  %v435 = vld [vmem:[%s0 + $0xd28] sm:$0xff]
  %v436 = vld [vmem:[%s0 + $0xd30] sm:$0xff]
  %v437 = vld [vmem:[%s0 + $0xd38] sm:$0xff]
  %v438 = vld [vmem:[%s0 + $0xd40] sm:$0xff]
  %v439 = vld [vmem:[%s0 + $0xd48] sm:$0xff]
  %v440 = vld [vmem:[%s0 + $0xd50] sm:$0xff]
  %v441 = vld [vmem:[%s0 + $0xd58] sm:$0xff]
  %v442 = vld [vmem:[%s0 + $0xd60] sm:$0xff]
  %v443 = vld [vmem:[%s0 + $0xd68] sm:$0xff]
  %v444 = vld [vmem:[%s0 + $0xd70] sm:$0xff]
  %v445 = vld [vmem:[%s0 + $0xd78] sm:$0xff]
  %v446 = vld [vmem:[%s0 + $0xd80] sm:$0xff]
  %v447 = vld [vmem:[%s0 + $0xd88] sm:$0xff]
  %v448 = vld [vmem:[%s0 + $0xd90] sm:$0xff]
  %v449 = vld [vmem:[%s0 + $0xd98] sm:$0xff]
  %v450 = vld [vmem:[%s0 + $0xda0] sm:$0xff]
  %v451 = vld [vmem:[%s0 + $0xda8] sm:$0xff]
  %v452 = vld [vmem:[%s0 + $0xdb0] sm:$0xff]
  %v453 = vld [vmem:[%s0 + $0xdb8] sm:$0xff]
  %v454 = vld [vmem:[%s0 + $0xdc0] sm:$0xff]
  %v455 = vld [vmem:[%s0 + $0xdc8] sm:$0xff]
  %v456 = vld [vmem:[%s0 + $0xdd0] sm:$0xff]
  %v457 = vld [vmem:[%s0 + $0xdd8] sm:$0xff]
  %v458 = vld [vmem:[%s0 + $0xde0] sm:$0xff]
  %v459 = vld [vmem:[%s0 + $0xde8] sm:$0xff]
  %v460 = vld [vmem:[%s0 + $0xdf0] sm:$0xff]
  %v461 = vld [vmem:[%s0 + $0xdf8] sm:$0xff]
  %v462 = vld [vmem:[%s0 + $0xe00] sm:$0xff]
  %v463 = vld [vmem:[%s0 + $0xe08] sm:$0xff]
  %v464 = vld [vmem:[%s0 + $0xe10] sm:$0xff]
  %v465 = vld [vmem:[%s0 + $0xe18] sm:$0xff]
  %v466 = vld [vmem:[%s0 + $0xe20] sm:$0xff]
  %v467 = vld [vmem:[%s0 + $0xe28] sm:$0xff]
  %v468 = vld [vmem:[%s0 + $0xe30] sm:$0xff]
  %v469 = vld [vmem:[%s0 + $0xe38] sm:$0xff]
  %v470 = vld [vmem:[%s0 + $0xe40] sm:$0xff]
  %v471 = vld [vmem:[%s0 + $0xe48] sm:$0xff]
  %v472 = vld [vmem:[%s0 + $0xe50] sm:$0xff]
  %v473 = vld [vmem:[%s0 + $0xe58] sm:$0xff]
  %v474 = vld [vmem:[%s0 + $0xe60] sm:$0xff]
  %v475 = vld [vmem:[%s0 + $0xe68] sm:$0xff]
  %v476 = vld [vmem:[%s0 + $0xe70] sm:$0xff]
  %v477 = vld [vmem:[%s0 + $0xe78] sm:$0xff]
  %v478 = vld [vmem:[%s0 + $0xe80] sm:$0xff]
  %v479 = vld [vmem:[%s0 + $0xe88] sm:$0xff]
  %v480 = vld [vmem:[%s0 + $0xe90] sm:$0xff]
  %v481 = vld [vmem:[%s0 + $0xe98] sm:$0xff]
  %v482 = vld [vmem:[%s0 + $0xea0] sm:$0xff]
  %v483 = vld [vmem:[%s0 + $0xea8] sm:$0xff]
  %v484 = vld [vmem:[%s0 + $0xeb0] sm:$0xff]
  %v485 = vld [vmem:[%s0 + $0xeb8] sm:$0xff]
  %v486 = vld [vmem:[%s0 + $0xec0] sm:$0xff]
  %v487 = vld [vmem:[%s0 + $0xec8] sm:$0xff]
  %v488 = vld [vmem:[%s0 + $0xed0] sm:$0xff]
  %v489 = vld [vmem:[%s0 + $0xed8] sm:$0xff]
  %v490 = vld [vmem:[%s0 + $0xee0] sm:$0xff]
  %v491 = vld [vmem:[%s0 + $0xee8] sm:$0xff]
  %v492 = vld [vmem:[%s0 + $0xef0] sm:$0xff]
  %v493 = vld [vmem:[%s0 + $0xef8] sm:$0xff]
  %v494 = vld [vmem:[%s0 + $0xf00] sm:$0xff]
  %v495 = vld [vmem:[%s0 + $0xf08] sm:$0xff]
  %v496 = vld [vmem:[%s0 + $0xf10] sm:$0xff]
  %v497 = vld [vmem:[%s0 + $0xf18] sm:$0xff]
  %v498 = vld [vmem:[%s0 + $0xf20] sm:$0xff]
  %v499 = vld [vmem:[%s0 + $0xf28] sm:$0xff]
  %v500 = vld [vmem:[%s0 + $0xf30] sm:$0xff]
  %v501 = vld [vmem:[%s0 + $0xf38] sm:$0xff]
  %v502 = vld [vmem:[%s0 + $0xf40] sm:$0xff]
  %v503 = vld [vmem:[%s0 + $0xf48] sm:$0xff]
  %v504 = vld [vmem:[%s0 + $0xf50] sm:$0xff]
  %v505 = vld [vmem:[%s0 + $0xf58] sm:$0xff]
  %v506 = vld [vmem:[%s0 + $0xf60] sm:$0xff]
  %v507 = vld [vmem:[%s0 + $0xf68] sm:$0xff]
  %v508 = vld [vmem:[%s0 + $0xf70] sm:$0xff]
  %v509 = vld [vmem:[%s0 + $0xf78] sm:$0xff]
  %v510 = vld [vmem:[%s0 + $0xf80] sm:$0xff]
  %v511 = vld [vmem:[%s0 + $0xf88] sm:$0xff]
  %v512 = vld [vmem:[%s0 + $0xf90] sm:$0xff]
  %v513 = vld [vmem:[%s0 + $0xf98] sm:$0xff]
  %v514 = vld [vmem:[%s0 + $0xfa0] sm:$0xff]
  %v515 = vld [vmem:[%s0 + $0xfa8] sm:$0xff]
  %v516 = vld [vmem:[%s0 + $0xfb0] sm:$0xff]
  %v517 = vld [vmem:[%s0 + $0xfb8] sm:$0xff]
  %v518 = vld [vmem:[%s0 + $0xfc0] sm:$0xff]
  %v519 = vld [vmem:[%s0 + $0xfc8] sm:$0xff]
  %v520 = vld [vmem:[%s0 + $0xfd0] sm:$0xff]
  %v521 = vld [vmem:[%s0 + $0xfd8] sm:$0xff]
  %v522 = vld [vmem:[%s0 + $0xfe0] sm:$0xff]
  %v523 = vld [vmem:[%s0 + $0xfe8] sm:$0xff]
  %v524 = vld [vmem:[%s0 + $0xff0] sm:$0xff]
  %v525 = vld [vmem:[%s0 + $0xff8] sm:$0xff]
  %v526 = vld [vmem:[%s0 + $0x1000] sm:$0xff]
  %v527 = vld [vmem:[%s0 + $0x1008] sm:$0xff]
  %v528 = vld [vmem:[%s0 + $0x1010] sm:$0xff]
  %v529 = vld [vmem:[%s0 + $0x1018] sm:$0xff]
  %v530 = vld [vmem:[%s0 + $0x1020] sm:$0xff]
  %v531 = vld [vmem:[%s0 + $0x1028] sm:$0xff]
  %v532 = vld [vmem:[%s0 + $0x1030] sm:$0xff]
  %v533 = vld [vmem:[%s0 + $0x1038] sm:$0xff]
  %v534 = vld [vmem:[%s0 + $0x1040] sm:$0xff]
  %v535 = vld [vmem:[%s0 + $0x1048] sm:$0xff]
  %v536 = vld [vmem:[%s0 + $0x1050] sm:$0xff]
  %v537 = vld [vmem:[%s0 + $0x1058] sm:$0xff]
  %v538 = vld [vmem:[%s0 + $0x1060] sm:$0xff]
  %v539 = vld [vmem:[%s0 + $0x1068] sm:$0xff]
  %v540 = vld [vmem:[%s0 + $0x1070] sm:$0xff]
  %v541 = vld [vmem:[%s0 + $0x1078] sm:$0xff]
  %v542 = vld [vmem:[%s0 + $0x1080] sm:$0xff]
  %v543 = vld [vmem:[%s0 + $0x1088] sm:$0xff]
  %v544 = vld [vmem:[%s0 + $0x1090] sm:$0xff]
  %v545 = vld [vmem:[%s0 + $0x1098] sm:$0xff]
  %v546 = vld [vmem:[%s0 + $0x10a0] sm:$0xff]
  %v547 = vld [vmem:[%s0 + $0x10a8] sm:$0xff]
  %v548 = vld [vmem:[%s0 + $0x10b0] sm:$0xff]
  %v549 = vld [vmem:[%s0 + $0x10b8] sm:$0xff]
  %v550 = vld [vmem:[%s0 + $0x10c0] sm:$0xff]
  %v551 = vld [vmem:[%s0 + $0x10c8] sm:$0xff]
  %v552 = vld [vmem:[%s0 + $0x10d0] sm:$0xff]
  %v553 = vld [vmem:[%s0 + $0x10d8] sm:$0xff]
  %v554 = vld [vmem:[%s0 + $0x10e0] sm:$0xff]
  %v555 = vld [vmem:[%s0 + $0x10e8] sm:$0xff]
  %v556 = vld [vmem:[%s0 + $0x10f0] sm:$0xff]
  %v557 = vld [vmem:[%s0 + $0x10f8] sm:$0xff]
  %v558 = vld [vmem:[%s0 + $0x1100] sm:$0xff]
  %v559 = vld [vmem:[%s0 + $0x1108] sm:$0xff]
  %v560 = vld [vmem:[%s0 + $0x1110] sm:$0xff]
  %v561 = vld [vmem:[%s0 + $0x1118] sm:$0xff]
  %v562 = vld [vmem:[%s0 + $0x1120] sm:$0xff]
  %v563 = vld [vmem:[%s0 + $0x1128] sm:$0xff]
  %v564 = vld [vmem:[%s0 + $0x1130] sm:$0xff]
  %v565 = vld [vmem:[%s0 + $0x1138] sm:$0xff]
  %v566 = vld [vmem:[%s0 + $0x1140] sm:$0xff]
  %v567 = vld [vmem:[%s0 + $0x1148] sm:$0xff]
  %v568 = vld [vmem:[%s0 + $0x1150] sm:$0xff]
  %v569 = vld [vmem:[%s0 + $0x1158] sm:$0xff]
  %v570 = vld [vmem:[%s0 + $0x1160] sm:$0xff]
  %v571 = vld [vmem:[%s0 + $0x1168] sm:$0xff]
  %v572 = vld [vmem:[%s0 + $0x1170] sm:$0xff]
  %v573 = vld [vmem:[%s0 + $0x1178] sm:$0xff]
  %v574 = vld [vmem:[%s0 + $0x1180] sm:$0xff]
  %v575 = vld [vmem:[%s0 + $0x1188] sm:$0xff]
  %v576 = vld [vmem:[%s0 + $0x1190] sm:$0xff]
  %v577 = vld [vmem:[%s0 + $0x1198] sm:$0xff]
  %v578 = vld [vmem:[%s0 + $0x11a0] sm:$0xff]
  %v579 = vld [vmem:[%s0 + $0x11a8] sm:$0xff]
  %v580 = vld [vmem:[%s0 + $0x11b0] sm:$0xff]
  %v581 = vld [vmem:[%s0 + $0x11b8] sm:$0xff]
  %v582 = vld [vmem:[%s0 + $0x11c0] sm:$0xff]
  %v583 = vld [vmem:[%s0 + $0x11c8] sm:$0xff]
  %v584 = vld [vmem:[%s0 + $0x11d0] sm:$0xff]
  %v585 = vld [vmem:[%s0 + $0x11d8] sm:$0xff]
  %v586 = vld [vmem:[%s0 + $0x11e0] sm:$0xff]
  %v587 = vld [vmem:[%s0 + $0x11e8] sm:$0xff]
  %v588 = vld [vmem:[%s0 + $0x11f0] sm:$0xff]
  %v589 = vld [vmem:[%s0 + $0x11f8] sm:$0xff]
  %v590 = vld [vmem:[%s0 + $0x1200] sm:$0xff]
  %v591 = vld [vmem:[%s0 + $0x1208] sm:$0xff]
  %v592 = vld [vmem:[%s0 + $0x1210] sm:$0xff]
  %v593 = vld [vmem:[%s0 + $0x1218] sm:$0xff]
  %v594 = vld [vmem:[%s0 + $0x1220] sm:$0xff]
  %v595 = vld [vmem:[%s0 + $0x1228] sm:$0xff]
  %v596 = vld [vmem:[%s0 + $0x1230] sm:$0xff]
  %v597 = vld [vmem:[%s0 + $0x1238] sm:$0xff]
  %v598 = vld [vmem:[%s0 + $0x1240] sm:$0xff]
  %v599 = vld [vmem:[%s0 + $0x1248] sm:$0xff]
  %v600 = vld [vmem:[%s0 + $0x1250] sm:$0xff]
  %v601 = vld [vmem:[%s0 + $0x1258] sm:$0xff]
  %v602 = vld [vmem:[%s0 + $0x1260] sm:$0xff]
  %v603 = vld [vmem:[%s0 + $0x1268] sm:$0xff]
  %v604 = vld [vmem:[%s0 + $0x1270] sm:$0xff]
  %v605 = vld [vmem:[%s0 + $0x1278] sm:$0xff]
  %v606 = vld [vmem:[%s0 + $0x1280] sm:$0xff]
  %v607 = vld [vmem:[%s0 + $0x1288] sm:$0xff]
  %v608 = vld [vmem:[%s0 + $0x1290] sm:$0xff]
  %v609 = vld [vmem:[%s0 + $0x1298] sm:$0xff]
  %v610 = vld [vmem:[%s0 + $0x12a0] sm:$0xff]
  %v611 = vld [vmem:[%s0 + $0x12a8] sm:$0xff]
  %v612 = vld [vmem:[%s0 + $0x12b0] sm:$0xff]
  %v613 = vld [vmem:[%s0 + $0x12b8] sm:$0xff]
  %v614 = vld [vmem:[%s0 + $0x12c0] sm:$0xff]
  %v615 = vld [vmem:[%s0 + $0x12c8] sm:$0xff]
  %v616 = vld [vmem:[%s0 + $0x12d0] sm:$0xff]
  %v617 = vld [vmem:[%s0 + $0x12d8] sm:$0xff]
  %v618 = vld [vmem:[%s0 + $0x12e0] sm:$0xff]
  %v619 = vld [vmem:[%s0 + $0x12e8] sm:$0xff]
  %v620 = vld [vmem:[%s0 + $0x12f0] sm:$0xff]
  %v621 = vld [vmem:[%s0 + $0x12f8] sm:$0xff]
  %v622 = vld [vmem:[%s0 + $0x1300] sm:$0xff]
  %v623 = vld [vmem:[%s0 + $0x1308] sm:$0xff]
  %v624 = vld [vmem:[%s0 + $0x1310] sm:$0xff]
  %v625 = vld [vmem:[%s0 + $0x1318] sm:$0xff]
  %v626 = vld [vmem:[%s0 + $0x1320] sm:$0xff]
  %v627 = vld [vmem:[%s0 + $0x1328] sm:$0xff]
  %v628 = vld [vmem:[%s0 + $0x1330] sm:$0xff]
  %v629 = vld [vmem:[%s0 + $0x1338] sm:$0xff]
  %v630 = vld [vmem:[%s0 + $0x1340] sm:$0xff]
  %v631 = vld [vmem:[%s0 + $0x1348] sm:$0xff]
  %v632 = vld [vmem:[%s0 + $0x1350] sm:$0xff]
  %v633 = vld [vmem:[%s0 + $0x1358] sm:$0xff]
  %v634 = vld [vmem:[%s0 + $0x1360] sm:$0xff]
  %v635 = vld [vmem:[%s0 + $0x1368] sm:$0xff]
  %v636 = vld [vmem:[%s0 + $0x1370] sm:$0xff]
  %v637 = vld [vmem:[%s0 + $0x1378] sm:$0xff]
  %v638 = vld [vmem:[%s0 + $0x1380] sm:$0xff]
  %v639 = vld [vmem:[%s0 + $0x1388] sm:$0xff]
  %v640 = vld [vmem:[%s0 + $0x1390] sm:$0xff]
  %v641 = vld [vmem:[%s0 + $0x1398] sm:$0xff]
  %v642 = vld [vmem:[%s0 + $0x13a0] sm:$0xff]
  %v643 = vld [vmem:[%s0 + $0x13a8] sm:$0xff]
  %v644 = vld [vmem:[%s0 + $0x13b0] sm:$0xff]
  %v645 = vld [vmem:[%s0 + $0x13b8] sm:$0xff]
  %v646 = vld [vmem:[%s0 + $0x13c0] sm:$0xff]
  %v647 = vld [vmem:[%s0 + $0x13c8] sm:$0xff]
  %v648 = vld [vmem:[%s0 + $0x13d0] sm:$0xff]
  %v649 = vld [vmem:[%s0 + $0x13d8] sm:$0xff]
  %v650 = vld [vmem:[%s0 + $0x13e0] sm:$0xff]
  %v651 = vld [vmem:[%s0 + $0x13e8] sm:$0xff]
  %v652 = vld [vmem:[%s0 + $0x13f0] sm:$0xff]
  %v653 = vld [vmem:[%s0 + $0x13f8] sm:$0xff]
  %v654 = vld [vmem:[%s0 + $0x1400] sm:$0xff]
  %v655 = vld [vmem:[%s0 + $0x1408] sm:$0xff]
  %v656 = vld [vmem:[%s0 + $0x1410] sm:$0xff]
  %v657 = vld [vmem:[%s0 + $0x1418] sm:$0xff]
  %v658 = vld [vmem:[%s0 + $0x1420] sm:$0xff]
  %v659 = vld [vmem:[%s0 + $0x1428] sm:$0xff]
  %v660 = vld [vmem:[%s0 + $0x1430] sm:$0xff]
  %v661 = vld [vmem:[%s0 + $0x1438] sm:$0xff]
  %v662 = vld [vmem:[%s0 + $0x1440] sm:$0xff]
  %v663 = vld [vmem:[%s0 + $0x1448] sm:$0xff]
  %v664 = vld [vmem:[%s0 + $0x1450] sm:$0xff]
  %v665 = vld [vmem:[%s0 + $0x1458] sm:$0xff]
  %v666 = vld [vmem:[%s0 + $0x1460] sm:$0xff]
  %v667 = vld [vmem:[%s0 + $0x1468] sm:$0xff]
  %v668 = vld [vmem:[%s0 + $0x1470] sm:$0xff]
  %v669 = vld [vmem:[%s0 + $0x1478] sm:$0xff]
  %v670 = vld [vmem:[%s0 + $0x1480] sm:$0xff]
  %v671 = vld [vmem:[%s0 + $0x1488] sm:$0xff]
  %v672 = vld [vmem:[%s0 + $0x1490] sm:$0xff]
  %v673 = vld [vmem:[%s0 + $0x1498] sm:$0xff]
  %v674 = vld [vmem:[%s0 + $0x14a0] sm:$0xff]
  %v675 = vld [vmem:[%s0 + $0x14a8] sm:$0xff]
  %v676 = vld [vmem:[%s0 + $0x14b0] sm:$0xff]
  %v677 = vld [vmem:[%s0 + $0x14b8] sm:$0xff]
  %v678 = vld [vmem:[%s0 + $0x14c0] sm:$0xff]
  %v679 = vld [vmem:[%s0 + $0x14c8] sm:$0xff]
  %v680 = vld [vmem:[%s0 + $0x14d0] sm:$0xff]
  %v681 = vld [vmem:[%s0 + $0x14d8] sm:$0xff]
  %v682 = vld [vmem:[%s0 + $0x14e0] sm:$0xff]
  %v683 = vld [vmem:[%s0 + $0x14e8] sm:$0xff]
  %v684 = vld [vmem:[%s0 + $0x14f0] sm:$0xff]
  %v685 = vld [vmem:[%s0 + $0x14f8] sm:$0xff]
  %v686 = vld [vmem:[%s0 + $0x1500] sm:$0xff]
  %v687 = vld [vmem:[%s0 + $0x1508] sm:$0xff]
  %v688 = vld [vmem:[%s0 + $0x1510] sm:$0xff]
  %v689 = vld [vmem:[%s0 + $0x1518] sm:$0xff]
  %v690 = vld [vmem:[%s0 + $0x1520] sm:$0xff]
  %v691 = vld [vmem:[%s0 + $0x1528] sm:$0xff]
  %v692 = vld [vmem:[%s0 + $0x1530] sm:$0xff]
  %v693 = vld [vmem:[%s0 + $0x1538] sm:$0xff]
  %v694 = vld [vmem:[%s0 + $0x1540] sm:$0xff]
  %v695 = vld [vmem:[%s0 + $0x1548] sm:$0xff]
  %v696 = vld [vmem:[%s0 + $0x1550] sm:$0xff]
  %v697 = vld [vmem:[%s0 + $0x1558] sm:$0xff]
  %v698 = vld [vmem:[%s0 + $0x1560] sm:$0xff]
  %v699 = vld [vmem:[%s0 + $0x1568] sm:$0xff]
  %v700 = vld [vmem:[%s0 + $0x1570] sm:$0xff]
  %v701 = vld [vmem:[%s0 + $0x1578] sm:$0xff]
  %v702 = vld [vmem:[%s0 + $0x1580] sm:$0xff]
  %v703 = vld [vmem:[%s0 + $0x1588] sm:$0xff]
  %v704 = vld [vmem:[%s0 + $0x1590] sm:$0xff]
  %v705 = vld [vmem:[%s0 + $0x1598] sm:$0xff]
  %v706 = vld [vmem:[%s0 + $0x15a0] sm:$0xff]
  %v707 = vld [vmem:[%s0 + $0x15a8] sm:$0xff]
  %v708 = vld [vmem:[%s0 + $0x15b0] sm:$0xff]
  %v709 = vld [vmem:[%s0 + $0x15b8] sm:$0xff]
  %v710 = vld [vmem:[%s0 + $0x15c0] sm:$0xff]
  %v711 = vld [vmem:[%s0 + $0x15c8] sm:$0xff]
  %v712 = vld [vmem:[%s0 + $0x15d0] sm:$0xff]
  %v713 = vld [vmem:[%s0 + $0x15d8] sm:$0xff]
  %v714 = vld [vmem:[%s0 + $0x15e0] sm:$0xff]
  %v715 = vld [vmem:[%s0 + $0x15e8] sm:$0xff]
  %v716 = vld [vmem:[%s0 + $0x15f0] sm:$0xff]
  %v717 = vld [vmem:[%s0 + $0x15f8] sm:$0xff]
  %v718 = vld [vmem:[%s0 + $0x1600] sm:$0xff]
  %v719 = vld [vmem:[%s0 + $0x1608] sm:$0xff]
  %v720 = vld [vmem:[%s0 + $0x1610] sm:$0xff]
  %v721 = vld [vmem:[%s0 + $0x1618] sm:$0xff]
  %v722 = vld [vmem:[%s0 + $0x1620] sm:$0xff]
  %v723 = vld [vmem:[%s0 + $0x1628] sm:$0xff]
  %v724 = vld [vmem:[%s0 + $0x1630] sm:$0xff]
  %v725 = vld [vmem:[%s0 + $0x1638] sm:$0xff]
  %v726 = vld [vmem:[%s0 + $0x1640] sm:$0xff]
  %v727 = vld [vmem:[%s0 + $0x1648] sm:$0xff]
  %v728 = vld [vmem:[%s0 + $0x1650] sm:$0xff]
  %v729 = vld [vmem:[%s0 + $0x1658] sm:$0xff]
  %v730 = vld [vmem:[%s0 + $0x1660] sm:$0xff]
  %v731 = vld [vmem:[%s0 + $0x1668] sm:$0xff]
  %v732 = vld [vmem:[%s0 + $0x1670] sm:$0xff]
  %v733 = vld [vmem:[%s0 + $0x1678] sm:$0xff]
  %v734 = vld [vmem:[%s0 + $0x1680] sm:$0xff]
  %v735 = vld [vmem:[%s0 + $0x1688] sm:$0xff]
  %v736 = vld [vmem:[%s0 + $0x1690] sm:$0xff]
  %v737 = vld [vmem:[%s0 + $0x1698] sm:$0xff]
  %v738 = vld [vmem:[%s0 + $0x16a0] sm:$0xff]
  %v739 = vld [vmem:[%s0 + $0x16a8] sm:$0xff]
  %v740 = vld [vmem:[%s0 + $0x16b0] sm:$0xff]
  %v741 = vld [vmem:[%s0 + $0x16b8] sm:$0xff]
  %v742 = vld [vmem:[%s0 + $0x16c0] sm:$0xff]
  %v743 = vld [vmem:[%s0 + $0x16c8] sm:$0xff]
  %v744 = vld [vmem:[%s0 + $0x16d0] sm:$0xff]
  %v745 = vld [vmem:[%s0 + $0x16d8] sm:$0xff]
  %v746 = vld [vmem:[%s0 + $0x16e0] sm:$0xff]
  %v747 = vld [vmem:[%s0 + $0x16e8] sm:$0xff]
  %v748 = vld [vmem:[%s0 + $0x16f0] sm:$0xff]
  %v749 = vld [vmem:[%s0 + $0x16f8] sm:$0xff]
  %v750 = vld [vmem:[%s0 + $0x1700] sm:$0xff]
  %v751 = vld [vmem:[%s0 + $0x1708] sm:$0xff]
  %v752 = vld [vmem:[%s0 + $0x1710] sm:$0xff]
  %v753 = vld [vmem:[%s0 + $0x1718] sm:$0xff]
  %v754 = vld [vmem:[%s0 + $0x1720] sm:$0xff]
  %v755 = vld [vmem:[%s0 + $0x1728] sm:$0xff]
  %v756 = vld [vmem:[%s0 + $0x1730] sm:$0xff]
  %v757 = vld [vmem:[%s0 + $0x1738] sm:$0xff]
  %v758 = vld [vmem:[%s0 + $0x1740] sm:$0xff]
  %v759 = vld [vmem:[%s0 + $0x1748] sm:$0xff]
  %v760 = vld [vmem:[%s0 + $0x1750] sm:$0xff]
  %v761 = vld [vmem:[%s0 + $0x1758] sm:$0xff]
  %v762 = vld [vmem:[%s0 + $0x1760] sm:$0xff]
  %v763 = vld [vmem:[%s0 + $0x1768] sm:$0xff]
  %v764 = vld [vmem:[%s0 + $0x1770] sm:$0xff]
  %v765 = vld [vmem:[%s0 + $0x1778] sm:$0xff]
  %v766 = vld [vmem:[%s0 + $0x1780] sm:$0xff]
  %v767 = vld [vmem:[%s0 + $0x1788] sm:$0xff]
  %v768 = vld [vmem:[%s0 + $0x1790] sm:$0xff]
  %v769 = vld [vmem:[%s0 + $0x1798] sm:$0xff]
  %v770 = vld [vmem:[%s0 + $0x17a0] sm:$0xff]
  %v771 = vld [vmem:[%s0 + $0x17a8] sm:$0xff]
  %v772 = vld [vmem:[%s0 + $0x17b0] sm:$0xff]
  %v773 = vld [vmem:[%s0 + $0x17b8] sm:$0xff]
  %v774 = vld [vmem:[%s0 + $0x17c0] sm:$0xff]
  %v775 = vld [vmem:[%s0 + $0x17c8] sm:$0xff]
  %v776 = vld [vmem:[%s0 + $0x17d0] sm:$0xff]
  %v777 = vld [vmem:[%s0 + $0x17d8] sm:$0xff]
  %v778 = vld [vmem:[%s0 + $0x17e0] sm:$0xff]
  %v779 = vld [vmem:[%s0 + $0x17e8] sm:$0xff]
  %v780 = vld [vmem:[%s0 + $0x17f0] sm:$0xff]
  %v781 = vld [vmem:[%s0 + $0x17f8] sm:$0xff]
  %v782 = vld [vmem:[%s0 + $0x1800] sm:$0xff]
  %v783 = vld [vmem:[%s0 + $0x1808] sm:$0xff]
  %v784 = vld [vmem:[%s0 + $0x1810] sm:$0xff]
  %v785 = vld [vmem:[%s0 + $0x1818] sm:$0xff]
  %v786 = vld [vmem:[%s0 + $0x1820] sm:$0xff]
  %v787 = vld [vmem:[%s0 + $0x1828] sm:$0xff]
  %v788 = vld [vmem:[%s0 + $0x1830] sm:$0xff]
  %v789 = vld [vmem:[%s0 + $0x1838] sm:$0xff]
  %v790 = vld [vmem:[%s0 + $0x1840] sm:$0xff]
  %v791 = vld [vmem:[%s0 + $0x1848] sm:$0xff]
  %v792 = vld [vmem:[%s0 + $0x1850] sm:$0xff]
  %v793 = vld [vmem:[%s0 + $0x1858] sm:$0xff]
  %v794 = vld [vmem:[%s0 + $0x1860] sm:$0xff]
  %v795 = vld [vmem:[%s0 + $0x1868] sm:$0xff]
  %v796 = vld [vmem:[%s0 + $0x1870] sm:$0xff]
  %v797 = vld [vmem:[%s0 + $0x1878] sm:$0xff]
  %v798 = vld [vmem:[%s0 + $0x1880] sm:$0xff]
  %v799 = vld [vmem:[%s0 + $0x1888] sm:$0xff]
  %v800 = vld [vmem:[%s0 + $0x1890] sm:$0xff]
  %v801 = vld [vmem:[%s0 + $0x1898] sm:$0xff]
  %v802 = vld [vmem:[%s0 + $0x18a0] sm:$0xff]
  %v803 = vld [vmem:[%s0 + $0x18a8] sm:$0xff]
  %v804 = vld [vmem:[%s0 + $0x18b0] sm:$0xff]
  %v805 = vld [vmem:[%s0 + $0x18b8] sm:$0xff]
  %v806 = vld [vmem:[%s0 + $0x18c0] sm:$0xff]
  %v807 = vld [vmem:[%s0 + $0x18c8] sm:$0xff]
  %v808 = vld [vmem:[%s0 + $0x18d0] sm:$0xff]
  %v809 = vld [vmem:[%s0 + $0x18d8] sm:$0xff]
  %v810 = vld [vmem:[%s0 + $0x18e0] sm:$0xff]
  %v811 = vld [vmem:[%s0 + $0x18e8] sm:$0xff]
  %v812 = vld [vmem:[%s0 + $0x18f0] sm:$0xff]
  %v813 = vld [vmem:[%s0 + $0x18f8] sm:$0xff]
  %v814 = vld [vmem:[%s0 + $0x1900] sm:$0xff]
  %v815 = vld [vmem:[%s0 + $0x1908] sm:$0xff]
  %v816 = vld [vmem:[%s0 + $0x1910] sm:$0xff]
  %v817 = vld [vmem:[%s0 + $0x1918] sm:$0xff]
  %v818 = vld [vmem:[%s0 + $0x1920] sm:$0xff]
  %v819 = vld [vmem:[%s0 + $0x1928] sm:$0xff]
  %v820 = vld [vmem:[%s0 + $0x1930] sm:$0xff]
  %v821 = vld [vmem:[%s0 + $0x1938] sm:$0xff]
  %v822 = vld [vmem:[%s0 + $0x1940] sm:$0xff]
  %v823 = vld [vmem:[%s0 + $0x1948] sm:$0xff]
  %v824 = vld [vmem:[%s0 + $0x1950] sm:$0xff]
  %v825 = vld [vmem:[%s0 + $0x1958] sm:$0xff]
  %v826 = vld [vmem:[%s0 + $0x1960] sm:$0xff]
  %v827 = vld [vmem:[%s0 + $0x1968] sm:$0xff]
  %v828 = vld [vmem:[%s0 + $0x1970] sm:$0xff]
  %v829 = vld [vmem:[%s0 + $0x1978] sm:$0xff]
  %v830 = vld [vmem:[%s0 + $0x1980] sm:$0xff]
  %v831 = vld [vmem:[%s0 + $0x1988] sm:$0xff]
  %v832 = vld [vmem:[%s0 + $0x1990] sm:$0xff]
  %v833 = vld [vmem:[%s0 + $0x1998] sm:$0xff]
  %v834 = vld [vmem:[%s0 + $0x19a0] sm:$0xff]
  %v835 = vld [vmem:[%s0 + $0x19a8] sm:$0xff]
  %v836 = vld [vmem:[%s0 + $0x19b0] sm:$0xff]
  %v837 = vld [vmem:[%s0 + $0x19b8] sm:$0xff]
  %v838 = vld [vmem:[%s0 + $0x19c0] sm:$0xff]
  %v839 = vld [vmem:[%s0 + $0x19c8] sm:$0xff]
  %v840 = vld [vmem:[%s0 + $0x19d0] sm:$0xff]
  %v841 = vld [vmem:[%s0 + $0x19d8] sm:$0xff]
  %v842 = vld [vmem:[%s0 + $0x19e0] sm:$0xff]
  %v843 = vld [vmem:[%s0 + $0x19e8] sm:$0xff]
  %v844 = vld [vmem:[%s0 + $0x19f0] sm:$0xff]
  %v845 = vld [vmem:[%s0 + $0x19f8] sm:$0xff]
  %v846 = vld [vmem:[%s0 + $0x1a00] sm:$0xff]
  %v847 = vld [vmem:[%s0 + $0x1a08] sm:$0xff]
  %v848 = vld [vmem:[%s0 + $0x1a10] sm:$0xff]
  %v849 = vld [vmem:[%s0 + $0x1a18] sm:$0xff]
  %v850 = vld [vmem:[%s0 + $0x1a20] sm:$0xff]
  %v851 = vld [vmem:[%s0 + $0x1a28] sm:$0xff]
  %v852 = vld [vmem:[%s0 + $0x1a30] sm:$0xff]
  %v853 = vld [vmem:[%s0 + $0x1a38] sm:$0xff]
  %v854 = vld [vmem:[%s0 + $0x1a40] sm:$0xff]
  %v855 = vld [vmem:[%s0 + $0x1a48] sm:$0xff]
  %v856 = vld [vmem:[%s0 + $0x1a50] sm:$0xff]
  %v857 = vld [vmem:[%s0 + $0x1a58] sm:$0xff]
  %v858 = vld [vmem:[%s0 + $0x1a60] sm:$0xff]
  %v859 = vld [vmem:[%s0 + $0x1a68] sm:$0xff]
  %v860 = vld [vmem:[%s0 + $0x1a70] sm:$0xff]
  %v861 = vld [vmem:[%s0 + $0x1a78] sm:$0xff]
  %v862 = vld [vmem:[%s0 + $0x1a80] sm:$0xff]
  %v863 = vld [vmem:[%s0 + $0x1a88] sm:$0xff]
  %v864 = vld [vmem:[%s0 + $0x1a90] sm:$0xff]
  %v865 = vld [vmem:[%s0 + $0x1a98] sm:$0xff]
  %v866 = vld [vmem:[%s0 + $0x1aa0] sm:$0xff]
  %v867 = vld [vmem:[%s0 + $0x1aa8] sm:$0xff]
  %v868 = vld [vmem:[%s0 + $0x1ab0] sm:$0xff]
  %v869 = vld [vmem:[%s0 + $0x1ab8] sm:$0xff]
  %v870 = vld [vmem:[%s0 + $0x1ac0] sm:$0xff]
  %v871 = vld [vmem:[%s0 + $0x1ac8] sm:$0xff]
  %v872 = vld [vmem:[%s0 + $0x1ad0] sm:$0xff]
  %v873 = vld [vmem:[%s0 + $0x1ad8] sm:$0xff]
  %v874 = vld [vmem:[%s0 + $0x1ae0] sm:$0xff]
  %v875 = vld [vmem:[%s0 + $0x1ae8] sm:$0xff]
  %v876 = vld [vmem:[%s0 + $0x1af0] sm:$0xff]
  %v877 = vld [vmem:[%s0 + $0x1af8] sm:$0xff]
  %v878 = vld [vmem:[%s0 + $0x1b00] sm:$0xff]
  %v879 = vld [vmem:[%s0 + $0x1b08] sm:$0xff]
  %v880 = vld [vmem:[%s0 + $0x1b10] sm:$0xff]
  %v881 = vld [vmem:[%s0 + $0x1b18] sm:$0xff]
  %v882 = vld [vmem:[%s0 + $0x1b20] sm:$0xff]
  %v883 = vld [vmem:[%s0 + $0x1b28] sm:$0xff]
  %v884 = vld [vmem:[%s0 + $0x1b30] sm:$0xff]
  %v885 = vld [vmem:[%s0 + $0x1b38] sm:$0xff]
  %v886 = vld [vmem:[%s0 + $0x1b40] sm:$0xff]
  %v887 = vld [vmem:[%s0 + $0x1b48] sm:$0xff]
  %v888 = vld [vmem:[%s0 + $0x1b50] sm:$0xff]
  %v889 = vld [vmem:[%s0 + $0x1b58] sm:$0xff]
  %v890 = vld [vmem:[%s0 + $0x1b60] sm:$0xff]
  %v891 = vld [vmem:[%s0 + $0x1b68] sm:$0xff]
  %v892 = vld [vmem:[%s0 + $0x1b70] sm:$0xff]
  %v893 = vld [vmem:[%s0 + $0x1b78] sm:$0xff]
  %v894 = vld [vmem:[%s0 + $0x1b80] sm:$0xff]
  %v895 = vld [vmem:[%s0 + $0x1b88] sm:$0xff]
  %v896 = vld [vmem:[%s0 + $0x1b90] sm:$0xff]
  %v897 = vld [vmem:[%s0 + $0x1b98] sm:$0xff]
  %v898 = vld [vmem:[%s0 + $0x1ba0] sm:$0xff]
  %v899 = vld [vmem:[%s0 + $0x1ba8] sm:$0xff]
  %v900 = vld [vmem:[%s0 + $0x1bb0] sm:$0xff]
  %v901 = vld [vmem:[%s0 + $0x1bb8] sm:$0xff]
  %v902 = vld [vmem:[%s0 + $0x1bc0] sm:$0xff]
  %v903 = vld [vmem:[%s0 + $0x1bc8] sm:$0xff]
  %v904 = vld [vmem:[%s0 + $0x1bd0] sm:$0xff]
  %v905 = vld [vmem:[%s0 + $0x1bd8] sm:$0xff]
  %v906 = vld [vmem:[%s0 + $0x1be0] sm:$0xff]
  %v907 = vld [vmem:[%s0 + $0x1be8] sm:$0xff]
  %v908 = vld [vmem:[%s0 + $0x1bf0] sm:$0xff]
  %v909 = vld [vmem:[%s0 + $0x1bf8] sm:$0xff]
  %v910 = vld [vmem:[%s0 + $0x1c00] sm:$0xff]
  %v911 = vld [vmem:[%s0 + $0x1c08] sm:$0xff]
  %v912 = vld [vmem:[%s0 + $0x1c10] sm:$0xff]
  %v913 = vld [vmem:[%s0 + $0x1c18] sm:$0xff]
  %v914 = vld [vmem:[%s0 + $0x1c20] sm:$0xff]
  %v915 = vld [vmem:[%s0 + $0x1c28] sm:$0xff]
  %v916 = vld [vmem:[%s0 + $0x1c30] sm:$0xff]
  %v917 = vld [vmem:[%s0 + $0x1c38] sm:$0xff]
  %v918 = vld [vmem:[%s0 + $0x1c40] sm:$0xff]
  %v919 = vld [vmem:[%s0 + $0x1c48] sm:$0xff]
  %v920 = vld [vmem:[%s0 + $0x1c50] sm:$0xff]
  %v921 = vld [vmem:[%s0 + $0x1c58] sm:$0xff]
  %v922 = vld [vmem:[%s0 + $0x1c60] sm:$0xff]
  %v923 = vld [vmem:[%s0 + $0x1c68] sm:$0xff]
  %v924 = vld [vmem:[%s0 + $0x1c70] sm:$0xff]
  %v925 = vld [vmem:[%s0 + $0x1c78] sm:$0xff]
  %v926 = vld [vmem:[%s0 + $0x1c80] sm:$0xff]
  %v927 = vld [vmem:[%s0 + $0x1c88] sm:$0xff]
  %v928 = vld [vmem:[%s0 + $0x1c90] sm:$0xff]
  %v929 = vld [vmem:[%s0 + $0x1c98] sm:$0xff]
  %v930 = vld [vmem:[%s0 + $0x1ca0] sm:$0xff]
  %v931 = vld [vmem:[%s0 + $0x1ca8] sm:$0xff]
  %v932 = vmax.f32 %v14, 0.0
  %v933 = vmax.f32 %v15, 0.0
  %v934 = vmax.f32 %v16, 0.0
  %v935 = vmax.f32 %v17, 0.0
  %v936 = vmax.f32 %v18, 0.0
  %v937 = vmax.f32 %v19, 0.0
  %v938 = vmax.f32 %v20, 0.0
  %v939 = vmax.f32 %v21, 0.0
  %v940 = vmax.f32 %v22, 0.0
  %v941 = vmax.f32 %v23, 0.0
  %v942 = vmax.f32 %v24, 0.0
  %v943 = vmax.f32 %v25, 0.0
  %v944 = vmax.f32 %v26, 0.0
  %v945 = vmax.f32 %v27, 0.0
  %v946 = vmax.f32 %v28, 0.0
  %v947 = vmax.f32 %v29, 0.0
  %v948 = vmax.f32 %v30, 0.0
  %v949 = vmax.f32 %v31, 0.0
  %v950 = vmax.f32 %v32, 0.0
  %v951 = vmax.f32 %v33, 0.0
  %v952 = vmax.f32 %v34, 0.0
  %v953 = vmax.f32 %v35, 0.0
  %v954 = vmax.f32 %v36, 0.0
  %v955 = vmax.f32 %v37, 0.0
  %v956 = vmax.f32 %v38, 0.0
  %v957 = vmax.f32 %v39, 0.0
  %v958 = vmax.f32 %v40, 0.0
  %v959 = vmax.f32 %v41, 0.0
  %v960 = vmax.f32 %v42, 0.0
  %v961 = vmax.f32 %v43, 0.0
  %v962 = vmax.f32 %v44, 0.0
  %v963 = vmax.f32 %v45, 0.0
  %v964 = vmax.f32 %v46, 0.0
  %v965 = vmax.f32 %v47, 0.0
  %v966 = vmax.f32 %v48, 0.0
  %v967 = vmax.f32 %v49, 0.0
  %v968 = vmax.f32 %v50, 0.0
  %v969 = vmax.f32 %v51, 0.0
  %v970 = vmax.f32 %v52, 0.0
  %v971 = vmax.f32 %v53, 0.0
  %v972 = vmax.f32 %v54, 0.0
  %v973 = vmax.f32 %v55, 0.0
  %v974 = vmax.f32 %v56, 0.0
  %v975 = vmax.f32 %v57, 0.0
  %v976 = vmax.f32 %v58, 0.0
  %v977 = vmax.f32 %v59, 0.0
  %v978 = vmax.f32 %v60, 0.0
  %v979 = vmax.f32 %v61, 0.0
  %v980 = vmax.f32 %v62, 0.0
  %v981 = vmax.f32 %v63, 0.0
  %v982 = vmax.f32 %v64, 0.0
  %v983 = vmax.f32 %v65, 0.0
  %v984 = vmax.f32 %v66, 0.0
  %v985 = vmax.f32 %v67, 0.0
  %v986 = vmax.f32 %v68, 0.0
  %v987 = vmax.f32 %v69, 0.0
  %v988 = vmax.f32 %v70, 0.0
  %v989 = vmax.f32 %v71, 0.0
  %v990 = vmax.f32 %v72, 0.0
  %v991 = vmax.f32 %v73, 0.0
  %v992 = vmax.f32 %v74, 0.0
  %v993 = vmax.f32 %v75, 0.0
  %v994 = vmax.f32 %v76, 0.0
  %v995 = vmax.f32 %v77, 0.0
  %v996 = vmax.f32 %v78, 0.0
  %v997 = vmax.f32 %v79, 0.0
  %v998 = vmax.f32 %v80, 0.0
  %v999 = vmax.f32 %v81, 0.0
  %v1000 = vmax.f32 %v82, 0.0
  %v1001 = vmax.f32 %v83, 0.0
  %v1002 = vmax.f32 %v84, 0.0
  %v1003 = vmax.f32 %v85, 0.0
  %v1004 = vmax.f32 %v86, 0.0
  %v1005 = vmax.f32 %v87, 0.0
  %v1006 = vmax.f32 %v88, 0.0
  %v1007 = vmax.f32 %v89, 0.0
  %v1008 = vmax.f32 %v90, 0.0
  %v1009 = vmax.f32 %v91, 0.0
  %v1010 = vmax.f32 %v92, 0.0
  %v1011 = vmax.f32 %v93, 0.0
  %v1012 = vmax.f32 %v94, 0.0
  %v1013 = vmax.f32 %v95, 0.0
  %v1014 = vmax.f32 %v96, 0.0
  %v1015 = vmax.f32 %v97, 0.0
  %v1016 = vmax.f32 %v98, 0.0
  %v1017 = vmax.f32 %v99, 0.0
  %v1018 = vmax.f32 %v100, 0.0
  %v1019 = vmax.f32 %v101, 0.0
  %v1020 = vmax.f32 %v102, 0.0
  %v1021 = vmax.f32 %v103, 0.0
  %v1022 = vmax.f32 %v104, 0.0
  %v1023 = vmax.f32 %v105, 0.0
  %v1024 = vmax.f32 %v106, 0.0
  %v1025 = vmax.f32 %v107, 0.0
  %v1026 = vmax.f32 %v108, 0.0
  %v1027 = vmax.f32 %v109, 0.0
  %v1028 = vmax.f32 %v110, 0.0
  %v1029 = vmax.f32 %v111, 0.0
  %v1030 = vmax.f32 %v112, 0.0
  %v1031 = vmax.f32 %v113, 0.0
  %v1032 = vmax.f32 %v114, 0.0
  %v1033 = vmax.f32 %v115, 0.0
  %v1034 = vmax.f32 %v116, 0.0
  %v1035 = vmax.f32 %v117, 0.0
  %v1036 = vmax.f32 %v118, 0.0
  %v1037 = vmax.f32 %v119, 0.0
  %v1038 = vmax.f32 %v120, 0.0
  %v1039 = vmax.f32 %v121, 0.0
  %v1040 = vmax.f32 %v122, 0.0
  %v1041 = vmax.f32 %v123, 0.0
  %v1042 = vmax.f32 %v124, 0.0
  %v1043 = vmax.f32 %v125, 0.0
  %v1044 = vmax.f32 %v126, 0.0
  %v1045 = vmax.f32 %v127, 0.0
  %v1046 = vmax.f32 %v128, 0.0
  %v1047 = vmax.f32 %v129, 0.0
  %v1048 = vmax.f32 %v130, 0.0
  %v1049 = vmax.f32 %v131, 0.0
  %v1050 = vmax.f32 %v132, 0.0
  %v1051 = vmax.f32 %v133, 0.0
  %v1052 = vmax.f32 %v134, 0.0
  %v1053 = vmax.f32 %v135, 0.0
  %v1054 = vmax.f32 %v136, 0.0
  %v1055 = vmax.f32 %v137, 0.0
  %v1056 = vmax.f32 %v138, 0.0
  %v1057 = vmax.f32 %v139, 0.0
  %v1058 = vmax.f32 %v140, 0.0
  %v1059 = vmax.f32 %v141, 0.0
  %v1060 = vmax.f32 %v142, 0.0
  %v1061 = vmax.f32 %v143, 0.0
  %v1062 = vmax.f32 %v144, 0.0
  %v1063 = vmax.f32 %v145, 0.0
  %v1064 = vmax.f32 %v146, 0.0
  %v1065 = vmax.f32 %v147, 0.0
  %v1066 = vmax.f32 %v148, 0.0
  %v1067 = vmax.f32 %v149, 0.0
  %v1068 = vmax.f32 %v150, 0.0
  %v1069 = vmax.f32 %v151, 0.0
  %v1070 = vmax.f32 %v152, 0.0
  %v1071 = vmax.f32 %v153, 0.0
  %v1072 = vmax.f32 %v154, 0.0
  %v1073 = vmax.f32 %v155, 0.0
  %v1074 = vmax.f32 %v156, 0.0
  %v1075 = vmax.f32 %v157, 0.0
  %v1076 = vmax.f32 %v158, 0.0
  %v1077 = vmax.f32 %v159, 0.0
  %v1078 = vmax.f32 %v160, 0.0
  %v1079 = vmax.f32 %v161, 0.0
  %v1080 = vmax.f32 %v162, 0.0
  %v1081 = vmax.f32 %v163, 0.0
  %v1082 = vmax.f32 %v164, 0.0
  %v1083 = vmax.f32 %v165, 0.0
  %v1084 = vmax.f32 %v166, 0.0
  %v1085 = vmax.f32 %v167, 0.0
  %v1086 = vmax.f32 %v168, 0.0
  %v1087 = vmax.f32 %v169, 0.0
  %v1088 = vmax.f32 %v170, 0.0
  %v1089 = vmax.f32 %v171, 0.0
  %v1090 = vmax.f32 %v172, 0.0
  %v1091 = vmax.f32 %v173, 0.0
  %v1092 = vmax.f32 %v174, 0.0
  %v1093 = vmax.f32 %v175, 0.0
  %v1094 = vmax.f32 %v176, 0.0
  %v1095 = vmax.f32 %v177, 0.0
  %v1096 = vmax.f32 %v178, 0.0
  %v1097 = vmax.f32 %v179, 0.0
  %v1098 = vmax.f32 %v180, 0.0
  %v1099 = vmax.f32 %v181, 0.0
  %v1100 = vmax.f32 %v182, 0.0
  %v1101 = vmax.f32 %v183, 0.0
  %v1102 = vmax.f32 %v184, 0.0
  %v1103 = vmax.f32 %v185, 0.0
  %v1104 = vmax.f32 %v186, 0.0
  %v1105 = vmax.f32 %v187, 0.0
  %v1106 = vmax.f32 %v188, 0.0
  %v1107 = vmax.f32 %v189, 0.0
  %v1108 = vmax.f32 %v190, 0.0
  %v1109 = vmax.f32 %v191, 0.0
  %v1110 = vmax.f32 %v192, 0.0
  %v1111 = vmax.f32 %v193, 0.0
  %v1112 = vmax.f32 %v194, 0.0
  %v1113 = vmax.f32 %v195, 0.0
  %v1114 = vmax.f32 %v196, 0.0
  %v1115 = vmax.f32 %v197, 0.0
  %v1116 = vmax.f32 %v198, 0.0
  %v1117 = vmax.f32 %v199, 0.0
  %v1118 = vmax.f32 %v200, 0.0
  %v1119 = vmax.f32 %v201, 0.0
  %v1120 = vmax.f32 %v202, 0.0
  %v1121 = vmax.f32 %v203, 0.0
  %v1122 = vmax.f32 %v204, 0.0
  %v1123 = vmax.f32 %v205, 0.0
  %v1124 = vmax.f32 %v206, 0.0
  %v1125 = vmax.f32 %v207, 0.0
  %v1126 = vmax.f32 %v208, 0.0
  %v1127 = vmax.f32 %v209, 0.0
  %v1128 = vmax.f32 %v210, 0.0
  %v1129 = vmax.f32 %v211, 0.0
  %v1130 = vmax.f32 %v212, 0.0
  %v1131 = vmax.f32 %v213, 0.0
  %v1132 = vmax.f32 %v214, 0.0
  %v1133 = vmax.f32 %v215, 0.0
  %v1134 = vmax.f32 %v216, 0.0
  %v1135 = vmax.f32 %v217, 0.0
  %v1136 = vmax.f32 %v218, 0.0
  %v1137 = vmax.f32 %v219, 0.0
  %v1138 = vmax.f32 %v220, 0.0
  %v1139 = vmax.f32 %v221, 0.0
  %v1140 = vmax.f32 %v222, 0.0
  %v1141 = vmax.f32 %v223, 0.0
  %v1142 = vmax.f32 %v224, 0.0
  %v1143 = vmax.f32 %v225, 0.0
  %v1144 = vmax.f32 %v226, 0.0
  %v1145 = vmax.f32 %v227, 0.0
  %v1146 = vmax.f32 %v228, 0.0
  %v1147 = vmax.f32 %v229, 0.0
  %v1148 = vmax.f32 %v230, 0.0
  %v1149 = vmax.f32 %v231, 0.0
  %v1150 = vmax.f32 %v232, 0.0
  %v1151 = vmax.f32 %v233, 0.0
  %v1152 = vmax.f32 %v234, 0.0
  %v1153 = vmax.f32 %v235, 0.0
  %v1154 = vmax.f32 %v236, 0.0
  %v1155 = vmax.f32 %v237, 0.0
  %v1156 = vmax.f32 %v238, 0.0
  %v1157 = vmax.f32 %v239, 0.0
  %v1158 = vmax.f32 %v240, 0.0
  %v1159 = vmax.f32 %v241, 0.0
  %v1160 = vmax.f32 %v242, 0.0
  %v1161 = vmax.f32 %v243, 0.0
  %v1162 = vmax.f32 %v244, 0.0
  %v1163 = vmax.f32 %v245, 0.0
  %v1164 = vmax.f32 %v246, 0.0
  %v1165 = vmax.f32 %v247, 0.0
  %v1166 = vmax.f32 %v248, 0.0
  %v1167 = vmax.f32 %v249, 0.0
  %v1168 = vmax.f32 %v250, 0.0
  %v1169 = vmax.f32 %v251, 0.0
  %v1170 = vmax.f32 %v252, 0.0
  %v1171 = vmax.f32 %v253, 0.0
  %v1172 = vmax.f32 %v254, 0.0
  %v1173 = vmax.f32 %v255, 0.0
  %v1174 = vmax.f32 %v256, 0.0
  %v1175 = vmax.f32 %v257, 0.0
  %v1176 = vmax.f32 %v258, 0.0
  %v1177 = vmax.f32 %v259, 0.0
  %v1178 = vmax.f32 %v260, 0.0
  %v1179 = vmax.f32 %v261, 0.0
  %v1180 = vmax.f32 %v262, 0.0
  %v1181 = vmax.f32 %v263, 0.0
  %v1182 = vmax.f32 %v264, 0.0
  %v1183 = vmax.f32 %v265, 0.0
  %v1184 = vmax.f32 %v266, 0.0
  %v1185 = vmax.f32 %v267, 0.0
  %v1186 = vmax.f32 %v268, 0.0
  %v1187 = vmax.f32 %v269, 0.0
  %v1188 = vmax.f32 %v270, 0.0
  %v1189 = vmax.f32 %v271, 0.0
  %v1190 = vmax.f32 %v272, 0.0
  %v1191 = vmax.f32 %v273, 0.0
  %v1192 = vmax.f32 %v274, 0.0
  %v1193 = vmax.f32 %v275, 0.0
  %v1194 = vmax.f32 %v276, 0.0
  %v1195 = vmax.f32 %v277, 0.0
  %v1196 = vmax.f32 %v278, 0.0
  %v1197 = vmax.f32 %v279, 0.0
  %v1198 = vmax.f32 %v280, 0.0
  %v1199 = vmax.f32 %v281, 0.0
  %v1200 = vmax.f32 %v282, 0.0
  %v1201 = vmax.f32 %v283, 0.0
  %v1202 = vmax.f32 %v284, 0.0
  %v1203 = vmax.f32 %v285, 0.0
  %v1204 = vmax.f32 %v286, 0.0
  %v1205 = vmax.f32 %v287, 0.0
  %v1206 = vmax.f32 %v288, 0.0
  %v1207 = vmax.f32 %v289, 0.0
  %v1208 = vmax.f32 %v290, 0.0
  %v1209 = vmax.f32 %v291, 0.0
  %v1210 = vmax.f32 %v292, 0.0
  %v1211 = vmax.f32 %v293, 0.0
  %v1212 = vmax.f32 %v294, 0.0
  %v1213 = vmax.f32 %v295, 0.0
  %v1214 = vmax.f32 %v296, 0.0
  %v1215 = vmax.f32 %v297, 0.0
  %v1216 = vmax.f32 %v298, 0.0
  %v1217 = vmax.f32 %v299, 0.0
  %v1218 = vmax.f32 %v300, 0.0
  %v1219 = vmax.f32 %v301, 0.0
  %v1220 = vmax.f32 %v302, 0.0
  %v1221 = vmax.f32 %v303, 0.0
  %v1222 = vmax.f32 %v304, 0.0
  %v1223 = vmax.f32 %v305, 0.0
  %v1224 = vmax.f32 %v306, 0.0
  %v1225 = vmax.f32 %v307, 0.0
  %v1226 = vmax.f32 %v308, 0.0
  %v1227 = vmax.f32 %v309, 0.0
  %v1228 = vmax.f32 %v310, 0.0
  %v1229 = vmax.f32 %v311, 0.0
  %v1230 = vmax.f32 %v312, 0.0
  %v1231 = vmax.f32 %v313, 0.0
  %v1232 = vmax.f32 %v314, 0.0
  %v1233 = vmax.f32 %v315, 0.0
  %v1234 = vmax.f32 %v316, 0.0
  %v1235 = vmax.f32 %v317, 0.0
  %v1236 = vmax.f32 %v318, 0.0
  %v1237 = vmax.f32 %v319, 0.0
  %v1238 = vmax.f32 %v320, 0.0
  %v1239 = vmax.f32 %v321, 0.0
  %v1240 = vmax.f32 %v322, 0.0
  %v1241 = vmax.f32 %v323, 0.0
  %v1242 = vmax.f32 %v324, 0.0
  %v1243 = vmax.f32 %v325, 0.0
  %v1244 = vmax.f32 %v326, 0.0
  %v1245 = vmax.f32 %v327, 0.0
  %v1246 = vmax.f32 %v328, 0.0
  %v1247 = vmax.f32 %v329, 0.0
  %v1248 = vmax.f32 %v330, 0.0
  %v1249 = vmax.f32 %v331, 0.0
  %v1250 = vmax.f32 %v332, 0.0
  %v1251 = vmax.f32 %v333, 0.0
  %v1252 = vmax.f32 %v334, 0.0
  %v1253 = vmax.f32 %v335, 0.0
  %v1254 = vmax.f32 %v336, 0.0
  %v1255 = vmax.f32 %v337, 0.0
  %v1256 = vmax.f32 %v338, 0.0
  %v1257 = vmax.f32 %v339, 0.0
  %v1258 = vmax.f32 %v340, 0.0
  %v1259 = vmax.f32 %v341, 0.0
  %v1260 = vmax.f32 %v342, 0.0
  %v1261 = vmax.f32 %v343, 0.0
  %v1262 = vmax.f32 %v344, 0.0
  %v1263 = vmax.f32 %v345, 0.0
  %v1264 = vmax.f32 %v346, 0.0
  %v1265 = vmax.f32 %v347, 0.0
  %v1266 = vmax.f32 %v348, 0.0
  %v1267 = vmax.f32 %v349, 0.0
  %v1268 = vmax.f32 %v350, 0.0
  %v1269 = vmax.f32 %v351, 0.0
  %v1270 = vmax.f32 %v352, 0.0
  %v1271 = vmax.f32 %v353, 0.0
  %v1272 = vmax.f32 %v354, 0.0
  %v1273 = vmax.f32 %v355, 0.0
  %v1274 = vmax.f32 %v356, 0.0
  %v1275 = vmax.f32 %v357, 0.0
  %v1276 = vmax.f32 %v358, 0.0
  %v1277 = vmax.f32 %v359, 0.0
  %v1278 = vmax.f32 %v360, 0.0
  %v1279 = vmax.f32 %v361, 0.0
  %v1280 = vmax.f32 %v362, 0.0
  %v1281 = vmax.f32 %v363, 0.0
  %v1282 = vmax.f32 %v364, 0.0
  %v1283 = vmax.f32 %v365, 0.0
  %v1284 = vmax.f32 %v366, 0.0
  %v1285 = vmax.f32 %v367, 0.0
  %v1286 = vmax.f32 %v368, 0.0
  %v1287 = vmax.f32 %v369, 0.0
  %v1288 = vmax.f32 %v370, 0.0
  %v1289 = vmax.f32 %v371, 0.0
  %v1290 = vmax.f32 %v372, 0.0
  %v1291 = vmax.f32 %v373, 0.0
  %v1292 = vmax.f32 %v374, 0.0
  %v1293 = vmax.f32 %v375, 0.0
  %v1294 = vmax.f32 %v376, 0.0
  %v1295 = vmax.f32 %v377, 0.0
  %v1296 = vmax.f32 %v378, 0.0
  %v1297 = vmax.f32 %v379, 0.0
  %v1298 = vmax.f32 %v380, 0.0
  %v1299 = vmax.f32 %v381, 0.0
  %v1300 = vmax.f32 %v382, 0.0
  %v1301 = vmax.f32 %v383, 0.0
  %v1302 = vmax.f32 %v384, 0.0
  %v1303 = vmax.f32 %v385, 0.0
  %v1304 = vmax.f32 %v386, 0.0
  %v1305 = vmax.f32 %v387, 0.0
  %v1306 = vmax.f32 %v388, 0.0
  %v1307 = vmax.f32 %v389, 0.0
  %v1308 = vmax.f32 %v390, 0.0
  %v1309 = vmax.f32 %v391, 0.0
  %v1310 = vmax.f32 %v392, 0.0
  %v1311 = vmax.f32 %v393, 0.0
  %v1312 = vmax.f32 %v394, 0.0
  %v1313 = vmax.f32 %v395, 0.0
  %v1314 = vmax.f32 %v396, 0.0
  %v1315 = vmax.f32 %v397, 0.0
  %v1316 = vmax.f32 %v398, 0.0
  %v1317 = vmax.f32 %v399, 0.0
  %v1318 = vmax.f32 %v400, 0.0
  %v1319 = vmax.f32 %v401, 0.0
  %v1320 = vmax.f32 %v402, 0.0
  %v1321 = vmax.f32 %v403, 0.0
  %v1322 = vmax.f32 %v404, 0.0
  %v1323 = vmax.f32 %v405, 0.0
  %v1324 = vmax.f32 %v406, 0.0
  %v1325 = vmax.f32 %v407, 0.0
  %v1326 = vmax.f32 %v408, 0.0
  %v1327 = vmax.f32 %v409, 0.0
  %v1328 = vmax.f32 %v410, 0.0
  %v1329 = vmax.f32 %v411, 0.0
  %v1330 = vmax.f32 %v412, 0.0
  %v1331 = vmax.f32 %v413, 0.0
  %v1332 = vmax.f32 %v414, 0.0
  %v1333 = vmax.f32 %v415, 0.0
  %v1334 = vmax.f32 %v416, 0.0
  %v1335 = vmax.f32 %v417, 0.0
  %v1336 = vmax.f32 %v418, 0.0
  %v1337 = vmax.f32 %v419, 0.0
  %v1338 = vmax.f32 %v420, 0.0
  %v1339 = vmax.f32 %v421, 0.0
  %v1340 = vmax.f32 %v422, 0.0
  %v1341 = vmax.f32 %v423, 0.0
  %v1342 = vmax.f32 %v424, 0.0
  %v1343 = vmax.f32 %v425, 0.0
  %v1344 = vmax.f32 %v426, 0.0
  %v1345 = vmax.f32 %v427, 0.0
  %v1346 = vmax.f32 %v428, 0.0
  %v1347 = vmax.f32 %v429, 0.0
  %v1348 = vmax.f32 %v430, 0.0
  %v1349 = vmax.f32 %v431, 0.0
  %v1350 = vmax.f32 %v432, 0.0
  %v1351 = vmax.f32 %v433, 0.0
  %v1352 = vmax.f32 %v434, 0.0
  %v1353 = vmax.f32 %v435, 0.0
  %v1354 = vmax.f32 %v436, 0.0
  %v1355 = vmax.f32 %v437, 0.0
  %v1356 = vmax.f32 %v438, 0.0
  %v1357 = vmax.f32 %v439, 0.0
  %v1358 = vmax.f32 %v440, 0.0
  %v1359 = vmax.f32 %v441, 0.0
  %v1360 = vmax.f32 %v442, 0.0
  %v1361 = vmax.f32 %v443, 0.0
  %v1362 = vmax.f32 %v444, 0.0
  %v1363 = vmax.f32 %v445, 0.0
  %v1364 = vmax.f32 %v446, 0.0
  %v1365 = vmax.f32 %v447, 0.0
  %v1366 = vmax.f32 %v448, 0.0
  %v1367 = vmax.f32 %v449, 0.0
  %v1368 = vmax.f32 %v450, 0.0
  %v1369 = vmax.f32 %v451, 0.0
  %v1370 = vmax.f32 %v452, 0.0
  %v1371 = vmax.f32 %v453, 0.0
  %v1372 = vmax.f32 %v454, 0.0
  %v1373 = vmax.f32 %v455, 0.0
  %v1374 = vmax.f32 %v456, 0.0
  %v1375 = vmax.f32 %v457, 0.0
  %v1376 = vmax.f32 %v458, 0.0
  %v1377 = vmax.f32 %v459, 0.0
  %v1378 = vmax.f32 %v460, 0.0
  %v1379 = vmax.f32 %v461, 0.0
  %v1380 = vmax.f32 %v462, 0.0
  %v1381 = vmax.f32 %v463, 0.0
  %v1382 = vmax.f32 %v464, 0.0
  %v1383 = vmax.f32 %v465, 0.0
  %v1384 = vmax.f32 %v466, 0.0
  %v1385 = vmax.f32 %v467, 0.0
  %v1386 = vmax.f32 %v468, 0.0
  %v1387 = vmax.f32 %v469, 0.0
  %v1388 = vmax.f32 %v470, 0.0
  %v1389 = vmax.f32 %v471, 0.0
  %v1390 = vmax.f32 %v472, 0.0
  %v1391 = vmax.f32 %v473, 0.0
  %v1392 = vmax.f32 %v474, 0.0
  %v1393 = vmax.f32 %v475, 0.0
  %v1394 = vmax.f32 %v476, 0.0
  %v1395 = vmax.f32 %v477, 0.0
  %v1396 = vmax.f32 %v478, 0.0
  %v1397 = vmax.f32 %v479, 0.0
  %v1398 = vmax.f32 %v480, 0.0
  %v1399 = vmax.f32 %v481, 0.0
  %v1400 = vmax.f32 %v482, 0.0
  %v1401 = vmax.f32 %v483, 0.0
  %v1402 = vmax.f32 %v484, 0.0
  %v1403 = vmax.f32 %v485, 0.0
  %v1404 = vmax.f32 %v486, 0.0
  %v1405 = vmax.f32 %v487, 0.0
  %v1406 = vmax.f32 %v488, 0.0
  %v1407 = vmax.f32 %v489, 0.0
  %v1408 = vmax.f32 %v490, 0.0
  %v1409 = vmax.f32 %v491, 0.0
  %v1410 = vmax.f32 %v492, 0.0
  %v1411 = vmax.f32 %v493, 0.0
  %v1412 = vmax.f32 %v494, 0.0
  %v1413 = vmax.f32 %v495, 0.0
  %v1414 = vmax.f32 %v496, 0.0
  %v1415 = vmax.f32 %v497, 0.0
  %v1416 = vmax.f32 %v498, 0.0
  %v1417 = vmax.f32 %v499, 0.0
  %v1418 = vmax.f32 %v500, 0.0
  %v1419 = vmax.f32 %v501, 0.0
  %v1420 = vmax.f32 %v502, 0.0
  %v1421 = vmax.f32 %v503, 0.0
  %v1422 = vmax.f32 %v504, 0.0
  %v1423 = vmax.f32 %v505, 0.0
  %v1424 = vmax.f32 %v506, 0.0
  %v1425 = vmax.f32 %v507, 0.0
  %v1426 = vmax.f32 %v508, 0.0
  %v1427 = vmax.f32 %v509, 0.0
  %v1428 = vmax.f32 %v510, 0.0
  %v1429 = vmax.f32 %v511, 0.0
  %v1430 = vmax.f32 %v512, 0.0
  %v1431 = vmax.f32 %v513, 0.0
  %v1432 = vmax.f32 %v514, 0.0
  %v1433 = vmax.f32 %v515, 0.0
  %v1434 = vmax.f32 %v516, 0.0
  %v1435 = vmax.f32 %v517, 0.0
  %v1436 = vmax.f32 %v518, 0.0
  %v1437 = vmax.f32 %v519, 0.0
  %v1438 = vmax.f32 %v520, 0.0
  %v1439 = vmax.f32 %v521, 0.0
  %v1440 = vmax.f32 %v522, 0.0
  %v1441 = vmax.f32 %v523, 0.0
  %v1442 = vmax.f32 %v524, 0.0
  %v1443 = vmax.f32 %v525, 0.0
  %v1444 = vmax.f32 %v526, 0.0
  %v1445 = vmax.f32 %v527, 0.0
  %v1446 = vmax.f32 %v528, 0.0
  %v1447 = vmax.f32 %v529, 0.0
  %v1448 = vmax.f32 %v530, 0.0
  %v1449 = vmax.f32 %v531, 0.0
  %v1450 = vmax.f32 %v532, 0.0
  %v1451 = vmax.f32 %v533, 0.0
  %v1452 = vmax.f32 %v534, 0.0
  %v1453 = vmax.f32 %v535, 0.0
  %v1454 = vmax.f32 %v536, 0.0
  %v1455 = vmax.f32 %v537, 0.0
  %v1456 = vmax.f32 %v538, 0.0
  %v1457 = vmax.f32 %v539, 0.0
  %v1458 = vmax.f32 %v540, 0.0
  %v1459 = vmax.f32 %v541, 0.0
  %v1460 = vmax.f32 %v542, 0.0
  %v1461 = vmax.f32 %v543, 0.0
  %v1462 = vmax.f32 %v544, 0.0
  %v1463 = vmax.f32 %v545, 0.0
  %v1464 = vmax.f32 %v546, 0.0
  %v1465 = vmax.f32 %v547, 0.0
  %v1466 = vmax.f32 %v548, 0.0
  %v1467 = vmax.f32 %v549, 0.0
  %v1468 = vmax.f32 %v550, 0.0
  %v1469 = vmax.f32 %v551, 0.0
  %v1470 = vmax.f32 %v552, 0.0
  %v1471 = vmax.f32 %v553, 0.0
  %v1472 = vmax.f32 %v554, 0.0
  %v1473 = vmax.f32 %v555, 0.0
  %v1474 = vmax.f32 %v556, 0.0
  %v1475 = vmax.f32 %v557, 0.0
  %v1476 = vmax.f32 %v558, 0.0
  %v1477 = vmax.f32 %v559, 0.0
  %v1478 = vmax.f32 %v560, 0.0
  %v1479 = vmax.f32 %v561, 0.0
  %v1480 = vmax.f32 %v562, 0.0
  %v1481 = vmax.f32 %v563, 0.0
  %v1482 = vmax.f32 %v564, 0.0
  %v1483 = vmax.f32 %v565, 0.0
  %v1484 = vmax.f32 %v566, 0.0
  %v1485 = vmax.f32 %v567, 0.0
  %v1486 = vmax.f32 %v568, 0.0
  %v1487 = vmax.f32 %v569, 0.0
  %v1488 = vmax.f32 %v570, 0.0
  %v1489 = vmax.f32 %v571, 0.0
  %v1490 = vmax.f32 %v572, 0.0
  %v1491 = vmax.f32 %v573, 0.0
  %v1492 = vmax.f32 %v574, 0.0
  %v1493 = vmax.f32 %v575, 0.0
  %v1494 = vmax.f32 %v576, 0.0
  %v1495 = vmax.f32 %v577, 0.0
  %v1496 = vmax.f32 %v578, 0.0
  %v1497 = vmax.f32 %v579, 0.0
  %v1498 = vmax.f32 %v580, 0.0
  %v1499 = vmax.f32 %v581, 0.0
  %v1500 = vmax.f32 %v582, 0.0
  %v1501 = vmax.f32 %v583, 0.0
  %v1502 = vmax.f32 %v584, 0.0
  %v1503 = vmax.f32 %v585, 0.0
  %v1504 = vmax.f32 %v586, 0.0
  %v1505 = vmax.f32 %v587, 0.0
  %v1506 = vmax.f32 %v588, 0.0
  %v1507 = vmax.f32 %v589, 0.0
  %v1508 = vmax.f32 %v590, 0.0
  %v1509 = vmax.f32 %v591, 0.0
  %v1510 = vmax.f32 %v592, 0.0
  %v1511 = vmax.f32 %v593, 0.0
  %v1512 = vmax.f32 %v594, 0.0
  %v1513 = vmax.f32 %v595, 0.0
  %v1514 = vmax.f32 %v596, 0.0
  %v1515 = vmax.f32 %v597, 0.0
  %v1516 = vmax.f32 %v598, 0.0
  %v1517 = vmax.f32 %v599, 0.0
  %v1518 = vmax.f32 %v600, 0.0
  %v1519 = vmax.f32 %v601, 0.0
  %v1520 = vmax.f32 %v602, 0.0
  %v1521 = vmax.f32 %v603, 0.0
  %v1522 = vmax.f32 %v604, 0.0
  %v1523 = vmax.f32 %v605, 0.0
  %v1524 = vmax.f32 %v606, 0.0
  %v1525 = vmax.f32 %v607, 0.0
  %v1526 = vmax.f32 %v608, 0.0
  %v1527 = vmax.f32 %v609, 0.0
  %v1528 = vmax.f32 %v610, 0.0
  %v1529 = vmax.f32 %v611, 0.0
  %v1530 = vmax.f32 %v612, 0.0
  %v1531 = vmax.f32 %v613, 0.0
  %v1532 = vmax.f32 %v614, 0.0
  %v1533 = vmax.f32 %v615, 0.0
  %v1534 = vmax.f32 %v616, 0.0
  %v1535 = vmax.f32 %v617, 0.0
  %v1536 = vmax.f32 %v618, 0.0
  %v1537 = vmax.f32 %v619, 0.0
  %v1538 = vmax.f32 %v620, 0.0
  %v1539 = vmax.f32 %v621, 0.0
  %v1540 = vmax.f32 %v622, 0.0
  %v1541 = vmax.f32 %v623, 0.0
  %v1542 = vmax.f32 %v624, 0.0
  %v1543 = vmax.f32 %v625, 0.0
  %v1544 = vmax.f32 %v626, 0.0
  %v1545 = vmax.f32 %v627, 0.0
  %v1546 = vmax.f32 %v628, 0.0
  %v1547 = vmax.f32 %v629, 0.0
  %v1548 = vmax.f32 %v630, 0.0
  %v1549 = vmax.f32 %v631, 0.0
  %v1550 = vmax.f32 %v632, 0.0
  %v1551 = vmax.f32 %v633, 0.0
  %v1552 = vmax.f32 %v634, 0.0
  %v1553 = vmax.f32 %v635, 0.0
  %v1554 = vmax.f32 %v636, 0.0
  %v1555 = vmax.f32 %v637, 0.0
  %v1556 = vmax.f32 %v638, 0.0
  %v1557 = vmax.f32 %v639, 0.0
  %v1558 = vmax.f32 %v640, 0.0
  %v1559 = vmax.f32 %v641, 0.0
  %v1560 = vmax.f32 %v642, 0.0
  %v1561 = vmax.f32 %v643, 0.0
  %v1562 = vmax.f32 %v644, 0.0
  %v1563 = vmax.f32 %v645, 0.0
  %v1564 = vmax.f32 %v646, 0.0
  %v1565 = vmax.f32 %v647, 0.0
  %v1566 = vmax.f32 %v648, 0.0
  %v1567 = vmax.f32 %v649, 0.0
  %v1568 = vmax.f32 %v650, 0.0
  %v1569 = vmax.f32 %v651, 0.0
  %v1570 = vmax.f32 %v652, 0.0
  %v1571 = vmax.f32 %v653, 0.0
  %v1572 = vmax.f32 %v654, 0.0
  %v1573 = vmax.f32 %v655, 0.0
  %v1574 = vmax.f32 %v656, 0.0
  %v1575 = vmax.f32 %v657, 0.0
  %v1576 = vmax.f32 %v658, 0.0
  %v1577 = vmax.f32 %v659, 0.0
  %v1578 = vmax.f32 %v660, 0.0
  %v1579 = vmax.f32 %v661, 0.0
  %v1580 = vmax.f32 %v662, 0.0
  %v1581 = vmax.f32 %v663, 0.0
  %v1582 = vmax.f32 %v664, 0.0
  %v1583 = vmax.f32 %v665, 0.0
  %v1584 = vmax.f32 %v666, 0.0
  %v1585 = vmax.f32 %v667, 0.0
  %v1586 = vmax.f32 %v668, 0.0
  %v1587 = vmax.f32 %v669, 0.0
  %v1588 = vmax.f32 %v670, 0.0
  %v1589 = vmax.f32 %v671, 0.0
  %v1590 = vmax.f32 %v672, 0.0
  %v1591 = vmax.f32 %v673, 0.0
  %v1592 = vmax.f32 %v674, 0.0
  %v1593 = vmax.f32 %v675, 0.0
  %v1594 = vmax.f32 %v676, 0.0
  %v1595 = vmax.f32 %v677, 0.0
  %v1596 = vmax.f32 %v678, 0.0
  %v1597 = vmax.f32 %v679, 0.0
  %v1598 = vmax.f32 %v680, 0.0
  %v1599 = vmax.f32 %v681, 0.0
  %v1600 = vmax.f32 %v682, 0.0
  %v1601 = vmax.f32 %v683, 0.0
  %v1602 = vmax.f32 %v684, 0.0
  %v1603 = vmax.f32 %v685, 0.0
  %v1604 = vmax.f32 %v686, 0.0
  %v1605 = vmax.f32 %v687, 0.0
  %v1606 = vmax.f32 %v688, 0.0
  %v1607 = vmax.f32 %v689, 0.0
  %v1608 = vmax.f32 %v690, 0.0
  %v1609 = vmax.f32 %v691, 0.0
  %v1610 = vmax.f32 %v692, 0.0
  %v1611 = vmax.f32 %v693, 0.0
  %v1612 = vmax.f32 %v694, 0.0
  %v1613 = vmax.f32 %v695, 0.0
  %v1614 = vmax.f32 %v696, 0.0
  %v1615 = vmax.f32 %v697, 0.0
  %v1616 = vmax.f32 %v698, 0.0
  %v1617 = vmax.f32 %v699, 0.0
  %v1618 = vmax.f32 %v700, 0.0
  %v1619 = vmax.f32 %v701, 0.0
  %v1620 = vmax.f32 %v702, 0.0
  %v1621 = vmax.f32 %v703, 0.0
  %v1622 = vmax.f32 %v704, 0.0
  %v1623 = vmax.f32 %v705, 0.0
  %v1624 = vmax.f32 %v706, 0.0
  %v1625 = vmax.f32 %v707, 0.0
  %v1626 = vmax.f32 %v708, 0.0
  %v1627 = vmax.f32 %v709, 0.0
  %v1628 = vmax.f32 %v710, 0.0
  %v1629 = vmax.f32 %v711, 0.0
  %v1630 = vmax.f32 %v712, 0.0
  %v1631 = vmax.f32 %v713, 0.0
  %v1632 = vmax.f32 %v714, 0.0
  %v1633 = vmax.f32 %v715, 0.0
  %v1634 = vmax.f32 %v716, 0.0
  %v1635 = vmax.f32 %v717, 0.0
  %v1636 = vmax.f32 %v718, 0.0
  %v1637 = vmax.f32 %v719, 0.0
  %v1638 = vmax.f32 %v720, 0.0
  %v1639 = vmax.f32 %v721, 0.0
  %v1640 = vmax.f32 %v722, 0.0
  %v1641 = vmax.f32 %v723, 0.0
  %v1642 = vmax.f32 %v724, 0.0
  %v1643 = vmax.f32 %v725, 0.0
  %v1644 = vmax.f32 %v726, 0.0
  %v1645 = vmax.f32 %v727, 0.0
  %v1646 = vmax.f32 %v728, 0.0
  %v1647 = vmax.f32 %v729, 0.0
  %v1648 = vmax.f32 %v730, 0.0
  %v1649 = vmax.f32 %v731, 0.0
  %v1650 = vmax.f32 %v732, 0.0
  %v1651 = vmax.f32 %v733, 0.0
  %v1652 = vmax.f32 %v734, 0.0
  %v1653 = vmax.f32 %v735, 0.0
  %v1654 = vmax.f32 %v736, 0.0
  %v1655 = vmax.f32 %v737, 0.0
  %v1656 = vmax.f32 %v738, 0.0
  %v1657 = vmax.f32 %v739, 0.0
  %v1658 = vmax.f32 %v740, 0.0
  %v1659 = vmax.f32 %v741, 0.0
  %v1660 = vmax.f32 %v742, 0.0
  %v1661 = vmax.f32 %v743, 0.0
  %v1662 = vmax.f32 %v744, 0.0
  %v1663 = vmax.f32 %v745, 0.0
  %v1664 = vmax.f32 %v746, 0.0
  %v1665 = vmax.f32 %v747, 0.0
  %v1666 = vmax.f32 %v748, 0.0
  %v1667 = vmax.f32 %v749, 0.0
  %v1668 = vmax.f32 %v750, 0.0
  %v1669 = vmax.f32 %v751, 0.0
  %v1670 = vmax.f32 %v752, 0.0
  %v1671 = vmax.f32 %v753, 0.0
  %v1672 = vmax.f32 %v754, 0.0
  %v1673 = vmax.f32 %v755, 0.0
  %v1674 = vmax.f32 %v756, 0.0
  %v1675 = vmax.f32 %v757, 0.0
  %v1676 = vmax.f32 %v758, 0.0
  %v1677 = vmax.f32 %v759, 0.0
  %v1678 = vmax.f32 %v760, 0.0
  %v1679 = vmax.f32 %v761, 0.0
  %v1680 = vmax.f32 %v762, 0.0
  %v1681 = vmax.f32 %v763, 0.0
  %v1682 = vmax.f32 %v764, 0.0
  %v1683 = vmax.f32 %v765, 0.0
  %v1684 = vmax.f32 %v766, 0.0
  %v1685 = vmax.f32 %v767, 0.0
  %v1686 = vmax.f32 %v768, 0.0
  %v1687 = vmax.f32 %v769, 0.0
  %v1688 = vmax.f32 %v770, 0.0
  %v1689 = vmax.f32 %v771, 0.0
  %v1690 = vmax.f32 %v772, 0.0
  %v1691 = vmax.f32 %v773, 0.0
  %v1692 = vmax.f32 %v774, 0.0
  %v1693 = vmax.f32 %v775, 0.0
  %v1694 = vmax.f32 %v776, 0.0
  %v1695 = vmax.f32 %v777, 0.0
  %v1696 = vmax.f32 %v778, 0.0
  %v1697 = vmax.f32 %v779, 0.0
  %v1698 = vmax.f32 %v780, 0.0
  %v1699 = vmax.f32 %v781, 0.0
  %v1700 = vmax.f32 %v782, 0.0
  %v1701 = vmax.f32 %v783, 0.0
  %v1702 = vmax.f32 %v784, 0.0
  %v1703 = vmax.f32 %v785, 0.0
  %v1704 = vmax.f32 %v786, 0.0
  %v1705 = vmax.f32 %v787, 0.0
  %v1706 = vmax.f32 %v788, 0.0
  %v1707 = vmax.f32 %v789, 0.0
  %v1708 = vmax.f32 %v790, 0.0
  %v1709 = vmax.f32 %v791, 0.0
  %v1710 = vmax.f32 %v792, 0.0
  %v1711 = vmax.f32 %v793, 0.0
  %v1712 = vmax.f32 %v794, 0.0
  %v1713 = vmax.f32 %v795, 0.0
  %v1714 = vmax.f32 %v796, 0.0
  %v1715 = vmax.f32 %v797, 0.0
  %v1716 = vmax.f32 %v798, 0.0
  %v1717 = vmax.f32 %v799, 0.0
  %v1718 = vmax.f32 %v800, 0.0
  %v1719 = vmax.f32 %v801, 0.0
  %v1720 = vmax.f32 %v802, 0.0
  %v1721 = vmax.f32 %v803, 0.0
  %v1722 = vmax.f32 %v804, 0.0
  %v1723 = vmax.f32 %v805, 0.0
  %v1724 = vmax.f32 %v806, 0.0
  %v1725 = vmax.f32 %v807, 0.0
  %v1726 = vmax.f32 %v808, 0.0
  %v1727 = vmax.f32 %v809, 0.0
  %v1728 = vmax.f32 %v810, 0.0
  %v1729 = vmax.f32 %v811, 0.0
  %v1730 = vmax.f32 %v812, 0.0
  %v1731 = vmax.f32 %v813, 0.0
  %v1732 = vmax.f32 %v814, 0.0
  %v1733 = vmax.f32 %v815, 0.0
  %v1734 = vmax.f32 %v816, 0.0
  %v1735 = vmax.f32 %v817, 0.0
  %v1736 = vmax.f32 %v818, 0.0
  %v1737 = vmax.f32 %v819, 0.0
  %v1738 = vmax.f32 %v820, 0.0
  %v1739 = vmax.f32 %v821, 0.0
  %v1740 = vmax.f32 %v822, 0.0
  %v1741 = vmax.f32 %v823, 0.0
  %v1742 = vmax.f32 %v824, 0.0
  %v1743 = vmax.f32 %v825, 0.0
  %v1744 = vmax.f32 %v826, 0.0
  %v1745 = vmax.f32 %v827, 0.0
  %v1746 = vmax.f32 %v828, 0.0
  %v1747 = vmax.f32 %v829, 0.0
  %v1748 = vmax.f32 %v830, 0.0
  %v1749 = vmax.f32 %v831, 0.0
  %v1750 = vmax.f32 %v832, 0.0
  %v1751 = vmax.f32 %v833, 0.0
  %v1752 = vmax.f32 %v834, 0.0
  %v1753 = vmax.f32 %v835, 0.0
  %v1754 = vmax.f32 %v836, 0.0
  %v1755 = vmax.f32 %v837, 0.0
  %v1756 = vmax.f32 %v838, 0.0
  %v1757 = vmax.f32 %v839, 0.0
  %v1758 = vmax.f32 %v840, 0.0
  %v1759 = vmax.f32 %v841, 0.0
  %v1760 = vmax.f32 %v842, 0.0
  %v1761 = vmax.f32 %v843, 0.0
  %v1762 = vmax.f32 %v844, 0.0
  %v1763 = vmax.f32 %v845, 0.0
  %v1764 = vmax.f32 %v846, 0.0
  %v1765 = vmax.f32 %v847, 0.0
  %v1766 = vmax.f32 %v848, 0.0
  %v1767 = vmax.f32 %v849, 0.0
  %v1768 = vmax.f32 %v850, 0.0
  %v1769 = vmax.f32 %v851, 0.0
  %v1770 = vmax.f32 %v852, 0.0
  %v1771 = vmax.f32 %v853, 0.0
  %v1772 = vmax.f32 %v854, 0.0
  %v1773 = vmax.f32 %v855, 0.0
  %v1774 = vmax.f32 %v856, 0.0
  %v1775 = vmax.f32 %v857, 0.0
  %v1776 = vmax.f32 %v858, 0.0
  %v1777 = vmax.f32 %v859, 0.0
  %v1778 = vmax.f32 %v860, 0.0
  %v1779 = vmax.f32 %v861, 0.0
  %v1780 = vmax.f32 %v862, 0.0
  %v1781 = vmax.f32 %v863, 0.0
  %v1782 = vmax.f32 %v864, 0.0
  %v1783 = vmax.f32 %v865, 0.0
  %v1784 = vmax.f32 %v866, 0.0
  %v1785 = vmax.f32 %v867, 0.0
  %v1786 = vmax.f32 %v868, 0.0
  %v1787 = vmax.f32 %v869, 0.0
  %v1788 = vmax.f32 %v870, 0.0
  %v1789 = vmax.f32 %v871, 0.0
  %v1790 = vmax.f32 %v872, 0.0
  %v1791 = vmax.f32 %v873, 0.0
  %v1792 = vmax.f32 %v874, 0.0
  %v1793 = vmax.f32 %v875, 0.0
  %v1794 = vmax.f32 %v876, 0.0
  %v1795 = vmax.f32 %v877, 0.0
  %v1796 = vmax.f32 %v878, 0.0
  %v1797 = vmax.f32 %v879, 0.0
  %v1798 = vmax.f32 %v880, 0.0
  %v1799 = vmax.f32 %v881, 0.0
  %v1800 = vmax.f32 %v882, 0.0
  %v1801 = vmax.f32 %v883, 0.0
  %v1802 = vmax.f32 %v884, 0.0
  %v1803 = vmax.f32 %v885, 0.0
  %v1804 = vmax.f32 %v886, 0.0
  %v1805 = vmax.f32 %v887, 0.0
  %v1806 = vmax.f32 %v888, 0.0
  %v1807 = vmax.f32 %v889, 0.0
  %v1808 = vmax.f32 %v890, 0.0
  %v1809 = vmax.f32 %v891, 0.0
  %v1810 = vmax.f32 %v892, 0.0
  %v1811 = vmax.f32 %v893, 0.0
  %v1812 = vmax.f32 %v894, 0.0
  %v1813 = vmax.f32 %v895, 0.0
  %v1814 = vmax.f32 %v896, 0.0
  %v1815 = vmax.f32 %v897, 0.0
  %v1816 = vmax.f32 %v898, 0.0
  %v1817 = vmax.f32 %v899, 0.0
  %v1818 = vmax.f32 %v900, 0.0
  %v1819 = vmax.f32 %v901, 0.0
  %v1820 = vmax.f32 %v902, 0.0
  %v1821 = vmax.f32 %v903, 0.0
  %v1822 = vmax.f32 %v904, 0.0
  %v1823 = vmax.f32 %v905, 0.0
  %v1824 = vmax.f32 %v906, 0.0
  %v1825 = vmax.f32 %v907, 0.0
  %v1826 = vmax.f32 %v908, 0.0
  %v1827 = vmax.f32 %v909, 0.0
  %v1828 = vmax.f32 %v910, 0.0
  %v1829 = vmax.f32 %v911, 0.0
  %v1830 = vmax.f32 %v912, 0.0
  %v1831 = vmax.f32 %v913, 0.0
  %v1832 = vmax.f32 %v914, 0.0
  %v1833 = vmax.f32 %v915, 0.0
  %v1834 = vmax.f32 %v916, 0.0
  %v1835 = vmax.f32 %v917, 0.0
  %v1836 = vmax.f32 %v918, 0.0
  %v1837 = vmax.f32 %v919, 0.0
  %v1838 = vmax.f32 %v920, 0.0
  %v1839 = vmax.f32 %v921, 0.0
  %v1840 = vmax.f32 %v922, 0.0
  %v1841 = vmax.f32 %v923, 0.0
  %v1842 = vmax.f32 %v924, 0.0
  %v1843 = vmax.f32 %v925, 0.0
  %v1844 = vmax.f32 %v926, 0.0
  %v1845 = vmax.f32 %v927, 0.0
  %v1846 = vmax.f32 %v928, 0.0
  %v1847 = vmax.f32 %v929, 0.0
  %v1848 = vmax.f32 %v930, 0.0
  %v1849 = vmax.f32 %v931, 0.0
  %v1850 = vld [vmem:[%s1] sm:$0xff]
  %v1851 = vld [vmem:[%s1 + $0x8] sm:$0xff]
  %v1852 = vld [vmem:[%s1 + $0x10] sm:$0xff]
  %v1853 = vld [vmem:[%s1 + $0x18] sm:$0xff]
  %v1854 = vld [vmem:[%s1 + $0x20] sm:$0xff]
  %v1855 = vld [vmem:[%s1 + $0x28] sm:$0xff]
  %v1856 = vld [vmem:[%s1 + $0x30] sm:$0xff]
  %v1857 = vld [vmem:[%s1 + $0x38] sm:$0xff]
  %v1858 = vld [vmem:[%s1 + $0x40] sm:$0xff]
  %v1859 = vld [vmem:[%s1 + $0x48] sm:$0xff]
  %v1860 = vld [vmem:[%s1 + $0x50] sm:$0xff]
  %v1861 = vld [vmem:[%s1 + $0x58] sm:$0xff]
  %v1862 = vld [vmem:[%s1 + $0x60] sm:$0xff]
  %v1863 = vld [vmem:[%s1 + $0x68] sm:$0xff]
  %v1864 = vld [vmem:[%s1 + $0x70] sm:$0xff]
  %v1865 = vld [vmem:[%s1 + $0x78] sm:$0xff]
  %v1866 = vld [vmem:[%s1 + $0x80] sm:$0xff]
  %v1867 = vld [vmem:[%s1 + $0x88] sm:$0xff]
  %v1868 = vld [vmem:[%s1 + $0x90] sm:$0xff]
  %v1869 = vld [vmem:[%s1 + $0x98] sm:$0xff]
  %v1870 = vld [vmem:[%s1 + $0xa0] sm:$0xff]
  %v1871 = vld [vmem:[%s1 + $0xa8] sm:$0xff]
  %v1872 = vld [vmem:[%s1 + $0xb0] sm:$0xff]
  %v1873 = vld [vmem:[%s1 + $0xb8] sm:$0xff]
  %v1874 = vld [vmem:[%s1 + $0xc0] sm:$0xff]
  %v1875 = vld [vmem:[%s1 + $0xc8] sm:$0xff]
  %v1876 = vld [vmem:[%s1 + $0xd0] sm:$0xff]
  %v1877 = vld [vmem:[%s1 + $0xd8] sm:$0xff]
  %v1878 = vld [vmem:[%s1 + $0xe0] sm:$0xff]
  %v1879 = vld [vmem:[%s1 + $0xe8] sm:$0xff]
  %v1880 = vld [vmem:[%s1 + $0xf0] sm:$0xff]
  %v1881 = vld [vmem:[%s1 + $0xf8] sm:$0xff]
  %v1882 = vld [vmem:[%s1 + $0x100] sm:$0xff]
  %v1883 = vld [vmem:[%s1 + $0x108] sm:$0xff]
  %v1884 = vld [vmem:[%s1 + $0x110] sm:$0xff]
  %v1885 = vld [vmem:[%s1 + $0x118] sm:$0xff]
  %v1886 = vld [vmem:[%s1 + $0x120] sm:$0xff]
  %v1887 = vld [vmem:[%s1 + $0x128] sm:$0xff]
  %v1888 = vld [vmem:[%s1 + $0x130] sm:$0xff]
  %v1889 = vld [vmem:[%s1 + $0x138] sm:$0xff]
  %v1890 = vld [vmem:[%s1 + $0x140] sm:$0xff]
  %v1891 = vld [vmem:[%s1 + $0x148] sm:$0xff]
  %v1892 = vld [vmem:[%s1 + $0x150] sm:$0xff]
  %v1893 = vld [vmem:[%s1 + $0x158] sm:$0xff]
  %v1894 = vld [vmem:[%s1 + $0x160] sm:$0xff]
  %v1895 = vld [vmem:[%s1 + $0x168] sm:$0xff]
  %v1896 = vld [vmem:[%s1 + $0x170] sm:$0xff]
  %v1897 = vld [vmem:[%s1 + $0x178] sm:$0xff]
  %v1898 = vld [vmem:[%s1 + $0x180] sm:$0xff]
  %v1899 = vld [vmem:[%s1 + $0x188] sm:$0xff]
  %v1900 = vld [vmem:[%s1 + $0x190] sm:$0xff]
  %v1901 = vld [vmem:[%s1 + $0x198] sm:$0xff]
  %v1902 = vld [vmem:[%s1 + $0x1a0] sm:$0xff]
  %v1903 = vld [vmem:[%s1 + $0x1a8] sm:$0xff]
  %v1904 = vld [vmem:[%s1 + $0x1b0] sm:$0xff]
  %v1905 = vld [vmem:[%s1 + $0x1b8] sm:$0xff]
  %v1906 = vld [vmem:[%s1 + $0x1c0] sm:$0xff]
  %v1907 = vld [vmem:[%s1 + $0x1c8] sm:$0xff]
  %v1908 = vld [vmem:[%s1 + $0x1d0] sm:$0xff]
  %v1909 = vld [vmem:[%s1 + $0x1d8] sm:$0xff]
  %v1910 = vld [vmem:[%s1 + $0x1e0] sm:$0xff]
  %v1911 = vld [vmem:[%s1 + $0x1e8] sm:$0xff]
  %v1912 = vld [vmem:[%s1 + $0x1f0] sm:$0xff]
  %v1913 = vld [vmem:[%s1 + $0x1f8] sm:$0xff]
  %v1914 = vld [vmem:[%s1 + $0x200] sm:$0xff]
  %v1915 = vld [vmem:[%s1 + $0x208] sm:$0xff]
  %v1916 = vld [vmem:[%s1 + $0x210] sm:$0xff]
  %v1917 = vld [vmem:[%s1 + $0x218] sm:$0xff]
  %v1918 = vld [vmem:[%s1 + $0x220] sm:$0xff]
  %v1919 = vld [vmem:[%s1 + $0x228] sm:$0xff]
  %v1920 = vld [vmem:[%s1 + $0x230] sm:$0xff]
  %v1921 = vld [vmem:[%s1 + $0x238] sm:$0xff]
  %v1922 = vld [vmem:[%s1 + $0x240] sm:$0xff]
  %v1923 = vld [vmem:[%s1 + $0x248] sm:$0xff]
  %v1924 = vld [vmem:[%s1 + $0x250] sm:$0xff]
  %v1925 = vld [vmem:[%s1 + $0x258] sm:$0xff]
  %v1926 = vld [vmem:[%s1 + $0x260] sm:$0xff]
  %v1927 = vld [vmem:[%s1 + $0x268] sm:$0xff]
  %v1928 = vld [vmem:[%s1 + $0x270] sm:$0xff]
  %v1929 = vld [vmem:[%s1 + $0x278] sm:$0xff]
  %v1930 = vld [vmem:[%s1 + $0x280] sm:$0xff]
  %v1931 = vld [vmem:[%s1 + $0x288] sm:$0xff]
  %v1932 = vld [vmem:[%s1 + $0x290] sm:$0xff]
  %v1933 = vld [vmem:[%s1 + $0x298] sm:$0xff]
  %v1934 = vld [vmem:[%s1 + $0x2a0] sm:$0xff]
  %v1935 = vld [vmem:[%s1 + $0x2a8] sm:$0xff]
  %v1936 = vld [vmem:[%s1 + $0x2b0] sm:$0xff]
  %v1937 = vld [vmem:[%s1 + $0x2b8] sm:$0xff]
  %v1938 = vld [vmem:[%s1 + $0x2c0] sm:$0xff]
  %v1939 = vld [vmem:[%s1 + $0x2c8] sm:$0xff]
  %v1940 = vld [vmem:[%s1 + $0x2d0] sm:$0xff]
  %v1941 = vld [vmem:[%s1 + $0x2d8] sm:$0xff]
  %v1942 = vld [vmem:[%s1 + $0x2e0] sm:$0xff]
  %v1943 = vld [vmem:[%s1 + $0x2e8] sm:$0xff]
  %v1944 = vld [vmem:[%s1 + $0x2f0] sm:$0xff]
  %v1945 = vld [vmem:[%s1 + $0x2f8] sm:$0xff]
  %v1946 = vld [vmem:[%s1 + $0x300] sm:$0xff]
  %v1947 = vld [vmem:[%s1 + $0x308] sm:$0xff]
  %v1948 = vld [vmem:[%s1 + $0x310] sm:$0xff]
  %v1949 = vld [vmem:[%s1 + $0x318] sm:$0xff]
  %v1950 = vld [vmem:[%s1 + $0x320] sm:$0xff]
  %v1951 = vld [vmem:[%s1 + $0x328] sm:$0xff]
  %vm1952 = vcmask 719872
  %v1954 = vsel %vm1952, %v1851, 0
  %v1957 = vsel %vm1952, %v1853, 0
  %v1960 = vsel %vm1952, %v1855, 0
  %1962 = vmatprep.subr.mxu0 %v933
  %1963 = vmatpush1.msra.mxu0 %v932
  %1964 = vmatprep.subr.mxu0 %v935
  %1965 = vmatpush1.msra.mxu0 %v934
  %1966 = vmatprep.subr.mxu0 %v937
  %1967 = vmatpush1.msra.mxu0 %v936
  %1968 = vmatprep.subr.mxu0 %v939
  %1969 = vmatpush1.msra.mxu0 %v938
  %1970 = vmatprep.subr.mxu0 %v941
  %1971 = vmatpush1.msra.mxu0 %v940
  %1972 = vmatprep.subr.mxu0 %v943
  %1973 = vmatpush1.msra.mxu0 %v942
  %1974 = vmatprep.subr.mxu0 %v945
  %1975 = vmatpush1.msra.mxu0 %v944
  %1976 = vmatprep.subr.mxu0 %v947
  %1977 = vmatpush1.msra.mxu0 %v946
  %1978 = vmatprep.subr.mxu0 %v949
  %1979 = vmatpush1.msra.mxu0 %v948
  %1980 = vmatprep.subr.mxu0 %v951
  %1981 = vmatpush1.msra.mxu0 %v950
  %1982 = vmatprep.subr.mxu0 %v953
  %1983 = vmatpush1.msra.mxu0 %v952
  %1984 = vmatprep.subr.mxu0 %v955
  %1985 = vmatpush1.msra.mxu0 %v954
  %1986 = vmatprep.subr.mxu0 %v957
  %1987 = vmatpush1.msra.mxu0 %v956
  %1988 = vmatprep.subr.mxu0 %v959
  %1989 = vmatpush1.msra.mxu0 %v958
  %1990 = vmatprep.subr.mxu0 %v961
  %1991 = vmatpush1.msra.mxu0 %v960
  %1992 = vmatprep.subr.mxu0 %v963
  %1993 = vmatpush1.msra.mxu0 %v962
  %1994 = vmatprep.subr.mxu0 %v965
  %1995 = vmatpush1.msra.mxu0 %v964
  %1996 = vmatprep.subr.mxu0 %v967
  %1997 = vmatpush1.msra.mxu0 %v966
  %1998 = vmatprep.subr.mxu0 %v969
  %1999 = vmatpush1.msra.mxu0 %v968
  %2000 = vmatprep.subr.mxu0 %v971
  %2001 = vmatpush1.msra.mxu0 %v970
  %2002 = vmatprep.subr.mxu0 %v973
  %2003 = vmatpush1.msra.mxu0 %v972
  %2004 = vmatprep.subr.mxu0 %v975
  %2005 = vmatpush1.msra.mxu0 %v974
  %2006 = vmatprep.subr.mxu0 %v977
  %2007 = vmatpush1.msra.mxu0 %v976
  %2008 = vmatprep.subr.mxu0 %v979
  %2009 = vmatpush1.msra.mxu0 %v978
  %2010 = vmatprep.subr.mxu0 %v981
  %2011 = vmatpush1.msra.mxu0 %v980
  %2012 = vmatprep.subr.mxu0 %v983
  %2013 = vmatpush1.msra.mxu0 %v982
  %2014 = vmatprep.subr.mxu0 %v985
  %2015 = vmatpush1.msra.mxu0 %v984
  %2016 = vmatprep.subr.mxu0 0.0
  %2017 = vmatpush1.msra.mxu0 0.0
  %2018 = vmatprep.subr.mxu0 0.0
  %2019 = vmatpush1.msra.mxu0 0.0
  %2020 = vmatprep.subr.mxu0 0.0
  %2021 = vmatpush1.msra.mxu0 0.0
  %2022 = vmatprep.subr.mxu0 0.0
  %2023 = vmatpush1.msra.mxu0 0.0
  %2024 = vmatprep.subr.mxu0 0.0
  %2025 = vmatpush1.msra.mxu0 0.0
  %2026 = vmatprep.mubr.f32.mxu0 %v1954
  %2027 = vmatmul.mubr.f32.gmra.mrb[0].mxu0 %v1850
  %v2028 = vpop.f32.mrb[0].mxu0
  %v2029 = vadd.f32 0.0, %v2028
  %v2030 = vpop.f32.mrb[0].mxu0
  %v2031 = vadd.f32 0.0, %v2030
  %2032 = vmatprep.mubr.f32.mxu0 %v1957
  %2033 = vmatmul.mubr.f32.gmra.mrb[0].mxu0 %v1852
  %v2034 = vpop.f32.mrb[0].mxu0
  %v2035 = vadd.f32 0.0, %v2034
  %v2036 = vpop.f32.mrb[0].mxu0
  %v2037 = vadd.f32 0.0, %v2036
  %2038 = vmatprep.mubr.f32.mxu0 %v1960
  %2039 = vmatmul.mubr.f32.gmra.mrb[0].mxu0 %v1854
  %v2040 = vpop.f32.mrb[0].mxu0
  %v2041 = vadd.f32 0.0, %v2040
  %v2042 = vpop.f32.mrb[0].mxu0
  %v2043 = vadd.f32 0.0, %v2042
  %2044 = vdwg.mxu0
  %v2046 = vsel %vm1952, %v1857, 0
  %v2049 = vsel %vm1952, %v1859, 0
  %v2052 = vsel %vm1952, %v1861, 0
  %2054 = vmatprep.subr.mxu0 %v987
  %2055 = vmatpush1.msra.mxu0 %v986
  %2056 = vmatprep.subr.mxu0 %v989
  %2057 = vmatpush1.msra.mxu0 %v988
  %2058 = vmatprep.subr.mxu0 %v991
  %2059 = vmatpush1.msra.mxu0 %v990
  %2060 = vmatprep.subr.mxu0 %v993
  %2061 = vmatpush1.msra.mxu0 %v992
  %2062 = vmatprep.subr.mxu0 %v995
  %2063 = vmatpush1.msra.mxu0 %v994
  %2064 = vmatprep.subr.mxu0 %v997
  %2065 = vmatpush1.msra.mxu0 %v996
  %2066 = vmatprep.subr.mxu0 %v999
  %2067 = vmatpush1.msra.mxu0 %v998
  %2068 = vmatprep.subr.mxu0 %v1001
  %2069 = vmatpush1.msra.mxu0 %v1000
  %2070 = vmatprep.subr.mxu0 %v1003
  %2071 = vmatpush1.msra.mxu0 %v1002
  %2072 = vmatprep.subr.mxu0 %v1005
  %2073 = vmatpush1.msra.mxu0 %v1004
  %2074 = vmatprep.subr.mxu0 %v1007
  %2075 = vmatpush1.msra.mxu0 %v1006
  %2076 = vmatprep.subr.mxu0 %v1009
  %2077 = vmatpush1.msra.mxu0 %v1008
  %2078 = vmatprep.subr.mxu0 %v1011
  %2079 = vmatpush1.msra.mxu0 %v1010
  %2080 = vmatprep.subr.mxu0 %v1013
  %2081 = vmatpush1.msra.mxu0 %v1012
  %2082 = vmatprep.subr.mxu0 %v1015
  %2083 = vmatpush1.msra.mxu0 %v1014
  %2084 = vmatprep.subr.mxu0 %v1017
  %2085 = vmatpush1.msra.mxu0 %v1016
  %2086 = vmatprep.subr.mxu0 %v1019
  %2087 = vmatpush1.msra.mxu0 %v1018
  %2088 = vmatprep.subr.mxu0 %v1021
  %2089 = vmatpush1.msra.mxu0 %v1020
  %2090 = vmatprep.subr.mxu0 %v1023
  %2091 = vmatpush1.msra.mxu0 %v1022
  %2092 = vmatprep.subr.mxu0 %v1025
  %2093 = vmatpush1.msra.mxu0 %v1024
  %2094 = vmatprep.subr.mxu0 %v1027
  %2095 = vmatpush1.msra.mxu0 %v1026
  %2096 = vmatprep.subr.mxu0 %v1029
  %2097 = vmatpush1.msra.mxu0 %v1028
  %2098 = vmatprep.subr.mxu0 %v1031
  %2099 = vmatpush1.msra.mxu0 %v1030
  %2100 = vmatprep.subr.mxu0 %v1033
  %2101 = vmatpush1.msra.mxu0 %v1032
  %2102 = vmatprep.subr.mxu0 %v1035
  %2103 = vmatpush1.msra.mxu0 %v1034
  %2104 = vmatprep.subr.mxu0 %v1037
  %2105 = vmatpush1.msra.mxu0 %v1036
  %2106 = vmatprep.subr.mxu0 %v1039
  %2107 = vmatpush1.msra.mxu0 %v1038
  %2108 = vmatprep.subr.mxu0 0.0
  %2109 = vmatpush1.msra.mxu0 0.0
  %2110 = vmatprep.subr.mxu0 0.0
  %2111 = vmatpush1.msra.mxu0 0.0
  %2112 = vmatprep.subr.mxu0 0.0
  %2113 = vmatpush1.msra.mxu0 0.0
  %2114 = vmatprep.subr.mxu0 0.0
  %2115 = vmatpush1.msra.mxu0 0.0
  %2116 = vmatprep.subr.mxu0 0.0
  %2117 = vmatpush1.msra.mxu0 0.0
  %2118 = vmatprep.mubr.f32.mxu0 %v2046
  %2119 = vmatmul.mubr.f32.gmra.mrb[0].mxu0 %v1856
  %v2120 = vpop.f32.mrb[0].mxu0
  %v2121 = vadd.f32 0.0, %v2120
  %v2122 = vpop.f32.mrb[0].mxu0
  %v2123 = vadd.f32 0.0, %v2122
  %2124 = vmatprep.mubr.f32.mxu0 %v2049
  %2125 = vmatmul.mubr.f32.gmra.mrb[0].mxu0 %v1858
  %v2126 = vpop.f32.mrb[0].mxu0
  %v2127 = vadd.f32 0.0, %v2126
  %v2128 = vpop.f32.mrb[0].mxu0
  %v2129 = vadd.f32 0.0, %v2128
  %2130 = vmatprep.mubr.f32.mxu0 %v2052
  %2131 = vmatmul.mubr.f32.gmra.mrb[0].mxu0 %v1860
  %v2132 = vpop.f32.mrb[0].mxu0
  %v2133 = vadd.f32 0.0, %v2132
  %v2134 = vpop.f32.mrb[0].mxu0
  %v2135 = vadd.f32 0.0, %v2134
  %2136 = vdwg.mxu0
  %v2138 = vsel %vm1952, %v1863, 0
  %v2141 = vsel %vm1952, %v1865, 0
  %v2144 = vsel %vm1952, %v1867, 0
  %2146 = vmatprep.subr.mxu0 %v1041
  %2147 = vmatpush1.msra.mxu0 %v1040
  %2148 = vmatprep.subr.mxu0 %v1043
  %2149 = vmatpush1.msra.mxu0 %v1042
  %2150 = vmatprep.subr.mxu0 %v1045
  %2151 = vmatpush1.msra.mxu0 %v1044
  %2152 = vmatprep.subr.mxu0 %v1047
  %2153 = vmatpush1.msra.mxu0 %v1046
  %2154 = vmatprep.subr.mxu0 %v1049
  %2155 = vmatpush1.msra.mxu0 %v1048
  %2156 = vmatprep.subr.mxu0 %v1051
  %2157 = vmatpush1.msra.mxu0 %v1050
  %2158 = vmatprep.subr.mxu0 %v1053
  %2159 = vmatpush1.msra.mxu0 %v1052
  %2160 = vmatprep.subr.mxu0 %v1055
  %2161 = vmatpush1.msra.mxu0 %v1054
  %2162 = vmatprep.subr.mxu0 %v1057
  %2163 = vmatpush1.msra.mxu0 %v1056
  %2164 = vmatprep.subr.mxu0 %v1059
  %2165 = vmatpush1.msra.mxu0 %v1058
  %2166 = vmatprep.subr.mxu0 %v1061
  %2167 = vmatpush1.msra.mxu0 %v1060
  %2168 = vmatprep.subr.mxu0 %v1063
  %2169 = vmatpush1.msra.mxu0 %v1062
  %2170 = vmatprep.subr.mxu0 %v1065
  %2171 = vmatpush1.msra.mxu0 %v1064
  %2172 = vmatprep.subr.mxu0 %v1067
  %2173 = vmatpush1.msra.mxu0 %v1066
  %2174 = vmatprep.subr.mxu0 %v1069
  %2175 = vmatpush1.msra.mxu0 %v1068
  %2176 = vmatprep.subr.mxu0 %v1071
  %2177 = vmatpush1.msra.mxu0 %v1070
  %2178 = vmatprep.subr.mxu0 %v1073
  %2179 = vmatpush1.msra.mxu0 %v1072
  %2180 = vmatprep.subr.mxu0 %v1075
  %2181 = vmatpush1.msra.mxu0 %v1074
  %2182 = vmatprep.subr.mxu0 %v1077
  %2183 = vmatpush1.msra.mxu0 %v1076
  %2184 = vmatprep.subr.mxu0 %v1079
  %2185 = vmatpush1.msra.mxu0 %v1078
  %2186 = vmatprep.subr.mxu0 %v1081
  %2187 = vmatpush1.msra.mxu0 %v1080
  %2188 = vmatprep.subr.mxu0 %v1083
  %2189 = vmatpush1.msra.mxu0 %v1082
  %2190 = vmatprep.subr.mxu0 %v1085
  %2191 = vmatpush1.msra.mxu0 %v1084
  %2192 = vmatprep.subr.mxu0 %v1087
  %2193 = vmatpush1.msra.mxu0 %v1086
  %2194 = vmatprep.subr.mxu0 %v1089
  %2195 = vmatpush1.msra.mxu0 %v1088
  %2196 = vmatprep.subr.mxu0 %v1091
  %2197 = vmatpush1.msra.mxu0 %v1090
  %2198 = vmatprep.subr.mxu0 %v1093
  %2199 = vmatpush1.msra.mxu0 %v1092
  %2200 = vmatprep.subr.mxu0 0.0
  %2201 = vmatpush1.msra.mxu0 0.0
  %2202 = vmatprep.subr.mxu0 0.0
  %2203 = vmatpush1.msra.mxu0 0.0
  %2204 = vmatprep.subr.mxu0 0.0
  %2205 = vmatpush1.msra.mxu0 0.0
  %2206 = vmatprep.subr.mxu0 0.0
  %2207 = vmatpush1.msra.mxu0 0.0
  %2208 = vmatprep.subr.mxu0 0.0
  %2209 = vmatpush1.msra.mxu0 0.0
  %2210 = vmatprep.mubr.f32.mxu0 %v2138
  %2211 = vmatmul.mubr.f32.gmra.mrb[0].mxu0 %v1862
  %v2212 = vpop.f32.mrb[0].mxu0
  %v2213 = vadd.f32 0.0, %v2212
  %v2214 = vpop.f32.mrb[0].mxu0
  %v2215 = vadd.f32 0.0, %v2214
  %2216 = vmatprep.mubr.f32.mxu0 %v2141
  %2217 = vmatmul.mubr.f32.gmra.mrb[0].mxu0 %v1864
  %v2218 = vpop.f32.mrb[0].mxu0
  %v2219 = vadd.f32 0.0, %v2218
  %v2220 = vpop.f32.mrb[0].mxu0
  %v2221 = vadd.f32 0.0, %v2220
  %2222 = vmatprep.mubr.f32.mxu0 %v2144
  %2223 = vmatmul.mubr.f32.gmra.mrb[0].mxu0 %v1866
  %v2224 = vpop.f32.mrb[0].mxu0
  %v2225 = vadd.f32 0.0, %v2224
  %v2226 = vpop.f32.mrb[0].mxu0
  %v2227 = vadd.f32 0.0, %v2226
  %2228 = vdwg.mxu0
  %v2230 = vsel %vm1952, %v1869, 0
  %v2233 = vsel %vm1952, %v1871, 0
  %v2236 = vsel %vm1952, %v1873, 0
  %2238 = vmatprep.subr.mxu0 %v1095
  %2239 = vmatpush1.msra.mxu0 %v1094
  %2240 = vmatprep.subr.mxu0 %v1097
  %2241 = vmatpush1.msra.mxu0 %v1096
  %2242 = vmatprep.subr.mxu0 %v1099
  %2243 = vmatpush1.msra.mxu0 %v1098
  %2244 = vmatprep.subr.mxu0 %v1101
  %2245 = vmatpush1.msra.mxu0 %v1100
  %2246 = vmatprep.subr.mxu0 %v1103
  %2247 = vmatpush1.msra.mxu0 %v1102
  %2248 = vmatprep.subr.mxu0 %v1105
  %2249 = vmatpush1.msra.mxu0 %v1104
  %2250 = vmatprep.subr.mxu0 %v1107
  %2251 = vmatpush1.msra.mxu0 %v1106
  %2252 = vmatprep.subr.mxu0 %v1109
  %2253 = vmatpush1.msra.mxu0 %v1108
  %2254 = vmatprep.subr.mxu0 %v1111
  %2255 = vmatpush1.msra.mxu0 %v1110
  %2256 = vmatprep.subr.mxu0 %v1113
  %2257 = vmatpush1.msra.mxu0 %v1112
  %2258 = vmatprep.subr.mxu0 %v1115
  %2259 = vmatpush1.msra.mxu0 %v1114
  %2260 = vmatprep.subr.mxu0 %v1117
  %2261 = vmatpush1.msra.mxu0 %v1116
  %2262 = vmatprep.subr.mxu0 %v1119
  %2263 = vmatpush1.msra.mxu0 %v1118
  %2264 = vmatprep.subr.mxu0 %v1121
  %2265 = vmatpush1.msra.mxu0 %v1120
  %2266 = vmatprep.subr.mxu0 %v1123
  %2267 = vmatpush1.msra.mxu0 %v1122
  %2268 = vmatprep.subr.mxu0 %v1125
  %2269 = vmatpush1.msra.mxu0 %v1124
  %2270 = vmatprep.subr.mxu0 %v1127
  %2271 = vmatpush1.msra.mxu0 %v1126
  %2272 = vmatprep.subr.mxu0 %v1129
  %2273 = vmatpush1.msra.mxu0 %v1128
  %2274 = vmatprep.subr.mxu0 %v1131
  %2275 = vmatpush1.msra.mxu0 %v1130
  %2276 = vmatprep.subr.mxu0 %v1133
  %2277 = vmatpush1.msra.mxu0 %v1132
  %2278 = vmatprep.subr.mxu0 %v1135
  %2279 = vmatpush1.msra.mxu0 %v1134
  %2280 = vmatprep.subr.mxu0 %v1137
  %2281 = vmatpush1.msra.mxu0 %v1136
  %2282 = vmatprep.subr.mxu0 %v1139
  %2283 = vmatpush1.msra.mxu0 %v1138
  %2284 = vmatprep.subr.mxu0 %v1141
  %2285 = vmatpush1.msra.mxu0 %v1140
  %2286 = vmatprep.subr.mxu0 %v1143
  %2287 = vmatpush1.msra.mxu0 %v1142
  %2288 = vmatprep.subr.mxu0 %v1145
  %2289 = vmatpush1.msra.mxu0 %v1144
  %2290 = vmatprep.subr.mxu0 %v1147
  %2291 = vmatpush1.msra.mxu0 %v1146
  %2292 = vmatprep.subr.mxu0 0.0
  %2293 = vmatpush1.msra.mxu0 0.0
  %2294 = vmatprep.subr.mxu0 0.0
  %2295 = vmatpush1.msra.mxu0 0.0
  %2296 = vmatprep.subr.mxu0 0.0
  %2297 = vmatpush1.msra.mxu0 0.0
  %2298 = vmatprep.subr.mxu0 0.0
  %2299 = vmatpush1.msra.mxu0 0.0
  %2300 = vmatprep.subr.mxu0 0.0
  %2301 = vmatpush1.msra.mxu0 0.0
  %2302 = vmatprep.mubr.f32.mxu0 %v2230
  %2303 = vmatmul.mubr.f32.gmra.mrb[0].mxu0 %v1868
  %v2304 = vpop.f32.mrb[0].mxu0
  %v2305 = vadd.f32 0.0, %v2304
  %v2306 = vpop.f32.mrb[0].mxu0
  %v2307 = vadd.f32 0.0, %v2306
  %2308 = vmatprep.mubr.f32.mxu0 %v2233
  %2309 = vmatmul.mubr.f32.gmra.mrb[0].mxu0 %v1870
  %v2310 = vpop.f32.mrb[0].mxu0
  %v2311 = vadd.f32 0.0, %v2310
  %v2312 = vpop.f32.mrb[0].mxu0
  %v2313 = vadd.f32 0.0, %v2312
  %2314 = vmatprep.mubr.f32.mxu0 %v2236
  %2315 = vmatmul.mubr.f32.gmra.mrb[0].mxu0 %v1872
  %v2316 = vpop.f32.mrb[0].mxu0
  %v2317 = vadd.f32 0.0, %v2316
  %v2318 = vpop.f32.mrb[0].mxu0
  %v2319 = vadd.f32 0.0, %v2318
  %2320 = vdwg.mxu0
  %v2322 = vsel %vm1952, %v1875, 0
  %v2325 = vsel %vm1952, %v1877, 0
  %v2328 = vsel %vm1952, %v1879, 0
  %2330 = vmatprep.subr.mxu0 %v1149
  %2331 = vmatpush1.msra.mxu0 %v1148
  %2332 = vmatprep.subr.mxu0 %v1151
  %2333 = vmatpush1.msra.mxu0 %v1150
  %2334 = vmatprep.subr.mxu0 %v1153
  %2335 = vmatpush1.msra.mxu0 %v1152
  %2336 = vmatprep.subr.mxu0 %v1155
  %2337 = vmatpush1.msra.mxu0 %v1154
  %2338 = vmatprep.subr.mxu0 %v1157
  %2339 = vmatpush1.msra.mxu0 %v1156
  %2340 = vmatprep.subr.mxu0 %v1159
  %2341 = vmatpush1.msra.mxu0 %v1158
  %2342 = vmatprep.subr.mxu0 %v1161
  %2343 = vmatpush1.msra.mxu0 %v1160
  %2344 = vmatprep.subr.mxu0 %v1163
  %2345 = vmatpush1.msra.mxu0 %v1162
  %2346 = vmatprep.subr.mxu0 %v1165
  %2347 = vmatpush1.msra.mxu0 %v1164
  %2348 = vmatprep.subr.mxu0 %v1167
  %2349 = vmatpush1.msra.mxu0 %v1166
  %2350 = vmatprep.subr.mxu0 %v1169
  %2351 = vmatpush1.msra.mxu0 %v1168
  %2352 = vmatprep.subr.mxu0 %v1171
  %2353 = vmatpush1.msra.mxu0 %v1170
  %2354 = vmatprep.subr.mxu0 %v1173
  %2355 = vmatpush1.msra.mxu0 %v1172
  %2356 = vmatprep.subr.mxu0 %v1175
  %2357 = vmatpush1.msra.mxu0 %v1174
  %2358 = vmatprep.subr.mxu0 %v1177
  %2359 = vmatpush1.msra.mxu0 %v1176
  %2360 = vmatprep.subr.mxu0 %v1179
  %2361 = vmatpush1.msra.mxu0 %v1178
  %2362 = vmatprep.subr.mxu0 %v1181
  %2363 = vmatpush1.msra.mxu0 %v1180
  %2364 = vmatprep.subr.mxu0 %v1183
  %2365 = vmatpush1.msra.mxu0 %v1182
  %2366 = vmatprep.subr.mxu0 %v1185
  %2367 = vmatpush1.msra.mxu0 %v1184
  %2368 = vmatprep.subr.mxu0 %v1187
  %2369 = vmatpush1.msra.mxu0 %v1186
  %2370 = vmatprep.subr.mxu0 %v1189
  %2371 = vmatpush1.msra.mxu0 %v1188
  %2372 = vmatprep.subr.mxu0 %v1191
  %2373 = vmatpush1.msra.mxu0 %v1190
  %2374 = vmatprep.subr.mxu0 %v1193
  %2375 = vmatpush1.msra.mxu0 %v1192
  %2376 = vmatprep.subr.mxu0 %v1195
  %2377 = vmatpush1.msra.mxu0 %v1194
  %2378 = vmatprep.subr.mxu0 %v1197
  %2379 = vmatpush1.msra.mxu0 %v1196
  %2380 = vmatprep.subr.mxu0 %v1199
  %2381 = vmatpush1.msra.mxu0 %v1198
  %2382 = vmatprep.subr.mxu0 %v1201
  %2383 = vmatpush1.msra.mxu0 %v1200
  %2384 = vmatprep.subr.mxu0 0.0
  %2385 = vmatpush1.msra.mxu0 0.0
  %2386 = vmatprep.subr.mxu0 0.0
  %2387 = vmatpush1.msra.mxu0 0.0
  %2388 = vmatprep.subr.mxu0 0.0
  %2389 = vmatpush1.msra.mxu0 0.0
  %2390 = vmatprep.subr.mxu0 0.0
  %2391 = vmatpush1.msra.mxu0 0.0
  %2392 = vmatprep.subr.mxu0 0.0
  %2393 = vmatpush1.msra.mxu0 0.0
  %2394 = vmatprep.mubr.f32.mxu0 %v2322
  %2395 = vmatmul.mubr.f32.gmra.mrb[0].mxu0 %v1874
  %v2396 = vpop.f32.mrb[0].mxu0
  %v2397 = vadd.f32 0.0, %v2396
  %v2398 = vpop.f32.mrb[0].mxu0
  %v2399 = vadd.f32 0.0, %v2398
  %2400 = vmatprep.mubr.f32.mxu0 %v2325
  %2401 = vmatmul.mubr.f32.gmra.mrb[0].mxu0 %v1876
  %v2402 = vpop.f32.mrb[0].mxu0
  %v2403 = vadd.f32 0.0, %v2402
  %v2404 = vpop.f32.mrb[0].mxu0
  %v2405 = vadd.f32 0.0, %v2404
  %2406 = vmatprep.mubr.f32.mxu0 %v2328
  %2407 = vmatmul.mubr.f32.gmra.mrb[0].mxu0 %v1878
  %v2408 = vpop.f32.mrb[0].mxu0
  %v2409 = vadd.f32 0.0, %v2408
  %v2410 = vpop.f32.mrb[0].mxu0
  %v2411 = vadd.f32 0.0, %v2410
  %2412 = vdwg.mxu0
  %v2414 = vsel %vm1952, %v1881, 0
  %v2417 = vsel %vm1952, %v1883, 0
  %v2420 = vsel %vm1952, %v1885, 0
  %2422 = vmatprep.subr.mxu0 %v1203
  %2423 = vmatpush1.msra.mxu0 %v1202
  %2424 = vmatprep.subr.mxu0 %v1205
  %2425 = vmatpush1.msra.mxu0 %v1204
  %2426 = vmatprep.subr.mxu0 %v1207
  %2427 = vmatpush1.msra.mxu0 %v1206
  %2428 = vmatprep.subr.mxu0 %v1209
  %2429 = vmatpush1.msra.mxu0 %v1208
  %2430 = vmatprep.subr.mxu0 %v1211
  %2431 = vmatpush1.msra.mxu0 %v1210
  %2432 = vmatprep.subr.mxu0 %v1213
  %2433 = vmatpush1.msra.mxu0 %v1212
  %2434 = vmatprep.subr.mxu0 %v1215
  %2435 = vmatpush1.msra.mxu0 %v1214
  %2436 = vmatprep.subr.mxu0 %v1217
  %2437 = vmatpush1.msra.mxu0 %v1216
  %2438 = vmatprep.subr.mxu0 %v1219
  %2439 = vmatpush1.msra.mxu0 %v1218
  %2440 = vmatprep.subr.mxu0 %v1221
  %2441 = vmatpush1.msra.mxu0 %v1220
  %2442 = vmatprep.subr.mxu0 %v1223
  %2443 = vmatpush1.msra.mxu0 %v1222
  %2444 = vmatprep.subr.mxu0 %v1225
  %2445 = vmatpush1.msra.mxu0 %v1224
  %2446 = vmatprep.subr.mxu0 %v1227
  %2447 = vmatpush1.msra.mxu0 %v1226
  %2448 = vmatprep.subr.mxu0 %v1229
  %2449 = vmatpush1.msra.mxu0 %v1228
  %2450 = vmatprep.subr.mxu0 %v1231
  %2451 = vmatpush1.msra.mxu0 %v1230
  %2452 = vmatprep.subr.mxu0 %v1233
  %2453 = vmatpush1.msra.mxu0 %v1232
  %2454 = vmatprep.subr.mxu0 %v1235
  %2455 = vmatpush1.msra.mxu0 %v1234
  %2456 = vmatprep.subr.mxu0 %v1237
  %2457 = vmatpush1.msra.mxu0 %v1236
  %2458 = vmatprep.subr.mxu0 %v1239
  %2459 = vmatpush1.msra.mxu0 %v1238
  %2460 = vmatprep.subr.mxu0 %v1241
  %2461 = vmatpush1.msra.mxu0 %v1240
  %2462 = vmatprep.subr.mxu0 %v1243
  %2463 = vmatpush1.msra.mxu0 %v1242
  %2464 = vmatprep.subr.mxu0 %v1245
  %2465 = vmatpush1.msra.mxu0 %v1244
  %2466 = vmatprep.subr.mxu0 %v1247
  %2467 = vmatpush1.msra.mxu0 %v1246
  %2468 = vmatprep.subr.mxu0 %v1249
  %2469 = vmatpush1.msra.mxu0 %v1248
  %2470 = vmatprep.subr.mxu0 %v1251
  %2471 = vmatpush1.msra.mxu0 %v1250
  %2472 = vmatprep.subr.mxu0 %v1253
  %2473 = vmatpush1.msra.mxu0 %v1252
  %2474 = vmatprep.subr.mxu0 %v1255
  %2475 = vmatpush1.msra.mxu0 %v1254
  %2476 = vmatprep.subr.mxu0 0.0
  %2477 = vmatpush1.msra.mxu0 0.0
  %2478 = vmatprep.subr.mxu0 0.0
  %2479 = vmatpush1.msra.mxu0 0.0
  %2480 = vmatprep.subr.mxu0 0.0
  %2481 = vmatpush1.msra.mxu0 0.0
  %2482 = vmatprep.subr.mxu0 0.0
  %2483 = vmatpush1.msra.mxu0 0.0
  %2484 = vmatprep.subr.mxu0 0.0
  %2485 = vmatpush1.msra.mxu0 0.0
  %2486 = vmatprep.mubr.f32.mxu0 %v2414
  %2487 = vmatmul.mubr.f32.gmra.mrb[0].mxu0 %v1880
  %v2488 = vpop.f32.mrb[0].mxu0
  %v2489 = vadd.f32 0.0, %v2488
  %v2490 = vpop.f32.mrb[0].mxu0
  %v2491 = vadd.f32 0.0, %v2490
  %2492 = vmatprep.mubr.f32.mxu0 %v2417
  %2493 = vmatmul.mubr.f32.gmra.mrb[0].mxu0 %v1882
  %v2494 = vpop.f32.mrb[0].mxu0
  %v2495 = vadd.f32 0.0, %v2494
  %v2496 = vpop.f32.mrb[0].mxu0
  %v2497 = vadd.f32 0.0, %v2496
  %2498 = vmatprep.mubr.f32.mxu0 %v2420
  %2499 = vmatmul.mubr.f32.gmra.mrb[0].mxu0 %v1884
  %v2500 = vpop.f32.mrb[0].mxu0
  %v2501 = vadd.f32 0.0, %v2500
  %v2502 = vpop.f32.mrb[0].mxu0
  %v2503 = vadd.f32 0.0, %v2502
  %2504 = vdwg.mxu0
  %v2506 = vsel %vm1952, %v1887, 0
  %v2509 = vsel %vm1952, %v1889, 0
  %v2512 = vsel %vm1952, %v1891, 0
  %2514 = vmatprep.subr.mxu0 %v1257
  %2515 = vmatpush1.msra.mxu0 %v1256
  %2516 = vmatprep.subr.mxu0 %v1259
  %2517 = vmatpush1.msra.mxu0 %v1258
  %2518 = vmatprep.subr.mxu0 %v1261
  %2519 = vmatpush1.msra.mxu0 %v1260
  %2520 = vmatprep.subr.mxu0 %v1263
  %2521 = vmatpush1.msra.mxu0 %v1262
  %2522 = vmatprep.subr.mxu0 %v1265
  %2523 = vmatpush1.msra.mxu0 %v1264
  %2524 = vmatprep.subr.mxu0 %v1267
  %2525 = vmatpush1.msra.mxu0 %v1266
  %2526 = vmatprep.subr.mxu0 %v1269
  %2527 = vmatpush1.msra.mxu0 %v1268
  %2528 = vmatprep.subr.mxu0 %v1271
  %2529 = vmatpush1.msra.mxu0 %v1270
  %2530 = vmatprep.subr.mxu0 %v1273
  %2531 = vmatpush1.msra.mxu0 %v1272
  %2532 = vmatprep.subr.mxu0 %v1275
  %2533 = vmatpush1.msra.mxu0 %v1274
  %2534 = vmatprep.subr.mxu0 %v1277
  %2535 = vmatpush1.msra.mxu0 %v1276
  %2536 = vmatprep.subr.mxu0 %v1279
  %2537 = vmatpush1.msra.mxu0 %v1278
  %2538 = vmatprep.subr.mxu0 %v1281
  %2539 = vmatpush1.msra.mxu0 %v1280
  %2540 = vmatprep.subr.mxu0 %v1283
  %2541 = vmatpush1.msra.mxu0 %v1282
  %2542 = vmatprep.subr.mxu0 %v1285
  %2543 = vmatpush1.msra.mxu0 %v1284
  %2544 = vmatprep.subr.mxu0 %v1287
  %2545 = vmatpush1.msra.mxu0 %v1286
  %2546 = vmatprep.subr.mxu0 %v1289
  %2547 = vmatpush1.msra.mxu0 %v1288
  %2548 = vmatprep.subr.mxu0 %v1291
  %2549 = vmatpush1.msra.mxu0 %v1290
  %2550 = vmatprep.subr.mxu0 %v1293
  %2551 = vmatpush1.msra.mxu0 %v1292
  %2552 = vmatprep.subr.mxu0 %v1295
  %2553 = vmatpush1.msra.mxu0 %v1294
  %2554 = vmatprep.subr.mxu0 %v1297
  %2555 = vmatpush1.msra.mxu0 %v1296
  %2556 = vmatprep.subr.mxu0 %v1299
  %2557 = vmatpush1.msra.mxu0 %v1298
  %2558 = vmatprep.subr.mxu0 %v1301
  %2559 = vmatpush1.msra.mxu0 %v1300
  %2560 = vmatprep.subr.mxu0 %v1303
  %2561 = vmatpush1.msra.mxu0 %v1302
  %2562 = vmatprep.subr.mxu0 %v1305
  %2563 = vmatpush1.msra.mxu0 %v1304
  %2564 = vmatprep.subr.mxu0 %v1307
  %2565 = vmatpush1.msra.mxu0 %v1306
  %2566 = vmatprep.subr.mxu0 %v1309
  %2567 = vmatpush1.msra.mxu0 %v1308
  %2568 = vmatprep.subr.mxu0 0.0
  %2569 = vmatpush1.msra.mxu0 0.0
  %2570 = vmatprep.subr.mxu0 0.0
  %2571 = vmatpush1.msra.mxu0 0.0
  %2572 = vmatprep.subr.mxu0 0.0
  %2573 = vmatpush1.msra.mxu0 0.0
  %2574 = vmatprep.subr.mxu0 0.0
  %2575 = vmatpush1.msra.mxu0 0.0
  %2576 = vmatprep.subr.mxu0 0.0
  %2577 = vmatpush1.msra.mxu0 0.0
  %2578 = vmatprep.mubr.f32.mxu0 %v2506
  %2579 = vmatmul.mubr.f32.gmra.mrb[0].mxu0 %v1886
  %v2580 = vpop.f32.mrb[0].mxu0
  %v2581 = vadd.f32 0.0, %v2580
  %v2582 = vpop.f32.mrb[0].mxu0
  %v2583 = vadd.f32 0.0, %v2582
  %2584 = vmatprep.mubr.f32.mxu0 %v2509
  %2585 = vmatmul.mubr.f32.gmra.mrb[0].mxu0 %v1888
  %v2586 = vpop.f32.mrb[0].mxu0
  %v2587 = vadd.f32 0.0, %v2586
  %v2588 = vpop.f32.mrb[0].mxu0
  %v2589 = vadd.f32 0.0, %v2588
  %2590 = vmatprep.mubr.f32.mxu0 %v2512
  %2591 = vmatmul.mubr.f32.gmra.mrb[0].mxu0 %v1890
  %v2592 = vpop.f32.mrb[0].mxu0
  %v2593 = vadd.f32 0.0, %v2592
  %v2594 = vpop.f32.mrb[0].mxu0
  %v2595 = vadd.f32 0.0, %v2594
  %2596 = vdwg.mxu0
  %v2598 = vsel %vm1952, %v1893, 0
  %v2601 = vsel %vm1952, %v1895, 0
  %v2604 = vsel %vm1952, %v1897, 0
  %2606 = vmatprep.subr.mxu0 %v1311
  %2607 = vmatpush1.msra.mxu0 %v1310
  %2608 = vmatprep.subr.mxu0 %v1313
  %2609 = vmatpush1.msra.mxu0 %v1312
  %2610 = vmatprep.subr.mxu0 %v1315
  %2611 = vmatpush1.msra.mxu0 %v1314
  %2612 = vmatprep.subr.mxu0 %v1317
  %2613 = vmatpush1.msra.mxu0 %v1316
  %2614 = vmatprep.subr.mxu0 %v1319
  %2615 = vmatpush1.msra.mxu0 %v1318
  %2616 = vmatprep.subr.mxu0 %v1321
  %2617 = vmatpush1.msra.mxu0 %v1320
  %2618 = vmatprep.subr.mxu0 %v1323
  %2619 = vmatpush1.msra.mxu0 %v1322
  %2620 = vmatprep.subr.mxu0 %v1325
  %2621 = vmatpush1.msra.mxu0 %v1324
  %2622 = vmatprep.subr.mxu0 %v1327
  %2623 = vmatpush1.msra.mxu0 %v1326
  %2624 = vmatprep.subr.mxu0 %v1329
  %2625 = vmatpush1.msra.mxu0 %v1328
  %2626 = vmatprep.subr.mxu0 %v1331
  %2627 = vmatpush1.msra.mxu0 %v1330
  %2628 = vmatprep.subr.mxu0 %v1333
  %2629 = vmatpush1.msra.mxu0 %v1332
  %2630 = vmatprep.subr.mxu0 %v1335
  %2631 = vmatpush1.msra.mxu0 %v1334
  %2632 = vmatprep.subr.mxu0 %v1337
  %2633 = vmatpush1.msra.mxu0 %v1336
  %2634 = vmatprep.subr.mxu0 %v1339
  %2635 = vmatpush1.msra.mxu0 %v1338
  %2636 = vmatprep.subr.mxu0 %v1341
  %2637 = vmatpush1.msra.mxu0 %v1340
  %2638 = vmatprep.subr.mxu0 %v1343
  %2639 = vmatpush1.msra.mxu0 %v1342
  %2640 = vmatprep.subr.mxu0 %v1345
  %2641 = vmatpush1.msra.mxu0 %v1344
  %2642 = vmatprep.subr.mxu0 %v1347
  %2643 = vmatpush1.msra.mxu0 %v1346
  %2644 = vmatprep.subr.mxu0 %v1349
  %2645 = vmatpush1.msra.mxu0 %v1348
  %2646 = vmatprep.subr.mxu0 %v1351
  %2647 = vmatpush1.msra.mxu0 %v1350
  %2648 = vmatprep.subr.mxu0 %v1353
  %2649 = vmatpush1.msra.mxu0 %v1352
  %2650 = vmatprep.subr.mxu0 %v1355
  %2651 = vmatpush1.msra.mxu0 %v1354
  %2652 = vmatprep.subr.mxu0 %v1357
  %2653 = vmatpush1.msra.mxu0 %v1356
  %2654 = vmatprep.subr.mxu0 %v1359
  %2655 = vmatpush1.msra.mxu0 %v1358
  %2656 = vmatprep.subr.mxu0 %v1361
  %2657 = vmatpush1.msra.mxu0 %v1360
  %2658 = vmatprep.subr.mxu0 %v1363
  %2659 = vmatpush1.msra.mxu0 %v1362
  %2660 = vmatprep.subr.mxu0 0.0
  %2661 = vmatpush1.msra.mxu0 0.0
  %2662 = vmatprep.subr.mxu0 0.0
  %2663 = vmatpush1.msra.mxu0 0.0
  %2664 = vmatprep.subr.mxu0 0.0
  %2665 = vmatpush1.msra.mxu0 0.0
  %2666 = vmatprep.subr.mxu0 0.0
  %2667 = vmatpush1.msra.mxu0 0.0
  %2668 = vmatprep.subr.mxu0 0.0
  %2669 = vmatpush1.msra.mxu0 0.0
  %2670 = vmatprep.mubr.f32.mxu0 %v2598
  %2671 = vmatmul.mubr.f32.gmra.mrb[0].mxu0 %v1892
  %v2672 = vpop.f32.mrb[0].mxu0
  %v2673 = vadd.f32 0.0, %v2672
  %v2674 = vpop.f32.mrb[0].mxu0
  %v2675 = vadd.f32 0.0, %v2674
  %2676 = vmatprep.mubr.f32.mxu0 %v2601
  %2677 = vmatmul.mubr.f32.gmra.mrb[0].mxu0 %v1894
  %v2678 = vpop.f32.mrb[0].mxu0
  %v2679 = vadd.f32 0.0, %v2678
  %v2680 = vpop.f32.mrb[0].mxu0
  %v2681 = vadd.f32 0.0, %v2680
  %2682 = vmatprep.mubr.f32.mxu0 %v2604
  %2683 = vmatmul.mubr.f32.gmra.mrb[0].mxu0 %v1896
  %v2684 = vpop.f32.mrb[0].mxu0
  %v2685 = vadd.f32 0.0, %v2684
  %v2686 = vpop.f32.mrb[0].mxu0
  %v2687 = vadd.f32 0.0, %v2686
  %2688 = vdwg.mxu0
  %v2690 = vsel %vm1952, %v1899, 0
  %v2693 = vsel %vm1952, %v1901, 0
  %v2696 = vsel %vm1952, %v1903, 0
  %2698 = vmatprep.subr.mxu0 %v1365
  %2699 = vmatpush1.msra.mxu0 %v1364
  %2700 = vmatprep.subr.mxu0 %v1367
  %2701 = vmatpush1.msra.mxu0 %v1366
  %2702 = vmatprep.subr.mxu0 %v1369
  %2703 = vmatpush1.msra.mxu0 %v1368
  %2704 = vmatprep.subr.mxu0 %v1371
  %2705 = vmatpush1.msra.mxu0 %v1370
  %2706 = vmatprep.subr.mxu0 %v1373
  %2707 = vmatpush1.msra.mxu0 %v1372
  %2708 = vmatprep.subr.mxu0 %v1375
  %2709 = vmatpush1.msra.mxu0 %v1374
  %2710 = vmatprep.subr.mxu0 %v1377
  %2711 = vmatpush1.msra.mxu0 %v1376
  %2712 = vmatprep.subr.mxu0 %v1379
  %2713 = vmatpush1.msra.mxu0 %v1378
  %2714 = vmatprep.subr.mxu0 %v1381
  %2715 = vmatpush1.msra.mxu0 %v1380
  %2716 = vmatprep.subr.mxu0 %v1383
  %2717 = vmatpush1.msra.mxu0 %v1382
  %2718 = vmatprep.subr.mxu0 %v1385
  %2719 = vmatpush1.msra.mxu0 %v1384
  %2720 = vmatprep.subr.mxu0 %v1387
  %2721 = vmatpush1.msra.mxu0 %v1386
  %2722 = vmatprep.subr.mxu0 %v1389
  %2723 = vmatpush1.msra.mxu0 %v1388
  %2724 = vmatprep.subr.mxu0 %v1391
  %2725 = vmatpush1.msra.mxu0 %v1390
  %2726 = vmatprep.subr.mxu0 %v1393
  %2727 = vmatpush1.msra.mxu0 %v1392
  %2728 = vmatprep.subr.mxu0 %v1395
  %2729 = vmatpush1.msra.mxu0 %v1394
  %2730 = vmatprep.subr.mxu0 %v1397
  %2731 = vmatpush1.msra.mxu0 %v1396
  %2732 = vmatprep.subr.mxu0 %v1399
  %2733 = vmatpush1.msra.mxu0 %v1398
  %2734 = vmatprep.subr.mxu0 %v1401
  %2735 = vmatpush1.msra.mxu0 %v1400
  %2736 = vmatprep.subr.mxu0 %v1403
  %2737 = vmatpush1.msra.mxu0 %v1402
  %2738 = vmatprep.subr.mxu0 %v1405
  %2739 = vmatpush1.msra.mxu0 %v1404
  %2740 = vmatprep.subr.mxu0 %v1407
  %2741 = vmatpush1.msra.mxu0 %v1406
  %2742 = vmatprep.subr.mxu0 %v1409
  %2743 = vmatpush1.msra.mxu0 %v1408
  %2744 = vmatprep.subr.mxu0 %v1411
  %2745 = vmatpush1.msra.mxu0 %v1410
  %2746 = vmatprep.subr.mxu0 %v1413
  %2747 = vmatpush1.msra.mxu0 %v1412
  %2748 = vmatprep.subr.mxu0 %v1415
  %2749 = vmatpush1.msra.mxu0 %v1414
  %2750 = vmatprep.subr.mxu0 %v1417
  %2751 = vmatpush1.msra.mxu0 %v1416
  %2752 = vmatprep.subr.mxu0 0.0
  %2753 = vmatpush1.msra.mxu0 0.0
  %2754 = vmatprep.subr.mxu0 0.0
  %2755 = vmatpush1.msra.mxu0 0.0
  %2756 = vmatprep.subr.mxu0 0.0
  %2757 = vmatpush1.msra.mxu0 0.0
  %2758 = vmatprep.subr.mxu0 0.0
  %2759 = vmatpush1.msra.mxu0 0.0
  %2760 = vmatprep.subr.mxu0 0.0
  %2761 = vmatpush1.msra.mxu0 0.0
  %2762 = vmatprep.mubr.f32.mxu0 %v2690
  %2763 = vmatmul.mubr.f32.gmra.mrb[0].mxu0 %v1898
  %v2764 = vpop.f32.mrb[0].mxu0
  %v2765 = vadd.f32 0.0, %v2764
  %v2766 = vpop.f32.mrb[0].mxu0
  %v2767 = vadd.f32 0.0, %v2766
  %2768 = vmatprep.mubr.f32.mxu0 %v2693
  %2769 = vmatmul.mubr.f32.gmra.mrb[0].mxu0 %v1900
  %v2770 = vpop.f32.mrb[0].mxu0
  %v2771 = vadd.f32 0.0, %v2770
  %v2772 = vpop.f32.mrb[0].mxu0
  %v2773 = vadd.f32 0.0, %v2772
  %2774 = vmatprep.mubr.f32.mxu0 %v2696
  %2775 = vmatmul.mubr.f32.gmra.mrb[0].mxu0 %v1902
  %v2776 = vpop.f32.mrb[0].mxu0
  %v2777 = vadd.f32 0.0, %v2776
  %v2778 = vpop.f32.mrb[0].mxu0
  %v2779 = vadd.f32 0.0, %v2778
  %2780 = vdwg.mxu0
  %v2782 = vsel %vm1952, %v1905, 0
  %v2785 = vsel %vm1952, %v1907, 0
  %v2788 = vsel %vm1952, %v1909, 0
  %2790 = vmatprep.subr.mxu0 %v1419
  %2791 = vmatpush1.msra.mxu0 %v1418
  %2792 = vmatprep.subr.mxu0 %v1421
  %2793 = vmatpush1.msra.mxu0 %v1420
  %2794 = vmatprep.subr.mxu0 %v1423
  %2795 = vmatpush1.msra.mxu0 %v1422
  %2796 = vmatprep.subr.mxu0 %v1425
  %2797 = vmatpush1.msra.mxu0 %v1424
  %2798 = vmatprep.subr.mxu0 %v1427
  %2799 = vmatpush1.msra.mxu0 %v1426
  %2800 = vmatprep.subr.mxu0 %v1429
  %2801 = vmatpush1.msra.mxu0 %v1428
  %2802 = vmatprep.subr.mxu0 %v1431
  %2803 = vmatpush1.msra.mxu0 %v1430
  %2804 = vmatprep.subr.mxu0 %v1433
  %2805 = vmatpush1.msra.mxu0 %v1432
  %2806 = vmatprep.subr.mxu0 %v1435
  %2807 = vmatpush1.msra.mxu0 %v1434
  %2808 = vmatprep.subr.mxu0 %v1437
  %2809 = vmatpush1.msra.mxu0 %v1436
  %2810 = vmatprep.subr.mxu0 %v1439
  %2811 = vmatpush1.msra.mxu0 %v1438
  %2812 = vmatprep.subr.mxu0 %v1441
  %2813 = vmatpush1.msra.mxu0 %v1440
  %2814 = vmatprep.subr.mxu0 %v1443
  %2815 = vmatpush1.msra.mxu0 %v1442
  %2816 = vmatprep.subr.mxu0 %v1445
  %2817 = vmatpush1.msra.mxu0 %v1444
  %2818 = vmatprep.subr.mxu0 %v1447
  %2819 = vmatpush1.msra.mxu0 %v1446
  %2820 = vmatprep.subr.mxu0 %v1449
  %2821 = vmatpush1.msra.mxu0 %v1448
  %2822 = vmatprep.subr.mxu0 %v1451
  %2823 = vmatpush1.msra.mxu0 %v1450
  %2824 = vmatprep.subr.mxu0 %v1453
  %2825 = vmatpush1.msra.mxu0 %v1452
  %2826 = vmatprep.subr.mxu0 %v1455
  %2827 = vmatpush1.msra.mxu0 %v1454
  %2828 = vmatprep.subr.mxu0 %v1457
  %2829 = vmatpush1.msra.mxu0 %v1456
  %2830 = vmatprep.subr.mxu0 %v1459
  %2831 = vmatpush1.msra.mxu0 %v1458
  %2832 = vmatprep.subr.mxu0 %v1461
  %2833 = vmatpush1.msra.mxu0 %v1460
  %2834 = vmatprep.subr.mxu0 %v1463
  %2835 = vmatpush1.msra.mxu0 %v1462
  %2836 = vmatprep.subr.mxu0 %v1465
  %2837 = vmatpush1.msra.mxu0 %v1464
  %2838 = vmatprep.subr.mxu0 %v1467
  %2839 = vmatpush1.msra.mxu0 %v1466
  %2840 = vmatprep.subr.mxu0 %v1469
  %2841 = vmatpush1.msra.mxu0 %v1468
  %2842 = vmatprep.subr.mxu0 %v1471
  %2843 = vmatpush1.msra.mxu0 %v1470
  %2844 = vmatprep.subr.mxu0 0.0
  %2845 = vmatpush1.msra.mxu0 0.0
  %2846 = vmatprep.subr.mxu0 0.0
  %2847 = vmatpush1.msra.mxu0 0.0
  %2848 = vmatprep.subr.mxu0 0.0
  %2849 = vmatpush1.msra.mxu0 0.0
  %2850 = vmatprep.subr.mxu0 0.0
  %2851 = vmatpush1.msra.mxu0 0.0
  %2852 = vmatprep.subr.mxu0 0.0
  %2853 = vmatpush1.msra.mxu0 0.0
  %2854 = vmatprep.mubr.f32.mxu0 %v2782
  %2855 = vmatmul.mubr.f32.gmra.mrb[0].mxu0 %v1904
  %v2856 = vpop.f32.mrb[0].mxu0
  %v2857 = vadd.f32 0.0, %v2856
  %v2858 = vpop.f32.mrb[0].mxu0
  %v2859 = vadd.f32 0.0, %v2858
  %2860 = vmatprep.mubr.f32.mxu0 %v2785
  %2861 = vmatmul.mubr.f32.gmra.mrb[0].mxu0 %v1906
  %v2862 = vpop.f32.mrb[0].mxu0
  %v2863 = vadd.f32 0.0, %v2862
  %v2864 = vpop.f32.mrb[0].mxu0
  %v2865 = vadd.f32 0.0, %v2864
  %2866 = vmatprep.mubr.f32.mxu0 %v2788
  %2867 = vmatmul.mubr.f32.gmra.mrb[0].mxu0 %v1908
  %v2868 = vpop.f32.mrb[0].mxu0
  %v2869 = vadd.f32 0.0, %v2868
  %v2870 = vpop.f32.mrb[0].mxu0
  %v2871 = vadd.f32 0.0, %v2870
  %2872 = vdwg.mxu0
  %v2874 = vsel %vm1952, %v1911, 0
  %v2877 = vsel %vm1952, %v1913, 0
  %v2880 = vsel %vm1952, %v1915, 0
  %2882 = vmatprep.subr.mxu0 %v1473
  %2883 = vmatpush1.msra.mxu0 %v1472
  %2884 = vmatprep.subr.mxu0 %v1475
  %2885 = vmatpush1.msra.mxu0 %v1474
  %2886 = vmatprep.subr.mxu0 %v1477
  %2887 = vmatpush1.msra.mxu0 %v1476
  %2888 = vmatprep.subr.mxu0 %v1479
  %2889 = vmatpush1.msra.mxu0 %v1478
  %2890 = vmatprep.subr.mxu0 %v1481
  %2891 = vmatpush1.msra.mxu0 %v1480
  %2892 = vmatprep.subr.mxu0 %v1483
  %2893 = vmatpush1.msra.mxu0 %v1482
  %2894 = vmatprep.subr.mxu0 %v1485
  %2895 = vmatpush1.msra.mxu0 %v1484
  %2896 = vmatprep.subr.mxu0 %v1487
  %2897 = vmatpush1.msra.mxu0 %v1486
  %2898 = vmatprep.subr.mxu0 %v1489
  %2899 = vmatpush1.msra.mxu0 %v1488
  %2900 = vmatprep.subr.mxu0 %v1491
  %2901 = vmatpush1.msra.mxu0 %v1490
  %2902 = vmatprep.subr.mxu0 %v1493
  %2903 = vmatpush1.msra.mxu0 %v1492
  %2904 = vmatprep.subr.mxu0 %v1495
  %2905 = vmatpush1.msra.mxu0 %v1494
  %2906 = vmatprep.subr.mxu0 %v1497
  %2907 = vmatpush1.msra.mxu0 %v1496
  %2908 = vmatprep.subr.mxu0 %v1499
  %2909 = vmatpush1.msra.mxu0 %v1498
  %2910 = vmatprep.subr.mxu0 %v1501
  %2911 = vmatpush1.msra.mxu0 %v1500
  %2912 = vmatprep.subr.mxu0 %v1503
  %2913 = vmatpush1.msra.mxu0 %v1502
  %2914 = vmatprep.subr.mxu0 %v1505
  %2915 = vmatpush1.msra.mxu0 %v1504
  %2916 = vmatprep.subr.mxu0 %v1507
  %2917 = vmatpush1.msra.mxu0 %v1506
  %2918 = vmatprep.subr.mxu0 %v1509
  %2919 = vmatpush1.msra.mxu0 %v1508
  %2920 = vmatprep.subr.mxu0 %v1511
  %2921 = vmatpush1.msra.mxu0 %v1510
  %2922 = vmatprep.subr.mxu0 %v1513
  %2923 = vmatpush1.msra.mxu0 %v1512
  %2924 = vmatprep.subr.mxu0 %v1515
  %2925 = vmatpush1.msra.mxu0 %v1514
  %2926 = vmatprep.subr.mxu0 %v1517
  %2927 = vmatpush1.msra.mxu0 %v1516
  %2928 = vmatprep.subr.mxu0 %v1519
  %2929 = vmatpush1.msra.mxu0 %v1518
  %2930 = vmatprep.subr.mxu0 %v1521
  %2931 = vmatpush1.msra.mxu0 %v1520
  %2932 = vmatprep.subr.mxu0 %v1523
  %2933 = vmatpush1.msra.mxu0 %v1522
  %2934 = vmatprep.subr.mxu0 %v1525
  %2935 = vmatpush1.msra.mxu0 %v1524
  %2936 = vmatprep.subr.mxu0 0.0
  %2937 = vmatpush1.msra.mxu0 0.0
  %2938 = vmatprep.subr.mxu0 0.0
  %2939 = vmatpush1.msra.mxu0 0.0
  %2940 = vmatprep.subr.mxu0 0.0
  %2941 = vmatpush1.msra.mxu0 0.0
  %2942 = vmatprep.subr.mxu0 0.0
  %2943 = vmatpush1.msra.mxu0 0.0
  %2944 = vmatprep.subr.mxu0 0.0
  %2945 = vmatpush1.msra.mxu0 0.0
  %2946 = vmatprep.mubr.f32.mxu0 %v2874
  %2947 = vmatmul.mubr.f32.gmra.mrb[0].mxu0 %v1910
  %v2948 = vpop.f32.mrb[0].mxu0
  %v2949 = vadd.f32 0.0, %v2948
  %v2950 = vpop.f32.mrb[0].mxu0
  %v2951 = vadd.f32 0.0, %v2950
  %2952 = vmatprep.mubr.f32.mxu0 %v2877
  %2953 = vmatmul.mubr.f32.gmra.mrb[0].mxu0 %v1912
  %v2954 = vpop.f32.mrb[0].mxu0
  %v2955 = vadd.f32 0.0, %v2954
  %v2956 = vpop.f32.mrb[0].mxu0
  %v2957 = vadd.f32 0.0, %v2956
  %2958 = vmatprep.mubr.f32.mxu0 %v2880
  %2959 = vmatmul.mubr.f32.gmra.mrb[0].mxu0 %v1914
  %v2960 = vpop.f32.mrb[0].mxu0
  %v2961 = vadd.f32 0.0, %v2960
  %v2962 = vpop.f32.mrb[0].mxu0
  %v2963 = vadd.f32 0.0, %v2962
  %2964 = vdwg.mxu0
  %v2966 = vsel %vm1952, %v1917, 0
  %v2969 = vsel %vm1952, %v1919, 0
  %v2972 = vsel %vm1952, %v1921, 0
  %2974 = vmatprep.subr.mxu0 %v1527
  %2975 = vmatpush1.msra.mxu0 %v1526
  %2976 = vmatprep.subr.mxu0 %v1529
  %2977 = vmatpush1.msra.mxu0 %v1528
  %2978 = vmatprep.subr.mxu0 %v1531
  %2979 = vmatpush1.msra.mxu0 %v1530
  %2980 = vmatprep.subr.mxu0 %v1533
  %2981 = vmatpush1.msra.mxu0 %v1532
  %2982 = vmatprep.subr.mxu0 %v1535
  %2983 = vmatpush1.msra.mxu0 %v1534
  %2984 = vmatprep.subr.mxu0 %v1537
  %2985 = vmatpush1.msra.mxu0 %v1536
  %2986 = vmatprep.subr.mxu0 %v1539
  %2987 = vmatpush1.msra.mxu0 %v1538
  %2988 = vmatprep.subr.mxu0 %v1541
  %2989 = vmatpush1.msra.mxu0 %v1540
  %2990 = vmatprep.subr.mxu0 %v1543
  %2991 = vmatpush1.msra.mxu0 %v1542
  %2992 = vmatprep.subr.mxu0 %v1545
  %2993 = vmatpush1.msra.mxu0 %v1544
  %2994 = vmatprep.subr.mxu0 %v1547
  %2995 = vmatpush1.msra.mxu0 %v1546
  %2996 = vmatprep.subr.mxu0 %v1549
  %2997 = vmatpush1.msra.mxu0 %v1548
  %2998 = vmatprep.subr.mxu0 %v1551
  %2999 = vmatpush1.msra.mxu0 %v1550
  %3000 = vmatprep.subr.mxu0 %v1553
  %3001 = vmatpush1.msra.mxu0 %v1552
  %3002 = vmatprep.subr.mxu0 %v1555
  %3003 = vmatpush1.msra.mxu0 %v1554
  %3004 = vmatprep.subr.mxu0 %v1557
  %3005 = vmatpush1.msra.mxu0 %v1556
  %3006 = vmatprep.subr.mxu0 %v1559
  %3007 = vmatpush1.msra.mxu0 %v1558
  %3008 = vmatprep.subr.mxu0 %v1561
  %3009 = vmatpush1.msra.mxu0 %v1560
  %3010 = vmatprep.subr.mxu0 %v1563
  %3011 = vmatpush1.msra.mxu0 %v1562
  %3012 = vmatprep.subr.mxu0 %v1565
  %3013 = vmatpush1.msra.mxu0 %v1564
  %3014 = vmatprep.subr.mxu0 %v1567
  %3015 = vmatpush1.msra.mxu0 %v1566
  %3016 = vmatprep.subr.mxu0 %v1569
  %3017 = vmatpush1.msra.mxu0 %v1568
  %3018 = vmatprep.subr.mxu0 %v1571
  %3019 = vmatpush1.msra.mxu0 %v1570
  %3020 = vmatprep.subr.mxu0 %v1573
  %3021 = vmatpush1.msra.mxu0 %v1572
  %3022 = vmatprep.subr.mxu0 %v1575
  %3023 = vmatpush1.msra.mxu0 %v1574
  %3024 = vmatprep.subr.mxu0 %v1577
  %3025 = vmatpush1.msra.mxu0 %v1576
  %3026 = vmatprep.subr.mxu0 %v1579
  %3027 = vmatpush1.msra.mxu0 %v1578
  %3028 = vmatprep.subr.mxu0 0.0
  %3029 = vmatpush1.msra.mxu0 0.0
  %3030 = vmatprep.subr.mxu0 0.0
  %3031 = vmatpush1.msra.mxu0 0.0
  %3032 = vmatprep.subr.mxu0 0.0
  %3033 = vmatpush1.msra.mxu0 0.0
  %3034 = vmatprep.subr.mxu0 0.0
  %3035 = vmatpush1.msra.mxu0 0.0
  %3036 = vmatprep.subr.mxu0 0.0
  %3037 = vmatpush1.msra.mxu0 0.0
  %3038 = vmatprep.mubr.f32.mxu0 %v2966
  %3039 = vmatmul.mubr.f32.gmra.mrb[0].mxu0 %v1916
  %v3040 = vpop.f32.mrb[0].mxu0
  %v3041 = vadd.f32 0.0, %v3040
  %v3042 = vpop.f32.mrb[0].mxu0
  %v3043 = vadd.f32 0.0, %v3042
  %3044 = vmatprep.mubr.f32.mxu0 %v2969
  %3045 = vmatmul.mubr.f32.gmra.mrb[0].mxu0 %v1918
  %v3046 = vpop.f32.mrb[0].mxu0
  %v3047 = vadd.f32 0.0, %v3046
  %v3048 = vpop.f32.mrb[0].mxu0
  %v3049 = vadd.f32 0.0, %v3048
  %3050 = vmatprep.mubr.f32.mxu0 %v2972
  %3051 = vmatmul.mubr.f32.gmra.mrb[0].mxu0 %v1920
  %v3052 = vpop.f32.mrb[0].mxu0
  %v3053 = vadd.f32 0.0, %v3052
  %v3054 = vpop.f32.mrb[0].mxu0
  %v3055 = vadd.f32 0.0, %v3054
  %3056 = vdwg.mxu0
  %v3058 = vsel %vm1952, %v1923, 0
  %v3061 = vsel %vm1952, %v1925, 0
  %v3064 = vsel %vm1952, %v1927, 0
  %3066 = vmatprep.subr.mxu0 %v1581
  %3067 = vmatpush1.msra.mxu0 %v1580
  %3068 = vmatprep.subr.mxu0 %v1583
  %3069 = vmatpush1.msra.mxu0 %v1582
  %3070 = vmatprep.subr.mxu0 %v1585
  %3071 = vmatpush1.msra.mxu0 %v1584
  %3072 = vmatprep.subr.mxu0 %v1587
  %3073 = vmatpush1.msra.mxu0 %v1586
  %3074 = vmatprep.subr.mxu0 %v1589
  %3075 = vmatpush1.msra.mxu0 %v1588
  %3076 = vmatprep.subr.mxu0 %v1591
  %3077 = vmatpush1.msra.mxu0 %v1590
  %3078 = vmatprep.subr.mxu0 %v1593
  %3079 = vmatpush1.msra.mxu0 %v1592
  %3080 = vmatprep.subr.mxu0 %v1595
  %3081 = vmatpush1.msra.mxu0 %v1594
  %3082 = vmatprep.subr.mxu0 %v1597
  %3083 = vmatpush1.msra.mxu0 %v1596
  %3084 = vmatprep.subr.mxu0 %v1599
  %3085 = vmatpush1.msra.mxu0 %v1598
  %3086 = vmatprep.subr.mxu0 %v1601
  %3087 = vmatpush1.msra.mxu0 %v1600
  %3088 = vmatprep.subr.mxu0 %v1603
  %3089 = vmatpush1.msra.mxu0 %v1602
  %3090 = vmatprep.subr.mxu0 %v1605
  %3091 = vmatpush1.msra.mxu0 %v1604
  %3092 = vmatprep.subr.mxu0 %v1607
  %3093 = vmatpush1.msra.mxu0 %v1606
  %3094 = vmatprep.subr.mxu0 %v1609
  %3095 = vmatpush1.msra.mxu0 %v1608
  %3096 = vmatprep.subr.mxu0 %v1611
  %3097 = vmatpush1.msra.mxu0 %v1610
  %3098 = vmatprep.subr.mxu0 %v1613
  %3099 = vmatpush1.msra.mxu0 %v1612
  %3100 = vmatprep.subr.mxu0 %v1615
  %3101 = vmatpush1.msra.mxu0 %v1614
  %3102 = vmatprep.subr.mxu0 %v1617
  %3103 = vmatpush1.msra.mxu0 %v1616
  %3104 = vmatprep.subr.mxu0 %v1619
  %3105 = vmatpush1.msra.mxu0 %v1618
  %3106 = vmatprep.subr.mxu0 %v1621
  %3107 = vmatpush1.msra.mxu0 %v1620
  %3108 = vmatprep.subr.mxu0 %v1623
  %3109 = vmatpush1.msra.mxu0 %v1622
  %3110 = vmatprep.subr.mxu0 %v1625
  %3111 = vmatpush1.msra.mxu0 %v1624
  %3112 = vmatprep.subr.mxu0 %v1627
  %3113 = vmatpush1.msra.mxu0 %v1626
  %3114 = vmatprep.subr.mxu0 %v1629
  %3115 = vmatpush1.msra.mxu0 %v1628
  %3116 = vmatprep.subr.mxu0 %v1631
  %3117 = vmatpush1.msra.mxu0 %v1630
  %3118 = vmatprep.subr.mxu0 %v1633
  %3119 = vmatpush1.msra.mxu0 %v1632
  %3120 = vmatprep.subr.mxu0 0.0
  %3121 = vmatpush1.msra.mxu0 0.0
  %3122 = vmatprep.subr.mxu0 0.0
  %3123 = vmatpush1.msra.mxu0 0.0
  %3124 = vmatprep.subr.mxu0 0.0
  %3125 = vmatpush1.msra.mxu0 0.0
  %3126 = vmatprep.subr.mxu0 0.0
  %3127 = vmatpush1.msra.mxu0 0.0
  %3128 = vmatprep.subr.mxu0 0.0
  %3129 = vmatpush1.msra.mxu0 0.0
  %3130 = vmatprep.mubr.f32.mxu0 %v3058
  %3131 = vmatmul.mubr.f32.gmra.mrb[0].mxu0 %v1922
  %v3132 = vpop.f32.mrb[0].mxu0
  %v3133 = vadd.f32 0.0, %v3132
  %v3134 = vpop.f32.mrb[0].mxu0
  %v3135 = vadd.f32 0.0, %v3134
  %3136 = vmatprep.mubr.f32.mxu0 %v3061
  %3137 = vmatmul.mubr.f32.gmra.mrb[0].mxu0 %v1924
  %v3138 = vpop.f32.mrb[0].mxu0
  %v3139 = vadd.f32 0.0, %v3138
  %v3140 = vpop.f32.mrb[0].mxu0
  %v3141 = vadd.f32 0.0, %v3140
  %3142 = vmatprep.mubr.f32.mxu0 %v3064
  %3143 = vmatmul.mubr.f32.gmra.mrb[0].mxu0 %v1926
  %v3144 = vpop.f32.mrb[0].mxu0
  %v3145 = vadd.f32 0.0, %v3144
  %v3146 = vpop.f32.mrb[0].mxu0
  %v3147 = vadd.f32 0.0, %v3146
  %3148 = vdwg.mxu0
  %v3150 = vsel %vm1952, %v1929, 0
  %v3153 = vsel %vm1952, %v1931, 0
  %v3156 = vsel %vm1952, %v1933, 0
  %3158 = vmatprep.subr.mxu0 %v1635
  %3159 = vmatpush1.msra.mxu0 %v1634
  %3160 = vmatprep.subr.mxu0 %v1637
  %3161 = vmatpush1.msra.mxu0 %v1636
  %3162 = vmatprep.subr.mxu0 %v1639
  %3163 = vmatpush1.msra.mxu0 %v1638
  %3164 = vmatprep.subr.mxu0 %v1641
  %3165 = vmatpush1.msra.mxu0 %v1640
  %3166 = vmatprep.subr.mxu0 %v1643
  %3167 = vmatpush1.msra.mxu0 %v1642
  %3168 = vmatprep.subr.mxu0 %v1645
  %3169 = vmatpush1.msra.mxu0 %v1644
  %3170 = vmatprep.subr.mxu0 %v1647
  %3171 = vmatpush1.msra.mxu0 %v1646
  %3172 = vmatprep.subr.mxu0 %v1649
  %3173 = vmatpush1.msra.mxu0 %v1648
  %3174 = vmatprep.subr.mxu0 %v1651
  %3175 = vmatpush1.msra.mxu0 %v1650
  %3176 = vmatprep.subr.mxu0 %v1653
  %3177 = vmatpush1.msra.mxu0 %v1652
  %3178 = vmatprep.subr.mxu0 %v1655
  %3179 = vmatpush1.msra.mxu0 %v1654
  %3180 = vmatprep.subr.mxu0 %v1657
  %3181 = vmatpush1.msra.mxu0 %v1656
  %3182 = vmatprep.subr.mxu0 %v1659
  %3183 = vmatpush1.msra.mxu0 %v1658
  %3184 = vmatprep.subr.mxu0 %v1661
  %3185 = vmatpush1.msra.mxu0 %v1660
  %3186 = vmatprep.subr.mxu0 %v1663
  %3187 = vmatpush1.msra.mxu0 %v1662
  %3188 = vmatprep.subr.mxu0 %v1665
  %3189 = vmatpush1.msra.mxu0 %v1664
  %3190 = vmatprep.subr.mxu0 %v1667
  %3191 = vmatpush1.msra.mxu0 %v1666
  %3192 = vmatprep.subr.mxu0 %v1669
  %3193 = vmatpush1.msra.mxu0 %v1668
  %3194 = vmatprep.subr.mxu0 %v1671
  %3195 = vmatpush1.msra.mxu0 %v1670
  %3196 = vmatprep.subr.mxu0 %v1673
  %3197 = vmatpush1.msra.mxu0 %v1672
  %3198 = vmatprep.subr.mxu0 %v1675
  %3199 = vmatpush1.msra.mxu0 %v1674
  %3200 = vmatprep.subr.mxu0 %v1677
  %3201 = vmatpush1.msra.mxu0 %v1676
  %3202 = vmatprep.subr.mxu0 %v1679
  %3203 = vmatpush1.msra.mxu0 %v1678
  %3204 = vmatprep.subr.mxu0 %v1681
  %3205 = vmatpush1.msra.mxu0 %v1680
  %3206 = vmatprep.subr.mxu0 %v1683
  %3207 = vmatpush1.msra.mxu0 %v1682
  %3208 = vmatprep.subr.mxu0 %v1685
  %3209 = vmatpush1.msra.mxu0 %v1684
  %3210 = vmatprep.subr.mxu0 %v1687
  %3211 = vmatpush1.msra.mxu0 %v1686
  %3212 = vmatprep.subr.mxu0 0.0
  %3213 = vmatpush1.msra.mxu0 0.0
  %3214 = vmatprep.subr.mxu0 0.0
  %3215 = vmatpush1.msra.mxu0 0.0
  %3216 = vmatprep.subr.mxu0 0.0
  %3217 = vmatpush1.msra.mxu0 0.0
  %3218 = vmatprep.subr.mxu0 0.0
  %3219 = vmatpush1.msra.mxu0 0.0
  %3220 = vmatprep.subr.mxu0 0.0
  %3221 = vmatpush1.msra.mxu0 0.0
  %3222 = vmatprep.mubr.f32.mxu0 %v3150
  %3223 = vmatmul.mubr.f32.gmra.mrb[0].mxu0 %v1928
  %v3224 = vpop.f32.mrb[0].mxu0
  %v3225 = vadd.f32 0.0, %v3224
  %v3226 = vpop.f32.mrb[0].mxu0
  %v3227 = vadd.f32 0.0, %v3226
  %3228 = vmatprep.mubr.f32.mxu0 %v3153
  %3229 = vmatmul.mubr.f32.gmra.mrb[0].mxu0 %v1930
  %v3230 = vpop.f32.mrb[0].mxu0
  %v3231 = vadd.f32 0.0, %v3230
  %v3232 = vpop.f32.mrb[0].mxu0
  %v3233 = vadd.f32 0.0, %v3232
  %3234 = vmatprep.mubr.f32.mxu0 %v3156
  %3235 = vmatmul.mubr.f32.gmra.mrb[0].mxu0 %v1932
  %v3236 = vpop.f32.mrb[0].mxu0
  %v3237 = vadd.f32 0.0, %v3236
  %v3238 = vpop.f32.mrb[0].mxu0
  %v3239 = vadd.f32 0.0, %v3238
  %3240 = vdwg.mxu0
  %v3242 = vsel %vm1952, %v1935, 0
  %v3245 = vsel %vm1952, %v1937, 0
  %v3248 = vsel %vm1952, %v1939, 0
  %3250 = vmatprep.subr.mxu0 %v1689
  %3251 = vmatpush1.msra.mxu0 %v1688
  %3252 = vmatprep.subr.mxu0 %v1691
  %3253 = vmatpush1.msra.mxu0 %v1690
  %3254 = vmatprep.subr.mxu0 %v1693
  %3255 = vmatpush1.msra.mxu0 %v1692
  %3256 = vmatprep.subr.mxu0 %v1695
  %3257 = vmatpush1.msra.mxu0 %v1694
  %3258 = vmatprep.subr.mxu0 %v1697
  %3259 = vmatpush1.msra.mxu0 %v1696
  %3260 = vmatprep.subr.mxu0 %v1699
  %3261 = vmatpush1.msra.mxu0 %v1698
  %3262 = vmatprep.subr.mxu0 %v1701
  %3263 = vmatpush1.msra.mxu0 %v1700
  %3264 = vmatprep.subr.mxu0 %v1703
  %3265 = vmatpush1.msra.mxu0 %v1702
  %3266 = vmatprep.subr.mxu0 %v1705
  %3267 = vmatpush1.msra.mxu0 %v1704
  %3268 = vmatprep.subr.mxu0 %v1707
  %3269 = vmatpush1.msra.mxu0 %v1706
  %3270 = vmatprep.subr.mxu0 %v1709
  %3271 = vmatpush1.msra.mxu0 %v1708
  %3272 = vmatprep.subr.mxu0 %v1711
  %3273 = vmatpush1.msra.mxu0 %v1710
  %3274 = vmatprep.subr.mxu0 %v1713
  %3275 = vmatpush1.msra.mxu0 %v1712
  %3276 = vmatprep.subr.mxu0 %v1715
  %3277 = vmatpush1.msra.mxu0 %v1714
  %3278 = vmatprep.subr.mxu0 %v1717
  %3279 = vmatpush1.msra.mxu0 %v1716
  %3280 = vmatprep.subr.mxu0 %v1719
  %3281 = vmatpush1.msra.mxu0 %v1718
  %3282 = vmatprep.subr.mxu0 %v1721
  %3283 = vmatpush1.msra.mxu0 %v1720
  %3284 = vmatprep.subr.mxu0 %v1723
  %3285 = vmatpush1.msra.mxu0 %v1722
  %3286 = vmatprep.subr.mxu0 %v1725
  %3287 = vmatpush1.msra.mxu0 %v1724
  %3288 = vmatprep.subr.mxu0 %v1727
  %3289 = vmatpush1.msra.mxu0 %v1726
  %3290 = vmatprep.subr.mxu0 %v1729
  %3291 = vmatpush1.msra.mxu0 %v1728
  %3292 = vmatprep.subr.mxu0 %v1731
  %3293 = vmatpush1.msra.mxu0 %v1730
  %3294 = vmatprep.subr.mxu0 %v1733
  %3295 = vmatpush1.msra.mxu0 %v1732
  %3296 = vmatprep.subr.mxu0 %v1735
  %3297 = vmatpush1.msra.mxu0 %v1734
  %3298 = vmatprep.subr.mxu0 %v1737
  %3299 = vmatpush1.msra.mxu0 %v1736
  %3300 = vmatprep.subr.mxu0 %v1739
  %3301 = vmatpush1.msra.mxu0 %v1738
  %3302 = vmatprep.subr.mxu0 %v1741
  %3303 = vmatpush1.msra.mxu0 %v1740
  %3304 = vmatprep.subr.mxu0 0.0
  %3305 = vmatpush1.msra.mxu0 0.0
  %3306 = vmatprep.subr.mxu0 0.0
  %3307 = vmatpush1.msra.mxu0 0.0
  %3308 = vmatprep.subr.mxu0 0.0
  %3309 = vmatpush1.msra.mxu0 0.0
  %3310 = vmatprep.subr.mxu0 0.0
  %3311 = vmatpush1.msra.mxu0 0.0
  %3312 = vmatprep.subr.mxu0 0.0
  %3313 = vmatpush1.msra.mxu0 0.0
  %3314 = vmatprep.mubr.f32.mxu0 %v3242
  %3315 = vmatmul.mubr.f32.gmra.mrb[0].mxu0 %v1934
  %v3316 = vpop.f32.mrb[0].mxu0
  %v3317 = vadd.f32 0.0, %v3316
  %v3318 = vpop.f32.mrb[0].mxu0
  %v3319 = vadd.f32 0.0, %v3318
  %3320 = vmatprep.mubr.f32.mxu0 %v3245
  %3321 = vmatmul.mubr.f32.gmra.mrb[0].mxu0 %v1936
  %v3322 = vpop.f32.mrb[0].mxu0
  %v3323 = vadd.f32 0.0, %v3322
  %v3324 = vpop.f32.mrb[0].mxu0
  %v3325 = vadd.f32 0.0, %v3324
  %3326 = vmatprep.mubr.f32.mxu0 %v3248
  %3327 = vmatmul.mubr.f32.gmra.mrb[0].mxu0 %v1938
  %v3328 = vpop.f32.mrb[0].mxu0
  %v3329 = vadd.f32 0.0, %v3328
  %v3330 = vpop.f32.mrb[0].mxu0
  %v3331 = vadd.f32 0.0, %v3330
  %3332 = vdwg.mxu0
  %v3334 = vsel %vm1952, %v1941, 0
  %v3337 = vsel %vm1952, %v1943, 0
  %v3340 = vsel %vm1952, %v1945, 0
  %3342 = vmatprep.subr.mxu0 %v1743
  %3343 = vmatpush1.msra.mxu0 %v1742
  %3344 = vmatprep.subr.mxu0 %v1745
  %3345 = vmatpush1.msra.mxu0 %v1744
  %3346 = vmatprep.subr.mxu0 %v1747
  %3347 = vmatpush1.msra.mxu0 %v1746
  %3348 = vmatprep.subr.mxu0 %v1749
  %3349 = vmatpush1.msra.mxu0 %v1748
  %3350 = vmatprep.subr.mxu0 %v1751
  %3351 = vmatpush1.msra.mxu0 %v1750
  %3352 = vmatprep.subr.mxu0 %v1753
  %3353 = vmatpush1.msra.mxu0 %v1752
  %3354 = vmatprep.subr.mxu0 %v1755
  %3355 = vmatpush1.msra.mxu0 %v1754
  %3356 = vmatprep.subr.mxu0 %v1757
  %3357 = vmatpush1.msra.mxu0 %v1756
  %3358 = vmatprep.subr.mxu0 %v1759
  %3359 = vmatpush1.msra.mxu0 %v1758
  %3360 = vmatprep.subr.mxu0 %v1761
  %3361 = vmatpush1.msra.mxu0 %v1760
  %3362 = vmatprep.subr.mxu0 %v1763
  %3363 = vmatpush1.msra.mxu0 %v1762
  %3364 = vmatprep.subr.mxu0 %v1765
  %3365 = vmatpush1.msra.mxu0 %v1764
  %3366 = vmatprep.subr.mxu0 %v1767
  %3367 = vmatpush1.msra.mxu0 %v1766
  %3368 = vmatprep.subr.mxu0 %v1769
  %3369 = vmatpush1.msra.mxu0 %v1768
  %3370 = vmatprep.subr.mxu0 %v1771
  %3371 = vmatpush1.msra.mxu0 %v1770
  %3372 = vmatprep.subr.mxu0 %v1773
  %3373 = vmatpush1.msra.mxu0 %v1772
  %3374 = vmatprep.subr.mxu0 %v1775
  %3375 = vmatpush1.msra.mxu0 %v1774
  %3376 = vmatprep.subr.mxu0 %v1777
  %3377 = vmatpush1.msra.mxu0 %v1776
  %3378 = vmatprep.subr.mxu0 %v1779
  %3379 = vmatpush1.msra.mxu0 %v1778
  %3380 = vmatprep.subr.mxu0 %v1781
  %3381 = vmatpush1.msra.mxu0 %v1780
  %3382 = vmatprep.subr.mxu0 %v1783
  %3383 = vmatpush1.msra.mxu0 %v1782
  %3384 = vmatprep.subr.mxu0 %v1785
  %3385 = vmatpush1.msra.mxu0 %v1784
  %3386 = vmatprep.subr.mxu0 %v1787
  %3387 = vmatpush1.msra.mxu0 %v1786
  %3388 = vmatprep.subr.mxu0 %v1789
  %3389 = vmatpush1.msra.mxu0 %v1788
  %3390 = vmatprep.subr.mxu0 %v1791
  %3391 = vmatpush1.msra.mxu0 %v1790
  %3392 = vmatprep.subr.mxu0 %v1793
  %3393 = vmatpush1.msra.mxu0 %v1792
  %3394 = vmatprep.subr.mxu0 %v1795
  %3395 = vmatpush1.msra.mxu0 %v1794
  %3396 = vmatprep.subr.mxu0 0.0
  %3397 = vmatpush1.msra.mxu0 0.0
  %3398 = vmatprep.subr.mxu0 0.0
  %3399 = vmatpush1.msra.mxu0 0.0
  %3400 = vmatprep.subr.mxu0 0.0
  %3401 = vmatpush1.msra.mxu0 0.0
  %3402 = vmatprep.subr.mxu0 0.0
  %3403 = vmatpush1.msra.mxu0 0.0
  %3404 = vmatprep.subr.mxu0 0.0
  %3405 = vmatpush1.msra.mxu0 0.0
  %3406 = vmatprep.mubr.f32.mxu0 %v3334
  %3407 = vmatmul.mubr.f32.gmra.mrb[0].mxu0 %v1940
  %v3408 = vpop.f32.mrb[0].mxu0
  %v3409 = vadd.f32 0.0, %v3408
  %v3410 = vpop.f32.mrb[0].mxu0
  %v3411 = vadd.f32 0.0, %v3410
  %3412 = vmatprep.mubr.f32.mxu0 %v3337
  %3413 = vmatmul.mubr.f32.gmra.mrb[0].mxu0 %v1942
  %v3414 = vpop.f32.mrb[0].mxu0
  %v3415 = vadd.f32 0.0, %v3414
  %v3416 = vpop.f32.mrb[0].mxu0
  %v3417 = vadd.f32 0.0, %v3416
  %3418 = vmatprep.mubr.f32.mxu0 %v3340
  %3419 = vmatmul.mubr.f32.gmra.mrb[0].mxu0 %v1944
  %v3420 = vpop.f32.mrb[0].mxu0
  %v3421 = vadd.f32 0.0, %v3420
  %v3422 = vpop.f32.mrb[0].mxu0
  %v3423 = vadd.f32 0.0, %v3422
  %3424 = vdwg.mxu0
  %v3426 = vsel %vm1952, %v1947, 0
  %v3429 = vsel %vm1952, %v1949, 0
  %v3432 = vsel %vm1952, %v1951, 0
  %3434 = vmatprep.subr.mxu0 %v1797
  %3435 = vmatpush1.msra.mxu0 %v1796
  %3436 = vmatprep.subr.mxu0 %v1799
  %3437 = vmatpush1.msra.mxu0 %v1798
  %3438 = vmatprep.subr.mxu0 %v1801
  %3439 = vmatpush1.msra.mxu0 %v1800
  %3440 = vmatprep.subr.mxu0 %v1803
  %3441 = vmatpush1.msra.mxu0 %v1802
  %3442 = vmatprep.subr.mxu0 %v1805
  %3443 = vmatpush1.msra.mxu0 %v1804
  %3444 = vmatprep.subr.mxu0 %v1807
  %3445 = vmatpush1.msra.mxu0 %v1806
  %3446 = vmatprep.subr.mxu0 %v1809
  %3447 = vmatpush1.msra.mxu0 %v1808
  %3448 = vmatprep.subr.mxu0 %v1811
  %3449 = vmatpush1.msra.mxu0 %v1810
  %3450 = vmatprep.subr.mxu0 %v1813
  %3451 = vmatpush1.msra.mxu0 %v1812
  %3452 = vmatprep.subr.mxu0 %v1815
  %3453 = vmatpush1.msra.mxu0 %v1814
  %3454 = vmatprep.subr.mxu0 %v1817
  %3455 = vmatpush1.msra.mxu0 %v1816
  %3456 = vmatprep.subr.mxu0 %v1819
  %3457 = vmatpush1.msra.mxu0 %v1818
  %3458 = vmatprep.subr.mxu0 %v1821
  %3459 = vmatpush1.msra.mxu0 %v1820
  %3460 = vmatprep.subr.mxu0 %v1823
  %3461 = vmatpush1.msra.mxu0 %v1822
  %3462 = vmatprep.subr.mxu0 %v1825
  %3463 = vmatpush1.msra.mxu0 %v1824
  %3464 = vmatprep.subr.mxu0 %v1827
  %3465 = vmatpush1.msra.mxu0 %v1826
  %3466 = vmatprep.subr.mxu0 %v1829
  %3467 = vmatpush1.msra.mxu0 %v1828
  %3468 = vmatprep.subr.mxu0 %v1831
  %3469 = vmatpush1.msra.mxu0 %v1830
  %3470 = vmatprep.subr.mxu0 %v1833
  %3471 = vmatpush1.msra.mxu0 %v1832
  %3472 = vmatprep.subr.mxu0 %v1835
  %3473 = vmatpush1.msra.mxu0 %v1834
  %3474 = vmatprep.subr.mxu0 %v1837
  %3475 = vmatpush1.msra.mxu0 %v1836
  %3476 = vmatprep.subr.mxu0 %v1839
  %3477 = vmatpush1.msra.mxu0 %v1838
  %3478 = vmatprep.subr.mxu0 %v1841
  %3479 = vmatpush1.msra.mxu0 %v1840
  %3480 = vmatprep.subr.mxu0 %v1843
  %3481 = vmatpush1.msra.mxu0 %v1842
  %3482 = vmatprep.subr.mxu0 %v1845
  %3483 = vmatpush1.msra.mxu0 %v1844
  %3484 = vmatprep.subr.mxu0 %v1847
  %3485 = vmatpush1.msra.mxu0 %v1846
  %3486 = vmatprep.subr.mxu0 %v1849
  %3487 = vmatpush1.msra.mxu0 %v1848
  %3488 = vmatprep.subr.mxu0 0.0
  %3489 = vmatpush1.msra.mxu0 0.0
  %3490 = vmatprep.subr.mxu0 0.0
  %3491 = vmatpush1.msra.mxu0 0.0
  %3492 = vmatprep.subr.mxu0 0.0
  %3493 = vmatpush1.msra.mxu0 0.0
  %3494 = vmatprep.subr.mxu0 0.0
  %3495 = vmatpush1.msra.mxu0 0.0
  %3496 = vmatprep.subr.mxu0 0.0
  %3497 = vmatpush1.msra.mxu0 0.0
  %3498 = vmatprep.mubr.f32.mxu0 %v3426
  %3499 = vmatmul.mubr.f32.gmra.mrb[0].mxu0 %v1946
  %v3500 = vpop.f32.mrb[0].mxu0
  %v3501 = vadd.f32 0.0, %v3500
  %v3502 = vpop.f32.mrb[0].mxu0
  %v3503 = vadd.f32 0.0, %v3502
  %3504 = vmatprep.mubr.f32.mxu0 %v3429
  %3505 = vmatmul.mubr.f32.gmra.mrb[0].mxu0 %v1948
  %v3506 = vpop.f32.mrb[0].mxu0
  %v3507 = vadd.f32 0.0, %v3506
  %v3508 = vpop.f32.mrb[0].mxu0
  %v3509 = vadd.f32 0.0, %v3508
  %3510 = vmatprep.mubr.f32.mxu0 %v3432
  %3511 = vmatmul.mubr.f32.gmra.mrb[0].mxu0 %v1950
  %v3512 = vpop.f32.mrb[0].mxu0
  %v3513 = vadd.f32 0.0, %v3512
  %v3514 = vpop.f32.mrb[0].mxu0
  %v3515 = vadd.f32 0.0, %v3514
  %3516 = vdwg.mxu0
  %v3517 = vadd.f32 %v2029, %v2031
  %3518 = vadd.xlane.f32.xlu0 %v3517
  %v3519 = vpop.xlane.xlu0 %3518
  %v3520 = vadd.f32 %v2035, %v2037
  %3521 = vadd.xlane.f32.xlu0 %v3520
  %v3522 = vpop.xlane.xlu0 %3521
  %v3523 = vadd.f32 %v2041, %v2043
  %3524 = vadd.xlane.f32.xlu0 %v3523
  %v3525 = vpop.xlane.xlu0 %3524
  %v3526 = vadd.f32 %v2121, %v2123
  %3527 = vadd.xlane.f32.xlu0 %v3526
  %v3528 = vpop.xlane.xlu0 %3527
  %v3529 = vadd.f32 %v2127, %v2129
  %3530 = vadd.xlane.f32.xlu0 %v3529
  %v3531 = vpop.xlane.xlu0 %3530
  %v3532 = vadd.f32 %v2133, %v2135
  %3533 = vadd.xlane.f32.xlu0 %v3532
  %v3534 = vpop.xlane.xlu0 %3533
  %v3535 = vadd.f32 %v2213, %v2215
  %3536 = vadd.xlane.f32.xlu0 %v3535
  %v3537 = vpop.xlane.xlu0 %3536
  %v3538 = vadd.f32 %v2219, %v2221
  %3539 = vadd.xlane.f32.xlu0 %v3538
  %v3540 = vpop.xlane.xlu0 %3539
  %v3541 = vadd.f32 %v2225, %v2227
  %3542 = vadd.xlane.f32.xlu0 %v3541
  %v3543 = vpop.xlane.xlu0 %3542
  %v3544 = vadd.f32 %v2305, %v2307
  %3545 = vadd.xlane.f32.xlu0 %v3544
  %v3546 = vpop.xlane.xlu0 %3545
  %v3547 = vadd.f32 %v2311, %v2313
  %3548 = vadd.xlane.f32.xlu0 %v3547
  %v3549 = vpop.xlane.xlu0 %3548
  %v3550 = vadd.f32 %v2317, %v2319
  %3551 = vadd.xlane.f32.xlu0 %v3550
  %v3552 = vpop.xlane.xlu0 %3551
  %v3553 = vadd.f32 %v2397, %v2399
  %3554 = vadd.xlane.f32.xlu0 %v3553
  %v3555 = vpop.xlane.xlu0 %3554
  %v3556 = vadd.f32 %v2403, %v2405
  %3557 = vadd.xlane.f32.xlu0 %v3556
  %v3558 = vpop.xlane.xlu0 %3557
  %v3559 = vadd.f32 %v2409, %v2411
  %3560 = vadd.xlane.f32.xlu0 %v3559
  %v3561 = vpop.xlane.xlu0 %3560
  %v3562 = vadd.f32 %v2489, %v2491
  %3563 = vadd.xlane.f32.xlu0 %v3562
  %v3564 = vpop.xlane.xlu0 %3563
  %v3565 = vadd.f32 %v2495, %v2497
  %3566 = vadd.xlane.f32.xlu0 %v3565
  %v3567 = vpop.xlane.xlu0 %3566
  %v3568 = vadd.f32 %v2501, %v2503
  %3569 = vadd.xlane.f32.xlu0 %v3568
  %v3570 = vpop.xlane.xlu0 %3569
  %v3571 = vadd.f32 %v2581, %v2583
  %3572 = vadd.xlane.f32.xlu0 %v3571
  %v3573 = vpop.xlane.xlu0 %3572
  %v3574 = vadd.f32 %v2587, %v2589
  %3575 = vadd.xlane.f32.xlu0 %v3574
  %v3576 = vpop.xlane.xlu0 %3575
  %v3577 = vadd.f32 %v2593, %v2595
  %3578 = vadd.xlane.f32.xlu0 %v3577
  %v3579 = vpop.xlane.xlu0 %3578
  %v3580 = vadd.f32 %v2673, %v2675
  %3581 = vadd.xlane.f32.xlu0 %v3580
  %v3582 = vpop.xlane.xlu0 %3581
  %v3583 = vadd.f32 %v2679, %v2681
  %3584 = vadd.xlane.f32.xlu0 %v3583
  %v3585 = vpop.xlane.xlu0 %3584
  %v3586 = vadd.f32 %v2685, %v2687
  %3587 = vadd.xlane.f32.xlu0 %v3586
  %v3588 = vpop.xlane.xlu0 %3587
  %v3589 = vadd.f32 %v2765, %v2767
  %3590 = vadd.xlane.f32.xlu0 %v3589
  %v3591 = vpop.xlane.xlu0 %3590
  %v3592 = vadd.f32 %v2771, %v2773
  %3593 = vadd.xlane.f32.xlu0 %v3592
  %v3594 = vpop.xlane.xlu0 %3593
  %v3595 = vadd.f32 %v2777, %v2779
  %3596 = vadd.xlane.f32.xlu0 %v3595
  %v3597 = vpop.xlane.xlu0 %3596
  %v3598 = vadd.f32 %v2857, %v2859
  %3599 = vadd.xlane.f32.xlu0 %v3598
  %v3600 = vpop.xlane.xlu0 %3599
  %v3601 = vadd.f32 %v2863, %v2865
  %3602 = vadd.xlane.f32.xlu0 %v3601
  %v3603 = vpop.xlane.xlu0 %3602
  %v3604 = vadd.f32 %v2869, %v2871
  %3605 = vadd.xlane.f32.xlu0 %v3604
  %v3606 = vpop.xlane.xlu0 %3605
  %v3607 = vadd.f32 %v2949, %v2951
  %3608 = vadd.xlane.f32.xlu0 %v3607
  %v3609 = vpop.xlane.xlu0 %3608
  %v3610 = vadd.f32 %v2955, %v2957
  %3611 = vadd.xlane.f32.xlu0 %v3610
  %v3612 = vpop.xlane.xlu0 %3611
  %v3613 = vadd.f32 %v2961, %v2963
  %3614 = vadd.xlane.f32.xlu0 %v3613
  %v3615 = vpop.xlane.xlu0 %3614
  %v3616 = vadd.f32 %v3041, %v3043
  %3617 = vadd.xlane.f32.xlu0 %v3616
  %v3618 = vpop.xlane.xlu0 %3617
  %v3619 = vadd.f32 %v3047, %v3049
  %3620 = vadd.xlane.f32.xlu0 %v3619
  %v3621 = vpop.xlane.xlu0 %3620
  %v3622 = vadd.f32 %v3053, %v3055
  %3623 = vadd.xlane.f32.xlu0 %v3622
  %v3624 = vpop.xlane.xlu0 %3623
  %v3625 = vadd.f32 %v3133, %v3135
  %3626 = vadd.xlane.f32.xlu0 %v3625
  %v3627 = vpop.xlane.xlu0 %3626
  %v3628 = vadd.f32 %v3139, %v3141
  %3629 = vadd.xlane.f32.xlu0 %v3628
  %v3630 = vpop.xlane.xlu0 %3629
  %v3631 = vadd.f32 %v3145, %v3147
  %3632 = vadd.xlane.f32.xlu0 %v3631
  %v3633 = vpop.xlane.xlu0 %3632
  %v3634 = vadd.f32 %v3225, %v3227
  %3635 = vadd.xlane.f32.xlu0 %v3634
  %v3636 = vpop.xlane.xlu0 %3635
  %v3637 = vadd.f32 %v3231, %v3233
  %3638 = vadd.xlane.f32.xlu0 %v3637
  %v3639 = vpop.xlane.xlu0 %3638
  %v3640 = vadd.f32 %v3237, %v3239
  %3641 = vadd.xlane.f32.xlu0 %v3640
  %v3642 = vpop.xlane.xlu0 %3641
  %v3643 = vadd.f32 %v3317, %v3319
  %3644 = vadd.xlane.f32.xlu0 %v3643
  %v3645 = vpop.xlane.xlu0 %3644
  %v3646 = vadd.f32 %v3323, %v3325
  %3647 = vadd.xlane.f32.xlu0 %v3646
  %v3648 = vpop.xlane.xlu0 %3647
  %v3649 = vadd.f32 %v3329, %v3331
  %3650 = vadd.xlane.f32.xlu0 %v3649
  %v3651 = vpop.xlane.xlu0 %3650
  %v3652 = vadd.f32 %v3409, %v3411
  %3653 = vadd.xlane.f32.xlu0 %v3652
  %v3654 = vpop.xlane.xlu0 %3653
  %v3655 = vadd.f32 %v3415, %v3417
  %3656 = vadd.xlane.f32.xlu0 %v3655
  %v3657 = vpop.xlane.xlu0 %3656
  %v3658 = vadd.f32 %v3421, %v3423
  %3659 = vadd.xlane.f32.xlu0 %v3658
  %v3660 = vpop.xlane.xlu0 %3659
  %v3661 = vadd.f32 %v3501, %v3503
  %3662 = vadd.xlane.f32.xlu0 %v3661
  %v3663 = vpop.xlane.xlu0 %3662
  %v3664 = vadd.f32 %v3507, %v3509
  %3665 = vadd.xlane.f32.xlu0 %v3664
  %v3666 = vpop.xlane.xlu0 %3665
  %v3667 = vadd.f32 %v3513, %v3515
  %3668 = vadd.xlane.f32.xlu0 %v3667
  %v3669 = vpop.xlane.xlu0 %3668
  %v3670 = vmul.f32 %v2029, %v2029
  %v3671 = vmul.f32 %v2031, %v2031
  %v3672 = vmul.f32 %v2035, %v2035
  %v3673 = vmul.f32 %v2037, %v2037
  %v3674 = vmul.f32 %v2041, %v2041
  %v3675 = vmul.f32 %v2043, %v2043
  %v3676 = vmul.f32 %v2121, %v2121
  %v3677 = vmul.f32 %v2123, %v2123
  %v3678 = vmul.f32 %v2127, %v2127
  %v3679 = vmul.f32 %v2129, %v2129
  %v3680 = vmul.f32 %v2133, %v2133
  %v3681 = vmul.f32 %v2135, %v2135
  %v3682 = vmul.f32 %v2213, %v2213
  %v3683 = vmul.f32 %v2215, %v2215
  %v3684 = vmul.f32 %v2219, %v2219
  %v3685 = vmul.f32 %v2221, %v2221
  %v3686 = vmul.f32 %v2225, %v2225
  %v3687 = vmul.f32 %v2227, %v2227
  %v3688 = vmul.f32 %v2305, %v2305
  %v3689 = vmul.f32 %v2307, %v2307
  %v3690 = vmul.f32 %v2311, %v2311
  %v3691 = vmul.f32 %v2313, %v2313
  %v3692 = vmul.f32 %v2317, %v2317
  %v3693 = vmul.f32 %v2319, %v2319
  %v3694 = vmul.f32 %v2397, %v2397
  %v3695 = vmul.f32 %v2399, %v2399
  %v3696 = vmul.f32 %v2403, %v2403
  %v3697 = vmul.f32 %v2405, %v2405
  %v3698 = vmul.f32 %v2409, %v2409
  %v3699 = vmul.f32 %v2411, %v2411
  %v3700 = vmul.f32 %v2489, %v2489
  %v3701 = vmul.f32 %v2491, %v2491
  %v3702 = vmul.f32 %v2495, %v2495
  %v3703 = vmul.f32 %v2497, %v2497
  %v3704 = vmul.f32 %v2501, %v2501
  %v3705 = vmul.f32 %v2503, %v2503
  %v3706 = vmul.f32 %v2581, %v2581
  %v3707 = vmul.f32 %v2583, %v2583
  %v3708 = vmul.f32 %v2587, %v2587
  %v3709 = vmul.f32 %v2589, %v2589
  %v3710 = vmul.f32 %v2593, %v2593
  %v3711 = vmul.f32 %v2595, %v2595
  %v3712 = vmul.f32 %v2673, %v2673
  %v3713 = vmul.f32 %v2675, %v2675
  %v3714 = vmul.f32 %v2679, %v2679
  %v3715 = vmul.f32 %v2681, %v2681
  %v3716 = vmul.f32 %v2685, %v2685
  %v3717 = vmul.f32 %v2687, %v2687
  %v3718 = vmul.f32 %v2765, %v2765
  %v3719 = vmul.f32 %v2767, %v2767
  %v3720 = vmul.f32 %v2771, %v2771
  %v3721 = vmul.f32 %v2773, %v2773
  %v3722 = vmul.f32 %v2777, %v2777
  %v3723 = vmul.f32 %v2779, %v2779
  %v3724 = vmul.f32 %v2857, %v2857
  %v3725 = vmul.f32 %v2859, %v2859
  %v3726 = vmul.f32 %v2863, %v2863
  %v3727 = vmul.f32 %v2865, %v2865
  %v3728 = vmul.f32 %v2869, %v2869
  %v3729 = vmul.f32 %v2871, %v2871
  %v3730 = vmul.f32 %v2949, %v2949
  %v3731 = vmul.f32 %v2951, %v2951
  %v3732 = vmul.f32 %v2955, %v2955
  %v3733 = vmul.f32 %v2957, %v2957
  %v3734 = vmul.f32 %v2961, %v2961
  %v3735 = vmul.f32 %v2963, %v2963
  %v3736 = vmul.f32 %v3041, %v3041
  %v3737 = vmul.f32 %v3043, %v3043
  %v3738 = vmul.f32 %v3047, %v3047
  %v3739 = vmul.f32 %v3049, %v3049
  %v3740 = vmul.f32 %v3053, %v3053
  %v3741 = vmul.f32 %v3055, %v3055
  %v3742 = vmul.f32 %v3133, %v3133
  %v3743 = vmul.f32 %v3135, %v3135
  %v3744 = vmul.f32 %v3139, %v3139
  %v3745 = vmul.f32 %v3141, %v3141
  %v3746 = vmul.f32 %v3145, %v3145
  %v3747 = vmul.f32 %v3147, %v3147
  %v3748 = vmul.f32 %v3225, %v3225
  %v3749 = vmul.f32 %v3227, %v3227
  %v3750 = vmul.f32 %v3231, %v3231
  %v3751 = vmul.f32 %v3233, %v3233
  %v3752 = vmul.f32 %v3237, %v3237
  %v3753 = vmul.f32 %v3239, %v3239
  %v3754 = vmul.f32 %v3317, %v3317
  %v3755 = vmul.f32 %v3319, %v3319
  %v3756 = vmul.f32 %v3323, %v3323
  %v3757 = vmul.f32 %v3325, %v3325
  %v3758 = vmul.f32 %v3329, %v3329
  %v3759 = vmul.f32 %v3331, %v3331
  %v3760 = vmul.f32 %v3409, %v3409
  %v3761 = vmul.f32 %v3411, %v3411
  %v3762 = vmul.f32 %v3415, %v3415
  %v3763 = vmul.f32 %v3417, %v3417
  %v3764 = vmul.f32 %v3421, %v3421
  %v3765 = vmul.f32 %v3423, %v3423
  %v3766 = vmul.f32 %v3501, %v3501
  %v3767 = vmul.f32 %v3503, %v3503
  %v3768 = vmul.f32 %v3507, %v3507
  %v3769 = vmul.f32 %v3509, %v3509
  %v3770 = vmul.f32 %v3513, %v3513
  %v3771 = vmul.f32 %v3515, %v3515
  %v3772 = vadd.f32 %v3670, %v3671
  %3773 = vadd.xlane.f32.xlu0 %v3772
  %v3774 = vpop.xlane.xlu0 %3773
  %v3775 = vadd.f32 %v3672, %v3673
  %3776 = vadd.xlane.f32.xlu0 %v3775
  %v3777 = vpop.xlane.xlu0 %3776
  %v3778 = vadd.f32 %v3674, %v3675
  %3779 = vadd.xlane.f32.xlu0 %v3778
  %v3780 = vpop.xlane.xlu0 %3779
  %v3781 = vadd.f32 %v3676, %v3677
  %3782 = vadd.xlane.f32.xlu0 %v3781
  %v3783 = vpop.xlane.xlu0 %3782
  %v3784 = vadd.f32 %v3678, %v3679
  %3785 = vadd.xlane.f32.xlu0 %v3784
  %v3786 = vpop.xlane.xlu0 %3785
  %v3787 = vadd.f32 %v3680, %v3681
  %3788 = vadd.xlane.f32.xlu0 %v3787
  %v3789 = vpop.xlane.xlu0 %3788
  %v3790 = vadd.f32 %v3682, %v3683
  %3791 = vadd.xlane.f32.xlu0 %v3790
  %v3792 = vpop.xlane.xlu0 %3791
  %v3793 = vadd.f32 %v3684, %v3685
  %3794 = vadd.xlane.f32.xlu0 %v3793
  %v3795 = vpop.xlane.xlu0 %3794
  %v3796 = vadd.f32 %v3686, %v3687
  %3797 = vadd.xlane.f32.xlu0 %v3796
  %v3798 = vpop.xlane.xlu0 %3797
  %v3799 = vadd.f32 %v3688, %v3689
  %3800 = vadd.xlane.f32.xlu0 %v3799
  %v3801 = vpop.xlane.xlu0 %3800
  %v3802 = vadd.f32 %v3690, %v3691
  %3803 = vadd.xlane.f32.xlu0 %v3802
  %v3804 = vpop.xlane.xlu0 %3803
  %v3805 = vadd.f32 %v3692, %v3693
  %3806 = vadd.xlane.f32.xlu0 %v3805
  %v3807 = vpop.xlane.xlu0 %3806
  %v3808 = vadd.f32 %v3694, %v3695
  %3809 = vadd.xlane.f32.xlu0 %v3808
  %v3810 = vpop.xlane.xlu0 %3809
  %v3811 = vadd.f32 %v3696, %v3697
  %3812 = vadd.xlane.f32.xlu0 %v3811
  %v3813 = vpop.xlane.xlu0 %3812
  %v3814 = vadd.f32 %v3698, %v3699
  %3815 = vadd.xlane.f32.xlu0 %v3814
  %v3816 = vpop.xlane.xlu0 %3815
  %v3817 = vadd.f32 %v3700, %v3701
  %3818 = vadd.xlane.f32.xlu0 %v3817
  %v3819 = vpop.xlane.xlu0 %3818
  %v3820 = vadd.f32 %v3702, %v3703
  %3821 = vadd.xlane.f32.xlu0 %v3820
  %v3822 = vpop.xlane.xlu0 %3821
  %v3823 = vadd.f32 %v3704, %v3705
  %3824 = vadd.xlane.f32.xlu0 %v3823
  %v3825 = vpop.xlane.xlu0 %3824
  %v3826 = vadd.f32 %v3706, %v3707
  %3827 = vadd.xlane.f32.xlu0 %v3826
  %v3828 = vpop.xlane.xlu0 %3827
  %v3829 = vadd.f32 %v3708, %v3709
  %3830 = vadd.xlane.f32.xlu0 %v3829
  %v3831 = vpop.xlane.xlu0 %3830
  %v3832 = vadd.f32 %v3710, %v3711
  %3833 = vadd.xlane.f32.xlu0 %v3832
  %v3834 = vpop.xlane.xlu0 %3833
  %v3835 = vadd.f32 %v3712, %v3713
  %3836 = vadd.xlane.f32.xlu0 %v3835
  %v3837 = vpop.xlane.xlu0 %3836
  %v3838 = vadd.f32 %v3714, %v3715
  %3839 = vadd.xlane.f32.xlu0 %v3838
  %v3840 = vpop.xlane.xlu0 %3839
  %v3841 = vadd.f32 %v3716, %v3717
  %3842 = vadd.xlane.f32.xlu0 %v3841
  %v3843 = vpop.xlane.xlu0 %3842
  %v3844 = vadd.f32 %v3718, %v3719
  %3845 = vadd.xlane.f32.xlu0 %v3844
  %v3846 = vpop.xlane.xlu0 %3845
  %v3847 = vadd.f32 %v3720, %v3721
  %3848 = vadd.xlane.f32.xlu0 %v3847
  %v3849 = vpop.xlane.xlu0 %3848
  %v3850 = vadd.f32 %v3722, %v3723
  %3851 = vadd.xlane.f32.xlu0 %v3850
  %v3852 = vpop.xlane.xlu0 %3851
  %v3853 = vadd.f32 %v3724, %v3725
  %3854 = vadd.xlane.f32.xlu0 %v3853
  %v3855 = vpop.xlane.xlu0 %3854
  %v3856 = vadd.f32 %v3726, %v3727
  %3857 = vadd.xlane.f32.xlu0 %v3856
  %v3858 = vpop.xlane.xlu0 %3857
  %v3859 = vadd.f32 %v3728, %v3729
  %3860 = vadd.xlane.f32.xlu0 %v3859
  %v3861 = vpop.xlane.xlu0 %3860
  %v3862 = vadd.f32 %v3730, %v3731
  %3863 = vadd.xlane.f32.xlu0 %v3862
  %v3864 = vpop.xlane.xlu0 %3863
  %v3865 = vadd.f32 %v3732, %v3733
  %3866 = vadd.xlane.f32.xlu0 %v3865
  %v3867 = vpop.xlane.xlu0 %3866
  %v3868 = vadd.f32 %v3734, %v3735
  %3869 = vadd.xlane.f32.xlu0 %v3868
  %v3870 = vpop.xlane.xlu0 %3869
  %v3871 = vadd.f32 %v3736, %v3737
  %3872 = vadd.xlane.f32.xlu0 %v3871
  %v3873 = vpop.xlane.xlu0 %3872
  %v3874 = vadd.f32 %v3738, %v3739
  %3875 = vadd.xlane.f32.xlu0 %v3874
  %v3876 = vpop.xlane.xlu0 %3875
  %v3877 = vadd.f32 %v3740, %v3741
  %3878 = vadd.xlane.f32.xlu0 %v3877
  %v3879 = vpop.xlane.xlu0 %3878
  %v3880 = vadd.f32 %v3742, %v3743
  %3881 = vadd.xlane.f32.xlu0 %v3880
  %v3882 = vpop.xlane.xlu0 %3881
  %v3883 = vadd.f32 %v3744, %v3745
  %3884 = vadd.xlane.f32.xlu0 %v3883
  %v3885 = vpop.xlane.xlu0 %3884
  %v3886 = vadd.f32 %v3746, %v3747
  %3887 = vadd.xlane.f32.xlu0 %v3886
  %v3888 = vpop.xlane.xlu0 %3887
  %v3889 = vadd.f32 %v3748, %v3749
  %3890 = vadd.xlane.f32.xlu0 %v3889
  %v3891 = vpop.xlane.xlu0 %3890
  %v3892 = vadd.f32 %v3750, %v3751
  %3893 = vadd.xlane.f32.xlu0 %v3892
  %v3894 = vpop.xlane.xlu0 %3893
  %v3895 = vadd.f32 %v3752, %v3753
  %3896 = vadd.xlane.f32.xlu0 %v3895
  %v3897 = vpop.xlane.xlu0 %3896
  %v3898 = vadd.f32 %v3754, %v3755
  %3899 = vadd.xlane.f32.xlu0 %v3898
  %v3900 = vpop.xlane.xlu0 %3899
  %v3901 = vadd.f32 %v3756, %v3757
  %3902 = vadd.xlane.f32.xlu0 %v3901
  %v3903 = vpop.xlane.xlu0 %3902
  %v3904 = vadd.f32 %v3758, %v3759
  %3905 = vadd.xlane.f32.xlu0 %v3904
  %v3906 = vpop.xlane.xlu0 %3905
  %v3907 = vadd.f32 %v3760, %v3761
  %3908 = vadd.xlane.f32.xlu0 %v3907
  %v3909 = vpop.xlane.xlu0 %3908
  %v3910 = vadd.f32 %v3762, %v3763
  %3911 = vadd.xlane.f32.xlu0 %v3910
  %v3912 = vpop.xlane.xlu0 %3911
  %v3913 = vadd.f32 %v3764, %v3765
  %3914 = vadd.xlane.f32.xlu0 %v3913
  %v3915 = vpop.xlane.xlu0 %3914
  %v3916 = vadd.f32 %v3766, %v3767
  %3917 = vadd.xlane.f32.xlu0 %v3916
  %v3918 = vpop.xlane.xlu0 %3917
  %v3919 = vadd.f32 %v3768, %v3769
  %3920 = vadd.xlane.f32.xlu0 %v3919
  %v3921 = vpop.xlane.xlu0 %3920
  %v3922 = vadd.f32 %v3770, %v3771
  %3923 = vadd.xlane.f32.xlu0 %v3922
  %v3924 = vpop.xlane.xlu0 %3923
  %v3925 = vmul.f32 %v3519, 0.0051020407
  %v3926 = vmul.f32 %v3522, 0.0051020407
  %v3927 = vmul.f32 %v3525, 0.0051020407
  %v3928 = vmul.f32 %v3528, 0.0051020407
  %v3929 = vmul.f32 %v3531, 0.0051020407
  %v3930 = vmul.f32 %v3534, 0.0051020407
  %v3931 = vmul.f32 %v3537, 0.0051020407
  %v3932 = vmul.f32 %v3540, 0.0051020407
  %v3933 = vmul.f32 %v3543, 0.0051020407
  %v3934 = vmul.f32 %v3546, 0.0051020407
  %v3935 = vmul.f32 %v3549, 0.0051020407
  %v3936 = vmul.f32 %v3552, 0.0051020407
  %v3937 = vmul.f32 %v3555, 0.0051020407
  %v3938 = vmul.f32 %v3558, 0.0051020407
  %v3939 = vmul.f32 %v3561, 0.0051020407
  %v3940 = vmul.f32 %v3564, 0.0051020407
  %v3941 = vmul.f32 %v3567, 0.0051020407
  %v3942 = vmul.f32 %v3570, 0.0051020407
  %v3943 = vmul.f32 %v3573, 0.0051020407
  %v3944 = vmul.f32 %v3576, 0.0051020407
  %v3945 = vmul.f32 %v3579, 0.0051020407
  %v3946 = vmul.f32 %v3582, 0.0051020407
  %v3947 = vmul.f32 %v3585, 0.0051020407
  %v3948 = vmul.f32 %v3588, 0.0051020407
  %v3949 = vmul.f32 %v3591, 0.0051020407
  %v3950 = vmul.f32 %v3594, 0.0051020407
  %v3951 = vmul.f32 %v3597, 0.0051020407
  %v3952 = vmul.f32 %v3600, 0.0051020407
  %v3953 = vmul.f32 %v3603, 0.0051020407
  %v3954 = vmul.f32 %v3606, 0.0051020407
  %v3955 = vmul.f32 %v3609, 0.0051020407
  %v3956 = vmul.f32 %v3612, 0.0051020407
  %v3957 = vmul.f32 %v3615, 0.0051020407
  %v3958 = vmul.f32 %v3618, 0.0051020407
  %v3959 = vmul.f32 %v3621, 0.0051020407
  %v3960 = vmul.f32 %v3624, 0.0051020407
  %v3961 = vmul.f32 %v3627, 0.0051020407
  %v3962 = vmul.f32 %v3630, 0.0051020407
  %v3963 = vmul.f32 %v3633, 0.0051020407
  %v3964 = vmul.f32 %v3636, 0.0051020407
  %v3965 = vmul.f32 %v3639, 0.0051020407
  %v3966 = vmul.f32 %v3642, 0.0051020407
  %v3967 = vmul.f32 %v3645, 0.0051020407
  %v3968 = vmul.f32 %v3648, 0.0051020407
  %v3969 = vmul.f32 %v3651, 0.0051020407
  %v3970 = vmul.f32 %v3654, 0.0051020407
  %v3971 = vmul.f32 %v3657, 0.0051020407
  %v3972 = vmul.f32 %v3660, 0.0051020407
  %v3973 = vmul.f32 %v3663, 0.0051020407
  %v3974 = vmul.f32 %v3666, 0.0051020407
  %v3975 = vmul.f32 %v3669, 0.0051020407
  %v3976 = vmul.f32 %v3774, 0.0051020407
  %v3977 = vmul.f32 %v3777, 0.0051020407
  %v3978 = vmul.f32 %v3780, 0.0051020407
  %v3979 = vmul.f32 %v3783, 0.0051020407
  %v3980 = vmul.f32 %v3786, 0.0051020407
  %v3981 = vmul.f32 %v3789, 0.0051020407
  %v3982 = vmul.f32 %v3792, 0.0051020407
  %v3983 = vmul.f32 %v3795, 0.0051020407
  %v3984 = vmul.f32 %v3798, 0.0051020407
  %v3985 = vmul.f32 %v3801, 0.0051020407
  %v3986 = vmul.f32 %v3804, 0.0051020407
  %v3987 = vmul.f32 %v3807, 0.0051020407
  %v3988 = vmul.f32 %v3810, 0.0051020407
  %v3989 = vmul.f32 %v3813, 0.0051020407
  %v3990 = vmul.f32 %v3816, 0.0051020407
  %v3991 = vmul.f32 %v3819, 0.0051020407
  %v3992 = vmul.f32 %v3822, 0.0051020407
  %v3993 = vmul.f32 %v3825, 0.0051020407
  %v3994 = vmul.f32 %v3828, 0.0051020407
  %v3995 = vmul.f32 %v3831, 0.0051020407
  %v3996 = vmul.f32 %v3834, 0.0051020407
  %v3997 = vmul.f32 %v3837, 0.0051020407
  %v3998 = vmul.f32 %v3840, 0.0051020407
  %v3999 = vmul.f32 %v3843, 0.0051020407
  %v4000 = vmul.f32 %v3846, 0.0051020407
  %v4001 = vmul.f32 %v3849, 0.0051020407
  %v4002 = vmul.f32 %v3852, 0.0051020407
  %v4003 = vmul.f32 %v3855, 0.0051020407
  %v4004 = vmul.f32 %v3858, 0.0051020407
  %v4005 = vmul.f32 %v3861, 0.0051020407
  %v4006 = vmul.f32 %v3864, 0.0051020407
  %v4007 = vmul.f32 %v3867, 0.0051020407
  %v4008 = vmul.f32 %v3870, 0.0051020407
  %v4009 = vmul.f32 %v3873, 0.0051020407
  %v4010 = vmul.f32 %v3876, 0.0051020407
  %v4011 = vmul.f32 %v3879, 0.0051020407
  %v4012 = vmul.f32 %v3882, 0.0051020407
  %v4013 = vmul.f32 %v3885, 0.0051020407
  %v4014 = vmul.f32 %v3888, 0.0051020407
  %v4015 = vmul.f32 %v3891, 0.0051020407
  %v4016 = vmul.f32 %v3894, 0.0051020407
  %v4017 = vmul.f32 %v3897, 0.0051020407
  %v4018 = vmul.f32 %v3900, 0.0051020407
  %v4019 = vmul.f32 %v3903, 0.0051020407
  %v4020 = vmul.f32 %v3906, 0.0051020407
  %v4021 = vmul.f32 %v3909, 0.0051020407
  %v4022 = vmul.f32 %v3912, 0.0051020407
  %v4023 = vmul.f32 %v3915, 0.0051020407
  %v4024 = vmul.f32 %v3918, 0.0051020407
  %v4025 = vmul.f32 %v3921, 0.0051020407
  %v4026 = vmul.f32 %v3924, 0.0051020407
  %v4027 = vmul.f32 %v3925, %v3925
  %v4028 = vmul.f32 %v3926, %v3926
  %v4029 = vmul.f32 %v3927, %v3927
  %v4030 = vmul.f32 %v3928, %v3928
  %v4031 = vmul.f32 %v3929, %v3929
  %v4032 = vmul.f32 %v3930, %v3930
  %v4033 = vmul.f32 %v3931, %v3931
  %v4034 = vmul.f32 %v3932, %v3932
  %v4035 = vmul.f32 %v3933, %v3933
  %v4036 = vmul.f32 %v3934, %v3934
  %v4037 = vmul.f32 %v3935, %v3935
  %v4038 = vmul.f32 %v3936, %v3936
  %v4039 = vmul.f32 %v3937, %v3937
  %v4040 = vmul.f32 %v3938, %v3938
  %v4041 = vmul.f32 %v3939, %v3939
  %v4042 = vmul.f32 %v3940, %v3940
  %v4043 = vmul.f32 %v3941, %v3941
  %v4044 = vmul.f32 %v3942, %v3942
  %v4045 = vmul.f32 %v3943, %v3943
  %v4046 = vmul.f32 %v3944, %v3944
  %v4047 = vmul.f32 %v3945, %v3945
  %v4048 = vmul.f32 %v3946, %v3946
  %v4049 = vmul.f32 %v3947, %v3947
  %v4050 = vmul.f32 %v3948, %v3948
  %v4051 = vmul.f32 %v3949, %v3949
  %v4052 = vmul.f32 %v3950, %v3950
  %v4053 = vmul.f32 %v3951, %v3951
  %v4054 = vmul.f32 %v3952, %v3952
  %v4055 = vmul.f32 %v3953, %v3953
  %v4056 = vmul.f32 %v3954, %v3954
  %v4057 = vmul.f32 %v3955, %v3955
  %v4058 = vmul.f32 %v3956, %v3956
  %v4059 = vmul.f32 %v3957, %v3957
  %v4060 = vmul.f32 %v3958, %v3958
  %v4061 = vmul.f32 %v3959, %v3959
  %v4062 = vmul.f32 %v3960, %v3960
  %v4063 = vmul.f32 %v3961, %v3961
  %v4064 = vmul.f32 %v3962, %v3962
  %v4065 = vmul.f32 %v3963, %v3963
  %v4066 = vmul.f32 %v3964, %v3964
  %v4067 = vmul.f32 %v3965, %v3965
  %v4068 = vmul.f32 %v3966, %v3966
  %v4069 = vmul.f32 %v3967, %v3967
  %v4070 = vmul.f32 %v3968, %v3968
  %v4071 = vmul.f32 %v3969, %v3969
  %v4072 = vmul.f32 %v3970, %v3970
  %v4073 = vmul.f32 %v3971, %v3971
  %v4074 = vmul.f32 %v3972, %v3972
  %v4075 = vmul.f32 %v3973, %v3973
  %v4076 = vmul.f32 %v3974, %v3974
  %v4077 = vmul.f32 %v3975, %v3975
  %v4078 = vsub.f32 %v3976, %v4027
  %v4079 = vsub.f32 %v3977, %v4028
  %v4080 = vsub.f32 %v3978, %v4029
  %v4081 = vsub.f32 %v3979, %v4030
  %v4082 = vsub.f32 %v3980, %v4031
  %v4083 = vsub.f32 %v3981, %v4032
  %v4084 = vsub.f32 %v3982, %v4033
  %v4085 = vsub.f32 %v3983, %v4034
  %v4086 = vsub.f32 %v3984, %v4035
  %v4087 = vsub.f32 %v3985, %v4036
  %v4088 = vsub.f32 %v3986, %v4037
  %v4089 = vsub.f32 %v3987, %v4038
  %v4090 = vsub.f32 %v3988, %v4039
  %v4091 = vsub.f32 %v3989, %v4040
  %v4092 = vsub.f32 %v3990, %v4041
  %v4093 = vsub.f32 %v3991, %v4042
  %v4094 = vsub.f32 %v3992, %v4043
  %v4095 = vsub.f32 %v3993, %v4044
  %v4096 = vsub.f32 %v3994, %v4045
  %v4097 = vsub.f32 %v3995, %v4046
  %v4098 = vsub.f32 %v3996, %v4047
  %v4099 = vsub.f32 %v3997, %v4048
  %v4100 = vsub.f32 %v3998, %v4049
  %v4101 = vsub.f32 %v3999, %v4050
  %v4102 = vsub.f32 %v4000, %v4051
  %v4103 = vsub.f32 %v4001, %v4052
  %v4104 = vsub.f32 %v4002, %v4053
  %v4105 = vsub.f32 %v4003, %v4054
  %v4106 = vsub.f32 %v4004, %v4055
  %v4107 = vsub.f32 %v4005, %v4056
  %v4108 = vsub.f32 %v4006, %v4057
  %v4109 = vsub.f32 %v4007, %v4058
  %v4110 = vsub.f32 %v4008, %v4059
  %v4111 = vsub.f32 %v4009, %v4060
  %v4112 = vsub.f32 %v4010, %v4061
  %v4113 = vsub.f32 %v4011, %v4062
  %v4114 = vsub.f32 %v4012, %v4063
  %v4115 = vsub.f32 %v4013, %v4064
  %v4116 = vsub.f32 %v4014, %v4065
  %v4117 = vsub.f32 %v4015, %v4066
  %v4118 = vsub.f32 %v4016, %v4067
  %v4119 = vsub.f32 %v4017, %v4068
  %v4120 = vsub.f32 %v4018, %v4069
  %v4121 = vsub.f32 %v4019, %v4070
  %v4122 = vsub.f32 %v4020, %v4071
  %v4123 = vsub.f32 %v4021, %v4072
  %v4124 = vsub.f32 %v4022, %v4073
  %v4125 = vsub.f32 %v4023, %v4074
  %v4126 = vsub.f32 %v4024, %v4075
  %v4127 = vsub.f32 %v4025, %v4076
  %v4128 = vsub.f32 %v4026, %v4077
  %v4129 = vadd.f32 %v4078, 1e-05
  %v4130 = vadd.f32 %v4079, 1e-05
  %v4131 = vadd.f32 %v4080, 1e-05
  %v4132 = vadd.f32 %v4081, 1e-05
  %v4133 = vadd.f32 %v4082, 1e-05
  %v4134 = vadd.f32 %v4083, 1e-05
  %v4135 = vadd.f32 %v4084, 1e-05
  %v4136 = vadd.f32 %v4085, 1e-05
  %v4137 = vadd.f32 %v4086, 1e-05
  %v4138 = vadd.f32 %v4087, 1e-05
  %v4139 = vadd.f32 %v4088, 1e-05
  %v4140 = vadd.f32 %v4089, 1e-05
  %v4141 = vadd.f32 %v4090, 1e-05
  %v4142 = vadd.f32 %v4091, 1e-05
  %v4143 = vadd.f32 %v4092, 1e-05
  %v4144 = vadd.f32 %v4093, 1e-05
  %v4145 = vadd.f32 %v4094, 1e-05
  %v4146 = vadd.f32 %v4095, 1e-05
  %v4147 = vadd.f32 %v4096, 1e-05
  %v4148 = vadd.f32 %v4097, 1e-05
  %v4149 = vadd.f32 %v4098, 1e-05
  %v4150 = vadd.f32 %v4099, 1e-05
  %v4151 = vadd.f32 %v4100, 1e-05
  %v4152 = vadd.f32 %v4101, 1e-05
  %v4153 = vadd.f32 %v4102, 1e-05
  %v4154 = vadd.f32 %v4103, 1e-05
  %v4155 = vadd.f32 %v4104, 1e-05
  %v4156 = vadd.f32 %v4105, 1e-05
  %v4157 = vadd.f32 %v4106, 1e-05
  %v4158 = vadd.f32 %v4107, 1e-05
  %v4159 = vadd.f32 %v4108, 1e-05
  %v4160 = vadd.f32 %v4109, 1e-05
  %v4161 = vadd.f32 %v4110, 1e-05
  %v4162 = vadd.f32 %v4111, 1e-05
  %v4163 = vadd.f32 %v4112, 1e-05
  %v4164 = vadd.f32 %v4113, 1e-05
  %v4165 = vadd.f32 %v4114, 1e-05
  %v4166 = vadd.f32 %v4115, 1e-05
  %v4167 = vadd.f32 %v4116, 1e-05
  %v4168 = vadd.f32 %v4117, 1e-05
  %v4169 = vadd.f32 %v4118, 1e-05
  %v4170 = vadd.f32 %v4119, 1e-05
  %v4171 = vadd.f32 %v4120, 1e-05
  %v4172 = vadd.f32 %v4121, 1e-05
  %v4173 = vadd.f32 %v4122, 1e-05
  %v4174 = vadd.f32 %v4123, 1e-05
  %v4175 = vadd.f32 %v4124, 1e-05
  %v4176 = vadd.f32 %v4125, 1e-05
  %v4177 = vadd.f32 %v4126, 1e-05
  %v4178 = vadd.f32 %v4127, 1e-05
  %v4179 = vadd.f32 %v4128, 1e-05
  %v4180 = vrsqrt.pop %v4129
  %v4181 = vrsqrt.pop %v4130
  %v4182 = vrsqrt.pop %v4131
  %v4183 = vrsqrt.pop %v4132
  %v4184 = vrsqrt.pop %v4133
  %v4185 = vrsqrt.pop %v4134
  %v4186 = vrsqrt.pop %v4135
  %v4187 = vrsqrt.pop %v4136
  %v4188 = vrsqrt.pop %v4137
  %v4189 = vrsqrt.pop %v4138
  %v4190 = vrsqrt.pop %v4139
  %v4191 = vrsqrt.pop %v4140
  %v4192 = vrsqrt.pop %v4141
  %v4193 = vrsqrt.pop %v4142
  %v4194 = vrsqrt.pop %v4143
  %v4195 = vrsqrt.pop %v4144
  %v4196 = vrsqrt.pop %v4145
  %v4197 = vrsqrt.pop %v4146
  %v4198 = vrsqrt.pop %v4147
  %v4199 = vrsqrt.pop %v4148
  %v4200 = vrsqrt.pop %v4149
  %v4201 = vrsqrt.pop %v4150
  %v4202 = vrsqrt.pop %v4151
  %v4203 = vrsqrt.pop %v4152
  %v4204 = vrsqrt.pop %v4153
  %v4205 = vrsqrt.pop %v4154
  %v4206 = vrsqrt.pop %v4155
  %v4207 = vrsqrt.pop %v4156
  %v4208 = vrsqrt.pop %v4157
  %v4209 = vrsqrt.pop %v4158
  %v4210 = vrsqrt.pop %v4159
  %v4211 = vrsqrt.pop %v4160
  %v4212 = vrsqrt.pop %v4161
  %v4213 = vrsqrt.pop %v4162
  %v4214 = vrsqrt.pop %v4163
  %v4215 = vrsqrt.pop %v4164
  %v4216 = vrsqrt.pop %v4165
  %v4217 = vrsqrt.pop %v4166
  %v4218 = vrsqrt.pop %v4167
  %v4219 = vrsqrt.pop %v4168
  %v4220 = vrsqrt.pop %v4169
  %v4221 = vrsqrt.pop %v4170
  %v4222 = vrsqrt.pop %v4171
  %v4223 = vrsqrt.pop %v4172
  %v4224 = vrsqrt.pop %v4173
  %v4225 = vrsqrt.pop %v4174
  %v4226 = vrsqrt.pop %v4175
  %v4227 = vrsqrt.pop %v4176
  %v4228 = vrsqrt.pop %v4177
  %v4229 = vrsqrt.pop %v4178
  %v4230 = vrsqrt.pop %v4179
  %v4231 = vld [vmem:[%s2] sm:$0xff]
  %v4232 = vld [vmem:[%s2 + $0x8] sm:$0xff]
  %v4233 = vld [vmem:[%s2 + $0x10] sm:$0xff]
  %v4234 = vld [vmem:[%s2 + $0x18] sm:$0xff]
  %v4235 = vld [vmem:[%s2 + $0x20] sm:$0xff]
  %v4236 = vld [vmem:[%s2 + $0x28] sm:$0xff]
  %v4237 = vld [vmem:[%s2 + $0x30] sm:$0xff]
  %v4238 = vld [vmem:[%s2 + $0x38] sm:$0xff]
  %v4239 = vld [vmem:[%s2 + $0x40] sm:$0xff]
  %v4240 = vld [vmem:[%s2 + $0x48] sm:$0xff]
  %v4241 = vld [vmem:[%s2 + $0x50] sm:$0xff]
  %v4242 = vld [vmem:[%s2 + $0x58] sm:$0xff]
  %v4243 = vld [vmem:[%s2 + $0x60] sm:$0xff]
  %v4244 = vld [vmem:[%s2 + $0x68] sm:$0xff]
  %v4245 = vld [vmem:[%s2 + $0x70] sm:$0xff]
  %v4246 = vld [vmem:[%s2 + $0x78] sm:$0xff]
  %v4247 = vld [vmem:[%s2 + $0x80] sm:$0xff]
  %v4248 = vld [vmem:[%s2 + $0x88] sm:$0xff]
  %v4249 = vld [vmem:[%s2 + $0x90] sm:$0xff]
  %v4250 = vld [vmem:[%s2 + $0x98] sm:$0xff]
  %v4251 = vld [vmem:[%s2 + $0xa0] sm:$0xff]
  %v4252 = vld [vmem:[%s2 + $0xa8] sm:$0xff]
  %v4253 = vld [vmem:[%s2 + $0xb0] sm:$0xff]
  %v4254 = vld [vmem:[%s2 + $0xb8] sm:$0xff]
  %v4255 = vld [vmem:[%s2 + $0xc0] sm:$0xff]
  %v4256 = vld [vmem:[%s2 + $0xc8] sm:$0xff]
  %v4257 = vld [vmem:[%s2 + $0xd0] sm:$0xff]
  %v4258 = vld [vmem:[%s2 + $0xd8] sm:$0xff]
  %v4259 = vld [vmem:[%s2 + $0xe0] sm:$0xff]
  %v4260 = vld [vmem:[%s2 + $0xe8] sm:$0xff]
  %v4261 = vld [vmem:[%s2 + $0xf0] sm:$0xff]
  %v4262 = vld [vmem:[%s2 + $0xf8] sm:$0xff]
  %v4263 = vld [vmem:[%s2 + $0x100] sm:$0xff]
  %v4264 = vld [vmem:[%s2 + $0x108] sm:$0xff]
  %v4265 = vld [vmem:[%s2 + $0x110] sm:$0xff]
  %v4266 = vld [vmem:[%s2 + $0x118] sm:$0xff]
  %v4267 = vld [vmem:[%s2 + $0x120] sm:$0xff]
  %v4268 = vld [vmem:[%s2 + $0x128] sm:$0xff]
  %v4269 = vld [vmem:[%s2 + $0x130] sm:$0xff]
  %v4270 = vld [vmem:[%s2 + $0x138] sm:$0xff]
  %v4271 = vld [vmem:[%s2 + $0x140] sm:$0xff]
  %v4272 = vld [vmem:[%s2 + $0x148] sm:$0xff]
  %v4273 = vld [vmem:[%s2 + $0x150] sm:$0xff]
  %v4274 = vld [vmem:[%s2 + $0x158] sm:$0xff]
  %v4275 = vld [vmem:[%s2 + $0x160] sm:$0xff]
  %v4276 = vld [vmem:[%s2 + $0x168] sm:$0xff]
  %v4277 = vld [vmem:[%s2 + $0x170] sm:$0xff]
  %v4278 = vld [vmem:[%s2 + $0x178] sm:$0xff]
  %v4279 = vld [vmem:[%s2 + $0x180] sm:$0xff]
  %v4280 = vld [vmem:[%s2 + $0x188] sm:$0xff]
  %v4281 = vld [vmem:[%s2 + $0x190] sm:$0xff]
  %v4282 = vmul.f32 %v4180, %v4231
  %v4283 = vmul.f32 %v4181, %v4232
  %v4284 = vmul.f32 %v4182, %v4233
  %v4285 = vmul.f32 %v4183, %v4234
  %v4286 = vmul.f32 %v4184, %v4235
  %v4287 = vmul.f32 %v4185, %v4236
  %v4288 = vmul.f32 %v4186, %v4237
  %v4289 = vmul.f32 %v4187, %v4238
  %v4290 = vmul.f32 %v4188, %v4239
  %v4291 = vmul.f32 %v4189, %v4240
  %v4292 = vmul.f32 %v4190, %v4241
  %v4293 = vmul.f32 %v4191, %v4242
  %v4294 = vmul.f32 %v4192, %v4243
  %v4295 = vmul.f32 %v4193, %v4244
  %v4296 = vmul.f32 %v4194, %v4245
  %v4297 = vmul.f32 %v4195, %v4246
  %v4298 = vmul.f32 %v4196, %v4247
  %v4299 = vmul.f32 %v4197, %v4248
  %v4300 = vmul.f32 %v4198, %v4249
  %v4301 = vmul.f32 %v4199, %v4250
  %v4302 = vmul.f32 %v4200, %v4251
  %v4303 = vmul.f32 %v4201, %v4252
  %v4304 = vmul.f32 %v4202, %v4253
  %v4305 = vmul.f32 %v4203, %v4254
  %v4306 = vmul.f32 %v4204, %v4255
  %v4307 = vmul.f32 %v4205, %v4256
  %v4308 = vmul.f32 %v4206, %v4257
  %v4309 = vmul.f32 %v4207, %v4258
  %v4310 = vmul.f32 %v4208, %v4259
  %v4311 = vmul.f32 %v4209, %v4260
  %v4312 = vmul.f32 %v4210, %v4261
  %v4313 = vmul.f32 %v4211, %v4262
  %v4314 = vmul.f32 %v4212, %v4263
  %v4315 = vmul.f32 %v4213, %v4264
  %v4316 = vmul.f32 %v4214, %v4265
  %v4317 = vmul.f32 %v4215, %v4266
  %v4318 = vmul.f32 %v4216, %v4267
  %v4319 = vmul.f32 %v4217, %v4268
  %v4320 = vmul.f32 %v4218, %v4269
  %v4321 = vmul.f32 %v4219, %v4270
  %v4322 = vmul.f32 %v4220, %v4271
  %v4323 = vmul.f32 %v4221, %v4272
  %v4324 = vmul.f32 %v4222, %v4273
  %v4325 = vmul.f32 %v4223, %v4274
  %v4326 = vmul.f32 %v4224, %v4275
  %v4327 = vmul.f32 %v4225, %v4276
  %v4328 = vmul.f32 %v4226, %v4277
  %v4329 = vmul.f32 %v4227, %v4278
  %v4330 = vmul.f32 %v4228, %v4279
  %v4331 = vmul.f32 %v4229, %v4280
  %v4332 = vmul.f32 %v4230, %v4281
  %v4333 = vmul.f32 %v3925, %v4282
  %v4334 = vmul.f32 %v3926, %v4283
  %v4335 = vmul.f32 %v3927, %v4284
  %v4336 = vmul.f32 %v3928, %v4285
  %v4337 = vmul.f32 %v3929, %v4286
  %v4338 = vmul.f32 %v3930, %v4287
  %v4339 = vmul.f32 %v3931, %v4288
  %v4340 = vmul.f32 %v3932, %v4289
  %v4341 = vmul.f32 %v3933, %v4290
  %v4342 = vmul.f32 %v3934, %v4291
  %v4343 = vmul.f32 %v3935, %v4292
  %v4344 = vmul.f32 %v3936, %v4293
  %v4345 = vmul.f32 %v3937, %v4294
  %v4346 = vmul.f32 %v3938, %v4295
  %v4347 = vmul.f32 %v3939, %v4296
  %v4348 = vmul.f32 %v3940, %v4297
  %v4349 = vmul.f32 %v3941, %v4298
  %v4350 = vmul.f32 %v3942, %v4299
  %v4351 = vmul.f32 %v3943, %v4300
  %v4352 = vmul.f32 %v3944, %v4301
  %v4353 = vmul.f32 %v3945, %v4302
  %v4354 = vmul.f32 %v3946, %v4303
  %v4355 = vmul.f32 %v3947, %v4304
  %v4356 = vmul.f32 %v3948, %v4305
  %v4357 = vmul.f32 %v3949, %v4306
  %v4358 = vmul.f32 %v3950, %v4307
  %v4359 = vmul.f32 %v3951, %v4308
  %v4360 = vmul.f32 %v3952, %v4309
  %v4361 = vmul.f32 %v3953, %v4310
  %v4362 = vmul.f32 %v3954, %v4311
  %v4363 = vmul.f32 %v3955, %v4312
  %v4364 = vmul.f32 %v3956, %v4313
  %v4365 = vmul.f32 %v3957, %v4314
  %v4366 = vmul.f32 %v3958, %v4315
  %v4367 = vmul.f32 %v3959, %v4316
  %v4368 = vmul.f32 %v3960, %v4317
  %v4369 = vmul.f32 %v3961, %v4318
  %v4370 = vmul.f32 %v3962, %v4319
  %v4371 = vmul.f32 %v3963, %v4320
  %v4372 = vmul.f32 %v3964, %v4321
  %v4373 = vmul.f32 %v3965, %v4322
  %v4374 = vmul.f32 %v3966, %v4323
  %v4375 = vmul.f32 %v3967, %v4324
  %v4376 = vmul.f32 %v3968, %v4325
  %v4377 = vmul.f32 %v3969, %v4326
  %v4378 = vmul.f32 %v3970, %v4327
  %v4379 = vmul.f32 %v3971, %v4328
  %v4380 = vmul.f32 %v3972, %v4329
  %v4381 = vmul.f32 %v3973, %v4330
  %v4382 = vmul.f32 %v3974, %v4331
  %v4383 = vmul.f32 %v3975, %v4332
  %4435 = vrot.lane.b32.xlu0 %v4333, 1
  %v4436 = vpop.permute.xlu0 %4435
  %4437 = vrot.lane.b32.xlu0 %v4334, 1
  %v4438 = vpop.permute.xlu0 %4437
  %4439 = vrot.lane.b32.xlu0 %v4335, 1
  %v4440 = vpop.permute.xlu0 %4439
  %4441 = vrot.lane.b32.xlu0 %v4336, 1
  %v4442 = vpop.permute.xlu0 %4441
  %4443 = vrot.lane.b32.xlu0 %v4337, 1
  %v4444 = vpop.permute.xlu0 %4443
  %4445 = vrot.lane.b32.xlu0 %v4338, 1
  %v4446 = vpop.permute.xlu0 %4445
  %4447 = vrot.lane.b32.xlu0 %v4339, 1
  %v4448 = vpop.permute.xlu0 %4447
  %4449 = vrot.lane.b32.xlu0 %v4340, 1
  %v4450 = vpop.permute.xlu0 %4449
  %4451 = vrot.lane.b32.xlu0 %v4341, 1
  %v4452 = vpop.permute.xlu0 %4451
  %4453 = vrot.lane.b32.xlu0 %v4342, 1
  %v4454 = vpop.permute.xlu0 %4453
  %4455 = vrot.lane.b32.xlu0 %v4343, 1
  %v4456 = vpop.permute.xlu0 %4455
  %4457 = vrot.lane.b32.xlu0 %v4344, 1
  %v4458 = vpop.permute.xlu0 %4457
  %4459 = vrot.lane.b32.xlu0 %v4345, 1
  %v4460 = vpop.permute.xlu0 %4459
  %4461 = vrot.lane.b32.xlu0 %v4346, 1
  %v4462 = vpop.permute.xlu0 %4461
  %4463 = vrot.lane.b32.xlu0 %v4347, 1
  %v4464 = vpop.permute.xlu0 %4463
  %4465 = vrot.lane.b32.xlu0 %v4348, 1
  %v4466 = vpop.permute.xlu0 %4465
  %4467 = vrot.lane.b32.xlu0 %v4349, 1
  %v4468 = vpop.permute.xlu0 %4467
  %4469 = vrot.lane.b32.xlu0 %v4350, 1
  %v4470 = vpop.permute.xlu0 %4469
  %4471 = vrot.lane.b32.xlu0 %v4351, 1
  %v4472 = vpop.permute.xlu0 %4471
  %4473 = vrot.lane.b32.xlu0 %v4352, 1
  %v4474 = vpop.permute.xlu0 %4473
  %4475 = vrot.lane.b32.xlu0 %v4353, 1
  %v4476 = vpop.permute.xlu0 %4475
  %4477 = vrot.lane.b32.xlu0 %v4354, 1
  %v4478 = vpop.permute.xlu0 %4477
  %4479 = vrot.lane.b32.xlu0 %v4355, 1
  %v4480 = vpop.permute.xlu0 %4479
  %4481 = vrot.lane.b32.xlu0 %v4356, 1
  %v4482 = vpop.permute.xlu0 %4481
  %4483 = vrot.lane.b32.xlu0 %v4357, 1
  %v4484 = vpop.permute.xlu0 %4483
  %4485 = vrot.lane.b32.xlu0 %v4358, 1
  %v4486 = vpop.permute.xlu0 %4485
  %4487 = vrot.lane.b32.xlu0 %v4359, 1
  %v4488 = vpop.permute.xlu0 %4487
  %4489 = vrot.lane.b32.xlu0 %v4360, 1
  %v4490 = vpop.permute.xlu0 %4489
  %4491 = vrot.lane.b32.xlu0 %v4361, 1
  %v4492 = vpop.permute.xlu0 %4491
  %4493 = vrot.lane.b32.xlu0 %v4362, 1
  %v4494 = vpop.permute.xlu0 %4493
  %4495 = vrot.lane.b32.xlu0 %v4363, 1
  %v4496 = vpop.permute.xlu0 %4495
  %4497 = vrot.lane.b32.xlu0 %v4364, 1
  %v4498 = vpop.permute.xlu0 %4497
  %4499 = vrot.lane.b32.xlu0 %v4365, 1
  %v4500 = vpop.permute.xlu0 %4499
  %4501 = vrot.lane.b32.xlu0 %v4366, 1
  %v4502 = vpop.permute.xlu0 %4501
  %4503 = vrot.lane.b32.xlu0 %v4367, 1
  %v4504 = vpop.permute.xlu0 %4503
  %4505 = vrot.lane.b32.xlu0 %v4368, 1
  %v4506 = vpop.permute.xlu0 %4505
  %4507 = vrot.lane.b32.xlu0 %v4369, 1
  %v4508 = vpop.permute.xlu0 %4507
  %4509 = vrot.lane.b32.xlu0 %v4370, 1
  %v4510 = vpop.permute.xlu0 %4509
  %4511 = vrot.lane.b32.xlu0 %v4371, 1
  %v4512 = vpop.permute.xlu0 %4511
  %4513 = vrot.lane.b32.xlu0 %v4372, 1
  %v4514 = vpop.permute.xlu0 %4513
  %4515 = vrot.lane.b32.xlu0 %v4373, 1
  %v4516 = vpop.permute.xlu0 %4515
  %4517 = vrot.lane.b32.xlu0 %v4374, 1
  %v4518 = vpop.permute.xlu0 %4517
  %4519 = vrot.lane.b32.xlu0 %v4375, 1
  %v4520 = vpop.permute.xlu0 %4519
  %4521 = vrot.lane.b32.xlu0 %v4376, 1
  %v4522 = vpop.permute.xlu0 %4521
  %4523 = vrot.lane.b32.xlu0 %v4377, 1
  %v4524 = vpop.permute.xlu0 %4523
  %4525 = vrot.lane.b32.xlu0 %v4378, 1
  %v4526 = vpop.permute.xlu0 %4525
  %4527 = vrot.lane.b32.xlu0 %v4379, 1
  %v4528 = vpop.permute.xlu0 %4527
  %4529 = vrot.lane.b32.xlu0 %v4380, 1
  %v4530 = vpop.permute.xlu0 %4529
  %4531 = vrot.lane.b32.xlu0 %v4381, 1
  %v4532 = vpop.permute.xlu0 %4531
  %4533 = vrot.lane.b32.xlu0 %v4382, 1
  %v4534 = vpop.permute.xlu0 %4533
  %4535 = vrot.lane.b32.xlu0 %v4383, 1
  %v4536 = vpop.permute.xlu0 %4535
  %v4588 = vsub.f32 %v4231, %v4436
  %v4589 = vsub.f32 %v4232, %v4438
  %v4590 = vsub.f32 %v4233, %v4440
  %v4591 = vsub.f32 %v4234, %v4442
  %v4592 = vsub.f32 %v4235, %v4444
  %v4593 = vsub.f32 %v4236, %v4446
  %v4594 = vsub.f32 %v4237, %v4448
  %v4595 = vsub.f32 %v4238, %v4450
  %v4596 = vsub.f32 %v4239, %v4452
  %v4597 = vsub.f32 %v4240, %v4454
  %v4598 = vsub.f32 %v4241, %v4456
  %v4599 = vsub.f32 %v4242, %v4458
  %v4600 = vsub.f32 %v4243, %v4460
  %v4601 = vsub.f32 %v4244, %v4462
  %v4602 = vsub.f32 %v4245, %v4464
  %v4603 = vsub.f32 %v4246, %v4466
  %v4604 = vsub.f32 %v4247, %v4468
  %v4605 = vsub.f32 %v4248, %v4470
  %v4606 = vsub.f32 %v4249, %v4472
  %v4607 = vsub.f32 %v4250, %v4474
  %v4608 = vsub.f32 %v4251, %v4476
  %v4609 = vsub.f32 %v4252, %v4478
  %v4610 = vsub.f32 %v4253, %v4480
  %v4611 = vsub.f32 %v4254, %v4482
  %v4612 = vsub.f32 %v4255, %v4484
  %v4613 = vsub.f32 %v4256, %v4486
  %v4614 = vsub.f32 %v4257, %v4488
  %v4615 = vsub.f32 %v4258, %v4490
  %v4616 = vsub.f32 %v4259, %v4492
  %v4617 = vsub.f32 %v4260, %v4494
  %v4618 = vsub.f32 %v4261, %v4496
  %v4619 = vsub.f32 %v4262, %v4498
  %v4620 = vsub.f32 %v4263, %v4500
  %v4621 = vsub.f32 %v4264, %v4502
  %v4622 = vsub.f32 %v4265, %v4504
  %v4623 = vsub.f32 %v4266, %v4506
  %v4624 = vsub.f32 %v4267, %v4508
  %v4625 = vsub.f32 %v4268, %v4510
  %v4626 = vsub.f32 %v4269, %v4512
  %v4627 = vsub.f32 %v4270, %v4514
  %v4628 = vsub.f32 %v4271, %v4516
  %v4629 = vsub.f32 %v4272, %v4518
  %v4630 = vsub.f32 %v4273, %v4520
  %v4631 = vsub.f32 %v4274, %v4522
  %v4632 = vsub.f32 %v4275, %v4524
  %v4633 = vsub.f32 %v4276, %v4526
  %v4634 = vsub.f32 %v4277, %v4528
  %v4635 = vsub.f32 %v4278, %v4530
  %v4636 = vsub.f32 %v4279, %v4532
  %v4637 = vsub.f32 %v4280, %v4534
  %v4638 = vsub.f32 %v4281, %v4536
  %4640 = vset.pattern.permute.xlu0 0
  %4641 = vperm.xlu0 %4640, %v4282
  %v4642 = vpop.permute.xlu0 %4641
  %4645 = vset.pattern.permute.xlu0 0
  %4646 = vperm.xlu0 %4645, %v4283
  %v4647 = vpop.permute.xlu0 %4646
  %4650 = vset.pattern.permute.xlu0 0
  %4651 = vperm.xlu0 %4650, %v4284
  %v4652 = vpop.permute.xlu0 %4651
  %4655 = vset.pattern.permute.xlu0 0
  %4656 = vperm.xlu0 %4655, %v4285
  %v4657 = vpop.permute.xlu0 %4656
  %4660 = vset.pattern.permute.xlu0 0
  %4661 = vperm.xlu0 %4660, %v4286
  %v4662 = vpop.permute.xlu0 %4661
  %4665 = vset.pattern.permute.xlu0 0
  %4666 = vperm.xlu0 %4665, %v4287
  %v4667 = vpop.permute.xlu0 %4666
  %4670 = vset.pattern.permute.xlu0 0
  %4671 = vperm.xlu0 %4670, %v4288
  %v4672 = vpop.permute.xlu0 %4671
  %4675 = vset.pattern.permute.xlu0 0
  %4676 = vperm.xlu0 %4675, %v4289
  %v4677 = vpop.permute.xlu0 %4676
  %4680 = vset.pattern.permute.xlu0 0
  %4681 = vperm.xlu0 %4680, %v4290
  %v4682 = vpop.permute.xlu0 %4681
  %4685 = vset.pattern.permute.xlu0 0
  %4686 = vperm.xlu0 %4685, %v4291
  %v4687 = vpop.permute.xlu0 %4686
  %4690 = vset.pattern.permute.xlu0 0
  %4691 = vperm.xlu0 %4690, %v4292
  %v4692 = vpop.permute.xlu0 %4691
  %4695 = vset.pattern.permute.xlu0 0
  %4696 = vperm.xlu0 %4695, %v4293
  %v4697 = vpop.permute.xlu0 %4696
  %4700 = vset.pattern.permute.xlu0 0
  %4701 = vperm.xlu0 %4700, %v4294
  %v4702 = vpop.permute.xlu0 %4701
  %4705 = vset.pattern.permute.xlu0 0
  %4706 = vperm.xlu0 %4705, %v4295
  %v4707 = vpop.permute.xlu0 %4706
  %4710 = vset.pattern.permute.xlu0 0
  %4711 = vperm.xlu0 %4710, %v4296
  %v4712 = vpop.permute.xlu0 %4711
  %4715 = vset.pattern.permute.xlu0 0
  %4716 = vperm.xlu0 %4715, %v4297
  %v4717 = vpop.permute.xlu0 %4716
  %4720 = vset.pattern.permute.xlu0 0
  %4721 = vperm.xlu0 %4720, %v4298
  %v4722 = vpop.permute.xlu0 %4721
  %4725 = vset.pattern.permute.xlu0 0
  %4726 = vperm.xlu0 %4725, %v4299
  %v4727 = vpop.permute.xlu0 %4726
  %4730 = vset.pattern.permute.xlu0 0
  %4731 = vperm.xlu0 %4730, %v4300
  %v4732 = vpop.permute.xlu0 %4731
  %4735 = vset.pattern.permute.xlu0 0
  %4736 = vperm.xlu0 %4735, %v4301
  %v4737 = vpop.permute.xlu0 %4736
  %4740 = vset.pattern.permute.xlu0 0
  %4741 = vperm.xlu0 %4740, %v4302
  %v4742 = vpop.permute.xlu0 %4741
  %4745 = vset.pattern.permute.xlu0 0
  %4746 = vperm.xlu0 %4745, %v4303
  %v4747 = vpop.permute.xlu0 %4746
  %4750 = vset.pattern.permute.xlu0 0
  %4751 = vperm.xlu0 %4750, %v4304
  %v4752 = vpop.permute.xlu0 %4751
  %4755 = vset.pattern.permute.xlu0 0
  %4756 = vperm.xlu0 %4755, %v4305
  %v4757 = vpop.permute.xlu0 %4756
  %4760 = vset.pattern.permute.xlu0 0
  %4761 = vperm.xlu0 %4760, %v4306
  %v4762 = vpop.permute.xlu0 %4761
  %4765 = vset.pattern.permute.xlu0 0
  %4766 = vperm.xlu0 %4765, %v4307
  %v4767 = vpop.permute.xlu0 %4766
  %4770 = vset.pattern.permute.xlu0 0
  %4771 = vperm.xlu0 %4770, %v4308
  %v4772 = vpop.permute.xlu0 %4771
  %4775 = vset.pattern.permute.xlu0 0
  %4776 = vperm.xlu0 %4775, %v4309
  %v4777 = vpop.permute.xlu0 %4776
  %4780 = vset.pattern.permute.xlu0 0
  %4781 = vperm.xlu0 %4780, %v4310
  %v4782 = vpop.permute.xlu0 %4781
  %4785 = vset.pattern.permute.xlu0 0
  %4786 = vperm.xlu0 %4785, %v4311
  %v4787 = vpop.permute.xlu0 %4786
  %4790 = vset.pattern.permute.xlu0 0
  %4791 = vperm.xlu0 %4790, %v4312
  %v4792 = vpop.permute.xlu0 %4791
  %4795 = vset.pattern.permute.xlu0 0
  %4796 = vperm.xlu0 %4795, %v4313
  %v4797 = vpop.permute.xlu0 %4796
  %4800 = vset.pattern.permute.xlu0 0
  %4801 = vperm.xlu0 %4800, %v4314
  %v4802 = vpop.permute.xlu0 %4801
  %4805 = vset.pattern.permute.xlu0 0
  %4806 = vperm.xlu0 %4805, %v4315
  %v4807 = vpop.permute.xlu0 %4806
  %4810 = vset.pattern.permute.xlu0 0
  %4811 = vperm.xlu0 %4810, %v4316
  %v4812 = vpop.permute.xlu0 %4811
  %4815 = vset.pattern.permute.xlu0 0
  %4816 = vperm.xlu0 %4815, %v4317
  %v4817 = vpop.permute.xlu0 %4816
  %4820 = vset.pattern.permute.xlu0 0
  %4821 = vperm.xlu0 %4820, %v4318
  %v4822 = vpop.permute.xlu0 %4821
  %4825 = vset.pattern.permute.xlu0 0
  %4826 = vperm.xlu0 %4825, %v4319
  %v4827 = vpop.permute.xlu0 %4826
  %4830 = vset.pattern.permute.xlu0 0
  %4831 = vperm.xlu0 %4830, %v4320
  %v4832 = vpop.permute.xlu0 %4831
  %4835 = vset.pattern.permute.xlu0 0
  %4836 = vperm.xlu0 %4835, %v4321
  %v4837 = vpop.permute.xlu0 %4836
  %4840 = vset.pattern.permute.xlu0 0
  %4841 = vperm.xlu0 %4840, %v4322
  %v4842 = vpop.permute.xlu0 %4841
  %4845 = vset.pattern.permute.xlu0 0
  %4846 = vperm.xlu0 %4845, %v4323
  %v4847 = vpop.permute.xlu0 %4846
  %4850 = vset.pattern.permute.xlu0 0
  %4851 = vperm.xlu0 %4850, %v4324
  %v4852 = vpop.permute.xlu0 %4851
  %4855 = vset.pattern.permute.xlu0 0
  %4856 = vperm.xlu0 %4855, %v4325
  %v4857 = vpop.permute.xlu0 %4856
  %4860 = vset.pattern.permute.xlu0 0
  %4861 = vperm.xlu0 %4860, %v4326
  %v4862 = vpop.permute.xlu0 %4861
  %4865 = vset.pattern.permute.xlu0 0
  %4866 = vperm.xlu0 %4865, %v4327
  %v4867 = vpop.permute.xlu0 %4866
  %4870 = vset.pattern.permute.xlu0 0
  %4871 = vperm.xlu0 %4870, %v4328
  %v4872 = vpop.permute.xlu0 %4871
  %4875 = vset.pattern.permute.xlu0 0
  %4876 = vperm.xlu0 %4875, %v4329
  %v4877 = vpop.permute.xlu0 %4876
  %4880 = vset.pattern.permute.xlu0 0
  %4881 = vperm.xlu0 %4880, %v4330
  %v4882 = vpop.permute.xlu0 %4881
  %4885 = vset.pattern.permute.xlu0 0
  %4886 = vperm.xlu0 %4885, %v4331
  %v4887 = vpop.permute.xlu0 %4886
  %4890 = vset.pattern.permute.xlu0 0
  %4891 = vperm.xlu0 %4890, %v4332
  %v4892 = vpop.permute.xlu0 %4891
  %v4894 = vmul.f32 %v2029, %v4642
  %v4895 = vmul.f32 %v2031, %v4642
  %v4896 = vmul.f32 %v2035, %v4647
  %v4897 = vmul.f32 %v2037, %v4647
  %v4898 = vmul.f32 %v2041, %v4652
  %v4899 = vmul.f32 %v2043, %v4652
  %v4900 = vmul.f32 %v2121, %v4657
  %v4901 = vmul.f32 %v2123, %v4657
  %v4902 = vmul.f32 %v2127, %v4662
  %v4903 = vmul.f32 %v2129, %v4662
  %v4904 = vmul.f32 %v2133, %v4667
  %v4905 = vmul.f32 %v2135, %v4667
  %v4906 = vmul.f32 %v2213, %v4672
  %v4907 = vmul.f32 %v2215, %v4672
  %v4908 = vmul.f32 %v2219, %v4677
  %v4909 = vmul.f32 %v2221, %v4677
  %v4910 = vmul.f32 %v2225, %v4682
  %v4911 = vmul.f32 %v2227, %v4682
  %v4912 = vmul.f32 %v2305, %v4687
  %v4913 = vmul.f32 %v2307, %v4687
  %v4914 = vmul.f32 %v2311, %v4692
  %v4915 = vmul.f32 %v2313, %v4692
  %v4916 = vmul.f32 %v2317, %v4697
  %v4917 = vmul.f32 %v2319, %v4697
  %v4918 = vmul.f32 %v2397, %v4702
  %v4919 = vmul.f32 %v2399, %v4702
  %v4920 = vmul.f32 %v2403, %v4707
  %v4921 = vmul.f32 %v2405, %v4707
  %v4922 = vmul.f32 %v2409, %v4712
  %v4923 = vmul.f32 %v2411, %v4712
  %v4924 = vmul.f32 %v2489, %v4717
  %v4925 = vmul.f32 %v2491, %v4717
  %v4926 = vmul.f32 %v2495, %v4722
  %v4927 = vmul.f32 %v2497, %v4722
  %v4928 = vmul.f32 %v2501, %v4727
  %v4929 = vmul.f32 %v2503, %v4727
  %v4930 = vmul.f32 %v2581, %v4732
  %v4931 = vmul.f32 %v2583, %v4732
  %v4932 = vmul.f32 %v2587, %v4737
  %v4933 = vmul.f32 %v2589, %v4737
  %v4934 = vmul.f32 %v2593, %v4742
  %v4935 = vmul.f32 %v2595, %v4742
  %v4936 = vmul.f32 %v2673, %v4747
  %v4937 = vmul.f32 %v2675, %v4747
  %v4938 = vmul.f32 %v2679, %v4752
  %v4939 = vmul.f32 %v2681, %v4752
  %v4940 = vmul.f32 %v2685, %v4757
  %v4941 = vmul.f32 %v2687, %v4757
  %v4942 = vmul.f32 %v2765, %v4762
  %v4943 = vmul.f32 %v2767, %v4762
  %v4944 = vmul.f32 %v2771, %v4767
  %v4945 = vmul.f32 %v2773, %v4767
  %v4946 = vmul.f32 %v2777, %v4772
  %v4947 = vmul.f32 %v2779, %v4772
  %v4948 = vmul.f32 %v2857, %v4777
  %v4949 = vmul.f32 %v2859, %v4777
  %v4950 = vmul.f32 %v2863, %v4782
  %v4951 = vmul.f32 %v2865, %v4782
  %v4952 = vmul.f32 %v2869, %v4787
  %v4953 = vmul.f32 %v2871, %v4787
  %v4954 = vmul.f32 %v2949, %v4792
  %v4955 = vmul.f32 %v2951, %v4792
  %v4956 = vmul.f32 %v2955, %v4797
  %v4957 = vmul.f32 %v2957, %v4797
  %v4958 = vmul.f32 %v2961, %v4802
  %v4959 = vmul.f32 %v2963, %v4802
  %v4960 = vmul.f32 %v3041, %v4807
  %v4961 = vmul.f32 %v3043, %v4807
  %v4962 = vmul.f32 %v3047, %v4812
  %v4963 = vmul.f32 %v3049, %v4812
  %v4964 = vmul.f32 %v3053, %v4817
  %v4965 = vmul.f32 %v3055, %v4817
  %v4966 = vmul.f32 %v3133, %v4822
  %v4967 = vmul.f32 %v3135, %v4822
  %v4968 = vmul.f32 %v3139, %v4827
  %v4969 = vmul.f32 %v3141, %v4827
  %v4970 = vmul.f32 %v3145, %v4832
  %v4971 = vmul.f32 %v3147, %v4832
  %v4972 = vmul.f32 %v3225, %v4837
  %v4973 = vmul.f32 %v3227, %v4837
  %v4974 = vmul.f32 %v3231, %v4842
  %v4975 = vmul.f32 %v3233, %v4842
  %v4976 = vmul.f32 %v3237, %v4847
  %v4977 = vmul.f32 %v3239, %v4847
  %v4978 = vmul.f32 %v3317, %v4852
  %v4979 = vmul.f32 %v3319, %v4852
  %v4980 = vmul.f32 %v3323, %v4857
  %v4981 = vmul.f32 %v3325, %v4857
  %v4982 = vmul.f32 %v3329, %v4862
  %v4983 = vmul.f32 %v3331, %v4862
  %v4984 = vmul.f32 %v3409, %v4867
  %v4985 = vmul.f32 %v3411, %v4867
  %v4986 = vmul.f32 %v3415, %v4872
  %v4987 = vmul.f32 %v3417, %v4872
  %v4988 = vmul.f32 %v3421, %v4877
  %v4989 = vmul.f32 %v3423, %v4877
  %v4990 = vmul.f32 %v3501, %v4882
  %v4991 = vmul.f32 %v3503, %v4882
  %v4992 = vmul.f32 %v3507, %v4887
  %v4993 = vmul.f32 %v3509, %v4887
  %v4994 = vmul.f32 %v3513, %v4892
  %v4995 = vmul.f32 %v3515, %v4892
  %4997 = vset.pattern.permute.xlu0 1
  %4998 = vperm.xlu0 %4997, %v4588
  %v4999 = vpop.permute.xlu0 %4998
  %5002 = vset.pattern.permute.xlu0 1
  %5003 = vperm.xlu0 %5002, %v4589
  %v5004 = vpop.permute.xlu0 %5003
  %5007 = vset.pattern.permute.xlu0 1
  %5008 = vperm.xlu0 %5007, %v4590
  %v5009 = vpop.permute.xlu0 %5008
  %5012 = vset.pattern.permute.xlu0 1
  %5013 = vperm.xlu0 %5012, %v4591
  %v5014 = vpop.permute.xlu0 %5013
  %5017 = vset.pattern.permute.xlu0 1
  %5018 = vperm.xlu0 %5017, %v4592
  %v5019 = vpop.permute.xlu0 %5018
  %5022 = vset.pattern.permute.xlu0 1
  %5023 = vperm.xlu0 %5022, %v4593
  %v5024 = vpop.permute.xlu0 %5023
  %5027 = vset.pattern.permute.xlu0 1
  %5028 = vperm.xlu0 %5027, %v4594
  %v5029 = vpop.permute.xlu0 %5028
  %5032 = vset.pattern.permute.xlu0 1
  %5033 = vperm.xlu0 %5032, %v4595
  %v5034 = vpop.permute.xlu0 %5033
  %5037 = vset.pattern.permute.xlu0 1
  %5038 = vperm.xlu0 %5037, %v4596
  %v5039 = vpop.permute.xlu0 %5038
  %5042 = vset.pattern.permute.xlu0 1
  %5043 = vperm.xlu0 %5042, %v4597
  %v5044 = vpop.permute.xlu0 %5043
  %5047 = vset.pattern.permute.xlu0 1
  %5048 = vperm.xlu0 %5047, %v4598
  %v5049 = vpop.permute.xlu0 %5048
  %5052 = vset.pattern.permute.xlu0 1
  %5053 = vperm.xlu0 %5052, %v4599
  %v5054 = vpop.permute.xlu0 %5053
  %5057 = vset.pattern.permute.xlu0 1
  %5058 = vperm.xlu0 %5057, %v4600
  %v5059 = vpop.permute.xlu0 %5058
  %5062 = vset.pattern.permute.xlu0 1
  %5063 = vperm.xlu0 %5062, %v4601
  %v5064 = vpop.permute.xlu0 %5063
  %5067 = vset.pattern.permute.xlu0 1
  %5068 = vperm.xlu0 %5067, %v4602
  %v5069 = vpop.permute.xlu0 %5068
  %5072 = vset.pattern.permute.xlu0 1
  %5073 = vperm.xlu0 %5072, %v4603
  %v5074 = vpop.permute.xlu0 %5073
  %5077 = vset.pattern.permute.xlu0 1
  %5078 = vperm.xlu0 %5077, %v4604
  %v5079 = vpop.permute.xlu0 %5078
  %5082 = vset.pattern.permute.xlu0 1
  %5083 = vperm.xlu0 %5082, %v4605
  %v5084 = vpop.permute.xlu0 %5083
  %5087 = vset.pattern.permute.xlu0 1
  %5088 = vperm.xlu0 %5087, %v4606
  %v5089 = vpop.permute.xlu0 %5088
  %5092 = vset.pattern.permute.xlu0 1
  %5093 = vperm.xlu0 %5092, %v4607
  %v5094 = vpop.permute.xlu0 %5093
  %5097 = vset.pattern.permute.xlu0 1
  %5098 = vperm.xlu0 %5097, %v4608
  %v5099 = vpop.permute.xlu0 %5098
  %5102 = vset.pattern.permute.xlu0 1
  %5103 = vperm.xlu0 %5102, %v4609
  %v5104 = vpop.permute.xlu0 %5103
  %5107 = vset.pattern.permute.xlu0 1
  %5108 = vperm.xlu0 %5107, %v4610
  %v5109 = vpop.permute.xlu0 %5108
  %5112 = vset.pattern.permute.xlu0 1
  %5113 = vperm.xlu0 %5112, %v4611
  %v5114 = vpop.permute.xlu0 %5113
  %5117 = vset.pattern.permute.xlu0 1
  %5118 = vperm.xlu0 %5117, %v4612
  %v5119 = vpop.permute.xlu0 %5118
  %5122 = vset.pattern.permute.xlu0 1
  %5123 = vperm.xlu0 %5122, %v4613
  %v5124 = vpop.permute.xlu0 %5123
  %5127 = vset.pattern.permute.xlu0 1
  %5128 = vperm.xlu0 %5127, %v4614
  %v5129 = vpop.permute.xlu0 %5128
  %5132 = vset.pattern.permute.xlu0 1
  %5133 = vperm.xlu0 %5132, %v4615
  %v5134 = vpop.permute.xlu0 %5133
  %5137 = vset.pattern.permute.xlu0 1
  %5138 = vperm.xlu0 %5137, %v4616
  %v5139 = vpop.permute.xlu0 %5138
  %5142 = vset.pattern.permute.xlu0 1
  %5143 = vperm.xlu0 %5142, %v4617
  %v5144 = vpop.permute.xlu0 %5143
  %5147 = vset.pattern.permute.xlu0 1
  %5148 = vperm.xlu0 %5147, %v4618
  %v5149 = vpop.permute.xlu0 %5148
  %5152 = vset.pattern.permute.xlu0 1
  %5153 = vperm.xlu0 %5152, %v4619
  %v5154 = vpop.permute.xlu0 %5153
  %5157 = vset.pattern.permute.xlu0 1
  %5158 = vperm.xlu0 %5157, %v4620
  %v5159 = vpop.permute.xlu0 %5158
  %5162 = vset.pattern.permute.xlu0 1
  %5163 = vperm.xlu0 %5162, %v4621
  %v5164 = vpop.permute.xlu0 %5163
  %5167 = vset.pattern.permute.xlu0 1
  %5168 = vperm.xlu0 %5167, %v4622
  %v5169 = vpop.permute.xlu0 %5168
  %5172 = vset.pattern.permute.xlu0 1
  %5173 = vperm.xlu0 %5172, %v4623
  %v5174 = vpop.permute.xlu0 %5173
  %5177 = vset.pattern.permute.xlu0 1
  %5178 = vperm.xlu0 %5177, %v4624
  %v5179 = vpop.permute.xlu0 %5178
  %5182 = vset.pattern.permute.xlu0 1
  %5183 = vperm.xlu0 %5182, %v4625
  %v5184 = vpop.permute.xlu0 %5183
  %5187 = vset.pattern.permute.xlu0 1
  %5188 = vperm.xlu0 %5187, %v4626
  %v5189 = vpop.permute.xlu0 %5188
  %5192 = vset.pattern.permute.xlu0 1
  %5193 = vperm.xlu0 %5192, %v4627
  %v5194 = vpop.permute.xlu0 %5193
  %5197 = vset.pattern.permute.xlu0 1
  %5198 = vperm.xlu0 %5197, %v4628
  %v5199 = vpop.permute.xlu0 %5198
  %5202 = vset.pattern.permute.xlu0 1
  %5203 = vperm.xlu0 %5202, %v4629
  %v5204 = vpop.permute.xlu0 %5203
  %5207 = vset.pattern.permute.xlu0 1
  %5208 = vperm.xlu0 %5207, %v4630
  %v5209 = vpop.permute.xlu0 %5208
  %5212 = vset.pattern.permute.xlu0 1
  %5213 = vperm.xlu0 %5212, %v4631
  %v5214 = vpop.permute.xlu0 %5213
  %5217 = vset.pattern.permute.xlu0 1
  %5218 = vperm.xlu0 %5217, %v4632
  %v5219 = vpop.permute.xlu0 %5218
  %5222 = vset.pattern.permute.xlu0 1
  %5223 = vperm.xlu0 %5222, %v4633
  %v5224 = vpop.permute.xlu0 %5223
  %5227 = vset.pattern.permute.xlu0 1
  %5228 = vperm.xlu0 %5227, %v4634
  %v5229 = vpop.permute.xlu0 %5228
  %5232 = vset.pattern.permute.xlu0 1
  %5233 = vperm.xlu0 %5232, %v4635
  %v5234 = vpop.permute.xlu0 %5233
  %5237 = vset.pattern.permute.xlu0 1
  %5238 = vperm.xlu0 %5237, %v4636
  %v5239 = vpop.permute.xlu0 %5238
  %5242 = vset.pattern.permute.xlu0 1
  %5243 = vperm.xlu0 %5242, %v4637
  %v5244 = vpop.permute.xlu0 %5243
  %5247 = vset.pattern.permute.xlu0 1
  %5248 = vperm.xlu0 %5247, %v4638
  %v5249 = vpop.permute.xlu0 %5248
  %v5251 = vadd.f32 %v4894, %v4999
  %v5252 = vadd.f32 %v4895, %v4999
  %v5253 = vadd.f32 %v4896, %v5004
  %v5254 = vadd.f32 %v4897, %v5004
  %v5255 = vadd.f32 %v4898, %v5009
  %v5256 = vadd.f32 %v4899, %v5009
  %v5257 = vadd.f32 %v4900, %v5014
  %v5258 = vadd.f32 %v4901, %v5014
  %v5259 = vadd.f32 %v4902, %v5019
  %v5260 = vadd.f32 %v4903, %v5019
  %v5261 = vadd.f32 %v4904, %v5024
  %v5262 = vadd.f32 %v4905, %v5024
  %v5263 = vadd.f32 %v4906, %v5029
  %v5264 = vadd.f32 %v4907, %v5029
  %v5265 = vadd.f32 %v4908, %v5034
  %v5266 = vadd.f32 %v4909, %v5034
  %v5267 = vadd.f32 %v4910, %v5039
  %v5268 = vadd.f32 %v4911, %v5039
  %v5269 = vadd.f32 %v4912, %v5044
  %v5270 = vadd.f32 %v4913, %v5044
  %v5271 = vadd.f32 %v4914, %v5049
  %v5272 = vadd.f32 %v4915, %v5049
  %v5273 = vadd.f32 %v4916, %v5054
  %v5274 = vadd.f32 %v4917, %v5054
  %v5275 = vadd.f32 %v4918, %v5059
  %v5276 = vadd.f32 %v4919, %v5059
  %v5277 = vadd.f32 %v4920, %v5064
  %v5278 = vadd.f32 %v4921, %v5064
  %v5279 = vadd.f32 %v4922, %v5069
  %v5280 = vadd.f32 %v4923, %v5069
  %v5281 = vadd.f32 %v4924, %v5074
  %v5282 = vadd.f32 %v4925, %v5074
  %v5283 = vadd.f32 %v4926, %v5079
  %v5284 = vadd.f32 %v4927, %v5079
  %v5285 = vadd.f32 %v4928, %v5084
  %v5286 = vadd.f32 %v4929, %v5084
  %v5287 = vadd.f32 %v4930, %v5089
  %v5288 = vadd.f32 %v4931, %v5089
  %v5289 = vadd.f32 %v4932, %v5094
  %v5290 = vadd.f32 %v4933, %v5094
  %v5291 = vadd.f32 %v4934, %v5099
  %v5292 = vadd.f32 %v4935, %v5099
  %v5293 = vadd.f32 %v4936, %v5104
  %v5294 = vadd.f32 %v4937, %v5104
  %v5295 = vadd.f32 %v4938, %v5109
  %v5296 = vadd.f32 %v4939, %v5109
  %v5297 = vadd.f32 %v4940, %v5114
  %v5298 = vadd.f32 %v4941, %v5114
  %v5299 = vadd.f32 %v4942, %v5119
  %v5300 = vadd.f32 %v4943, %v5119
  %v5301 = vadd.f32 %v4944, %v5124
  %v5302 = vadd.f32 %v4945, %v5124
  %v5303 = vadd.f32 %v4946, %v5129
  %v5304 = vadd.f32 %v4947, %v5129
  %v5305 = vadd.f32 %v4948, %v5134
  %v5306 = vadd.f32 %v4949, %v5134
  %v5307 = vadd.f32 %v4950, %v5139
  %v5308 = vadd.f32 %v4951, %v5139
  %v5309 = vadd.f32 %v4952, %v5144
  %v5310 = vadd.f32 %v4953, %v5144
  %v5311 = vadd.f32 %v4954, %v5149
  %v5312 = vadd.f32 %v4955, %v5149
  %v5313 = vadd.f32 %v4956, %v5154
  %v5314 = vadd.f32 %v4957, %v5154
  %v5315 = vadd.f32 %v4958, %v5159
  %v5316 = vadd.f32 %v4959, %v5159
  %v5317 = vadd.f32 %v4960, %v5164
  %v5318 = vadd.f32 %v4961, %v5164
  %v5319 = vadd.f32 %v4962, %v5169
  %v5320 = vadd.f32 %v4963, %v5169
  %v5321 = vadd.f32 %v4964, %v5174
  %v5322 = vadd.f32 %v4965, %v5174
  %v5323 = vadd.f32 %v4966, %v5179
  %v5324 = vadd.f32 %v4967, %v5179
  %v5325 = vadd.f32 %v4968, %v5184
  %v5326 = vadd.f32 %v4969, %v5184
  %v5327 = vadd.f32 %v4970, %v5189
  %v5328 = vadd.f32 %v4971, %v5189
  %v5329 = vadd.f32 %v4972, %v5194
  %v5330 = vadd.f32 %v4973, %v5194
  %v5331 = vadd.f32 %v4974, %v5199
  %v5332 = vadd.f32 %v4975, %v5199
  %v5333 = vadd.f32 %v4976, %v5204
  %v5334 = vadd.f32 %v4977, %v5204
  %v5335 = vadd.f32 %v4978, %v5209
  %v5336 = vadd.f32 %v4979, %v5209
  %v5337 = vadd.f32 %v4980, %v5214
  %v5338 = vadd.f32 %v4981, %v5214
  %v5339 = vadd.f32 %v4982, %v5219
  %v5340 = vadd.f32 %v4983, %v5219
  %v5341 = vadd.f32 %v4984, %v5224
  %v5342 = vadd.f32 %v4985, %v5224
  %v5343 = vadd.f32 %v4986, %v5229
  %v5344 = vadd.f32 %v4987, %v5229
  %v5345 = vadd.f32 %v4988, %v5234
  %v5346 = vadd.f32 %v4989, %v5234
  %v5347 = vadd.f32 %v4990, %v5239
  %v5348 = vadd.f32 %v4991, %v5239
  %v5349 = vadd.f32 %v4992, %v5244
  %v5350 = vadd.f32 %v4993, %v5244
  %v5351 = vadd.f32 %v4994, %v5249
  %v5352 = vadd.f32 %v4995, %v5249
  %v5353 = vmax.f32 %v5251, 0.0
  %v5354 = vmax.f32 %v5252, 0.0
  %v5355 = vmax.f32 %v5253, 0.0
  %v5356 = vmax.f32 %v5254, 0.0
  %v5357 = vmax.f32 %v5255, 0.0
  %v5358 = vmax.f32 %v5256, 0.0
  %v5359 = vmax.f32 %v5257, 0.0
  %v5360 = vmax.f32 %v5258, 0.0
  %v5361 = vmax.f32 %v5259, 0.0
  %v5362 = vmax.f32 %v5260, 0.0
  %v5363 = vmax.f32 %v5261, 0.0
  %v5364 = vmax.f32 %v5262, 0.0
  %v5365 = vmax.f32 %v5263, 0.0
  %v5366 = vmax.f32 %v5264, 0.0
  %v5367 = vmax.f32 %v5265, 0.0
  %v5368 = vmax.f32 %v5266, 0.0
  %v5369 = vmax.f32 %v5267, 0.0
  %v5370 = vmax.f32 %v5268, 0.0
  %v5371 = vmax.f32 %v5269, 0.0
  %v5372 = vmax.f32 %v5270, 0.0
  %v5373 = vmax.f32 %v5271, 0.0
  %v5374 = vmax.f32 %v5272, 0.0
  %v5375 = vmax.f32 %v5273, 0.0
  %v5376 = vmax.f32 %v5274, 0.0
  %v5377 = vmax.f32 %v5275, 0.0
  %v5378 = vmax.f32 %v5276, 0.0
  %v5379 = vmax.f32 %v5277, 0.0
  %v5380 = vmax.f32 %v5278, 0.0
  %v5381 = vmax.f32 %v5279, 0.0
  %v5382 = vmax.f32 %v5280, 0.0
  %v5383 = vmax.f32 %v5281, 0.0
  %v5384 = vmax.f32 %v5282, 0.0
  %v5385 = vmax.f32 %v5283, 0.0
  %v5386 = vmax.f32 %v5284, 0.0
  %v5387 = vmax.f32 %v5285, 0.0
  %v5388 = vmax.f32 %v5286, 0.0
  %v5389 = vmax.f32 %v5287, 0.0
  %v5390 = vmax.f32 %v5288, 0.0
  %v5391 = vmax.f32 %v5289, 0.0
  %v5392 = vmax.f32 %v5290, 0.0
  %v5393 = vmax.f32 %v5291, 0.0
  %v5394 = vmax.f32 %v5292, 0.0
  %v5395 = vmax.f32 %v5293, 0.0
  %v5396 = vmax.f32 %v5294, 0.0
  %v5397 = vmax.f32 %v5295, 0.0
  %v5398 = vmax.f32 %v5296, 0.0
  %v5399 = vmax.f32 %v5297, 0.0
  %v5400 = vmax.f32 %v5298, 0.0
  %v5401 = vmax.f32 %v5299, 0.0
  %v5402 = vmax.f32 %v5300, 0.0
  %v5403 = vmax.f32 %v5301, 0.0
  %v5404 = vmax.f32 %v5302, 0.0
  %v5405 = vmax.f32 %v5303, 0.0
  %v5406 = vmax.f32 %v5304, 0.0
  %v5407 = vmax.f32 %v5305, 0.0
  %v5408 = vmax.f32 %v5306, 0.0
  %v5409 = vmax.f32 %v5307, 0.0
  %v5410 = vmax.f32 %v5308, 0.0
  %v5411 = vmax.f32 %v5309, 0.0
  %v5412 = vmax.f32 %v5310, 0.0
  %v5413 = vmax.f32 %v5311, 0.0
  %v5414 = vmax.f32 %v5312, 0.0
  %v5415 = vmax.f32 %v5313, 0.0
  %v5416 = vmax.f32 %v5314, 0.0
  %v5417 = vmax.f32 %v5315, 0.0
  %v5418 = vmax.f32 %v5316, 0.0
  %v5419 = vmax.f32 %v5317, 0.0
  %v5420 = vmax.f32 %v5318, 0.0
  %v5421 = vmax.f32 %v5319, 0.0
  %v5422 = vmax.f32 %v5320, 0.0
  %v5423 = vmax.f32 %v5321, 0.0
  %v5424 = vmax.f32 %v5322, 0.0
  %v5425 = vmax.f32 %v5323, 0.0
  %v5426 = vmax.f32 %v5324, 0.0
  %v5427 = vmax.f32 %v5325, 0.0
  %v5428 = vmax.f32 %v5326, 0.0
  %v5429 = vmax.f32 %v5327, 0.0
  %v5430 = vmax.f32 %v5328, 0.0
  %v5431 = vmax.f32 %v5329, 0.0
  %v5432 = vmax.f32 %v5330, 0.0
  %v5433 = vmax.f32 %v5331, 0.0
  %v5434 = vmax.f32 %v5332, 0.0
  %v5435 = vmax.f32 %v5333, 0.0
  %v5436 = vmax.f32 %v5334, 0.0
  %v5437 = vmax.f32 %v5335, 0.0
  %v5438 = vmax.f32 %v5336, 0.0
  %v5439 = vmax.f32 %v5337, 0.0
  %v5440 = vmax.f32 %v5338, 0.0
  %v5441 = vmax.f32 %v5339, 0.0
  %v5442 = vmax.f32 %v5340, 0.0
  %v5443 = vmax.f32 %v5341, 0.0
  %v5444 = vmax.f32 %v5342, 0.0
  %v5445 = vmax.f32 %v5343, 0.0
  %v5446 = vmax.f32 %v5344, 0.0
  %v5447 = vmax.f32 %v5345, 0.0
  %v5448 = vmax.f32 %v5346, 0.0
  %v5449 = vmax.f32 %v5347, 0.0
  %v5450 = vmax.f32 %v5348, 0.0
  %v5451 = vmax.f32 %v5349, 0.0
  %v5452 = vmax.f32 %v5350, 0.0
  %v5453 = vmax.f32 %v5351, 0.0
  %v5454 = vmax.f32 %v5352, 0.0
  %5455 = vst [vmem:[%s3] sm:$0xff] %v5353
  %5456 = vst [vmem:[%s3 + $0x8] sm:$0xff] %v5354
  %5457 = vst [vmem:[%s3 + $0x10] sm:$0xff] %v5355
  %5458 = vst [vmem:[%s3 + $0x18] sm:$0xff] %v5356
  %5459 = vst [vmem:[%s3 + $0x20] sm:$0xff] %v5357
  %5460 = vst [vmem:[%s3 + $0x28] sm:$0xff] %v5358
  %5461 = vst [vmem:[%s3 + $0x30] sm:$0xff] %v5359
  %5462 = vst [vmem:[%s3 + $0x38] sm:$0xff] %v5360
  %5463 = vst [vmem:[%s3 + $0x40] sm:$0xff] %v5361
  %5464 = vst [vmem:[%s3 + $0x48] sm:$0xff] %v5362
  %5465 = vst [vmem:[%s3 + $0x50] sm:$0xff] %v5363
  %5466 = vst [vmem:[%s3 + $0x58] sm:$0xff] %v5364
  %5467 = vst [vmem:[%s3 + $0x60] sm:$0xff] %v5365
  %5468 = vst [vmem:[%s3 + $0x68] sm:$0xff] %v5366
  %5469 = vst [vmem:[%s3 + $0x70] sm:$0xff] %v5367
  %5470 = vst [vmem:[%s3 + $0x78] sm:$0xff] %v5368
  %5471 = vst [vmem:[%s3 + $0x80] sm:$0xff] %v5369
  %5472 = vst [vmem:[%s3 + $0x88] sm:$0xff] %v5370
  %5473 = vst [vmem:[%s3 + $0x90] sm:$0xff] %v5371
  %5474 = vst [vmem:[%s3 + $0x98] sm:$0xff] %v5372
  %5475 = vst [vmem:[%s3 + $0xa0] sm:$0xff] %v5373
  %5476 = vst [vmem:[%s3 + $0xa8] sm:$0xff] %v5374
  %5477 = vst [vmem:[%s3 + $0xb0] sm:$0xff] %v5375
  %5478 = vst [vmem:[%s3 + $0xb8] sm:$0xff] %v5376
  %5479 = vst [vmem:[%s3 + $0xc0] sm:$0xff] %v5377
  %5480 = vst [vmem:[%s3 + $0xc8] sm:$0xff] %v5378
  %5481 = vst [vmem:[%s3 + $0xd0] sm:$0xff] %v5379
  %5482 = vst [vmem:[%s3 + $0xd8] sm:$0xff] %v5380
  %5483 = vst [vmem:[%s3 + $0xe0] sm:$0xff] %v5381
  %5484 = vst [vmem:[%s3 + $0xe8] sm:$0xff] %v5382
  %5485 = vst [vmem:[%s3 + $0xf0] sm:$0xff] %v5383
  %5486 = vst [vmem:[%s3 + $0xf8] sm:$0xff] %v5384
  %5487 = vst [vmem:[%s3 + $0x100] sm:$0xff] %v5385
  %5488 = vst [vmem:[%s3 + $0x108] sm:$0xff] %v5386
  %5489 = vst [vmem:[%s3 + $0x110] sm:$0xff] %v5387
  %5490 = vst [vmem:[%s3 + $0x118] sm:$0xff] %v5388
  %5491 = vst [vmem:[%s3 + $0x120] sm:$0xff] %v5389
  %5492 = vst [vmem:[%s3 + $0x128] sm:$0xff] %v5390
  %5493 = vst [vmem:[%s3 + $0x130] sm:$0xff] %v5391
  %5494 = vst [vmem:[%s3 + $0x138] sm:$0xff] %v5392
  %5495 = vst [vmem:[%s3 + $0x140] sm:$0xff] %v5393
  %5496 = vst [vmem:[%s3 + $0x148] sm:$0xff] %v5394
  %5497 = vst [vmem:[%s3 + $0x150] sm:$0xff] %v5395
  %5498 = vst [vmem:[%s3 + $0x158] sm:$0xff] %v5396
  %5499 = vst [vmem:[%s3 + $0x160] sm:$0xff] %v5397
  %5500 = vst [vmem:[%s3 + $0x168] sm:$0xff] %v5398
  %5501 = vst [vmem:[%s3 + $0x170] sm:$0xff] %v5399
  %5502 = vst [vmem:[%s3 + $0x178] sm:$0xff] %v5400
  %5503 = vst [vmem:[%s3 + $0x180] sm:$0xff] %v5401
  %5504 = vst [vmem:[%s3 + $0x188] sm:$0xff] %v5402
  %5505 = vst [vmem:[%s3 + $0x190] sm:$0xff] %v5403
  %5506 = vst [vmem:[%s3 + $0x198] sm:$0xff] %v5404
  %5507 = vst [vmem:[%s3 + $0x1a0] sm:$0xff] %v5405
  %5508 = vst [vmem:[%s3 + $0x1a8] sm:$0xff] %v5406
  %5509 = vst [vmem:[%s3 + $0x1b0] sm:$0xff] %v5407
  %5510 = vst [vmem:[%s3 + $0x1b8] sm:$0xff] %v5408
  %5511 = vst [vmem:[%s3 + $0x1c0] sm:$0xff] %v5409
  %5512 = vst [vmem:[%s3 + $0x1c8] sm:$0xff] %v5410
  %5513 = vst [vmem:[%s3 + $0x1d0] sm:$0xff] %v5411
  %5514 = vst [vmem:[%s3 + $0x1d8] sm:$0xff] %v5412
  %5515 = vst [vmem:[%s3 + $0x1e0] sm:$0xff] %v5413
  %5516 = vst [vmem:[%s3 + $0x1e8] sm:$0xff] %v5414
  %5517 = vst [vmem:[%s3 + $0x1f0] sm:$0xff] %v5415
  %5518 = vst [vmem:[%s3 + $0x1f8] sm:$0xff] %v5416
  %5519 = vst [vmem:[%s3 + $0x200] sm:$0xff] %v5417
  %5520 = vst [vmem:[%s3 + $0x208] sm:$0xff] %v5418
  %5521 = vst [vmem:[%s3 + $0x210] sm:$0xff] %v5419
  %5522 = vst [vmem:[%s3 + $0x218] sm:$0xff] %v5420
  %5523 = vst [vmem:[%s3 + $0x220] sm:$0xff] %v5421
  %5524 = vst [vmem:[%s3 + $0x228] sm:$0xff] %v5422
  %5525 = vst [vmem:[%s3 + $0x230] sm:$0xff] %v5423
  %5526 = vst [vmem:[%s3 + $0x238] sm:$0xff] %v5424
  %5527 = vst [vmem:[%s3 + $0x240] sm:$0xff] %v5425
  %5528 = vst [vmem:[%s3 + $0x248] sm:$0xff] %v5426
  %5529 = vst [vmem:[%s3 + $0x250] sm:$0xff] %v5427
  %5530 = vst [vmem:[%s3 + $0x258] sm:$0xff] %v5428
  %5531 = vst [vmem:[%s3 + $0x260] sm:$0xff] %v5429
  %5532 = vst [vmem:[%s3 + $0x268] sm:$0xff] %v5430
  %5533 = vst [vmem:[%s3 + $0x270] sm:$0xff] %v5431
  %5534 = vst [vmem:[%s3 + $0x278] sm:$0xff] %v5432
  %5535 = vst [vmem:[%s3 + $0x280] sm:$0xff] %v5433
  %5536 = vst [vmem:[%s3 + $0x288] sm:$0xff] %v5434
  %5537 = vst [vmem:[%s3 + $0x290] sm:$0xff] %v5435
  %5538 = vst [vmem:[%s3 + $0x298] sm:$0xff] %v5436
  %5539 = vst [vmem:[%s3 + $0x2a0] sm:$0xff] %v5437
  %5540 = vst [vmem:[%s3 + $0x2a8] sm:$0xff] %v5438
  %5541 = vst [vmem:[%s3 + $0x2b0] sm:$0xff] %v5439
  %5542 = vst [vmem:[%s3 + $0x2b8] sm:$0xff] %v5440
  %5543 = vst [vmem:[%s3 + $0x2c0] sm:$0xff] %v5441
  %5544 = vst [vmem:[%s3 + $0x2c8] sm:$0xff] %v5442
  %5545 = vst [vmem:[%s3 + $0x2d0] sm:$0xff] %v5443
  %5546 = vst [vmem:[%s3 + $0x2d8] sm:$0xff] %v5444
  %5547 = vst [vmem:[%s3 + $0x2e0] sm:$0xff] %v5445
  %5548 = vst [vmem:[%s3 + $0x2e8] sm:$0xff] %v5446
  %5549 = vst [vmem:[%s3 + $0x2f0] sm:$0xff] %v5447
  %5550 = vst [vmem:[%s3 + $0x2f8] sm:$0xff] %v5448
  %5551 = vst [vmem:[%s3 + $0x300] sm:$0xff] %v5449
  %5552 = vst [vmem:[%s3 + $0x308] sm:$0xff] %v5450
  %5553 = vst [vmem:[%s3 + $0x310] sm:$0xff] %v5451
  %5554 = vst [vmem:[%s3 + $0x318] sm:$0xff] %v5452
  %5555 = vst [vmem:[%s3 + $0x320] sm:$0xff] %v5453
  %5556 = vst [vmem:[%s3 + $0x328] sm:$0xff] %v5454
  // Predicated region
  $region14: #{fused_relu_gconv_bn_relu.1} parent=0 // pred_check
    _
  $region15: #{fused_relu_gconv_bn_relu.1} parent=0 // pred_check_branch
    %5558 = sbr.rel (0) target = $region17
  $region16: #{fused_relu_gconv_bn_relu.1} parent=0 // pred_region
    _
  $region17: #{fused_relu_gconv_bn_relu.1} parent=0 // pred_fallthru
    _
  // Predicated region
  $region18: #{fused_relu_gconv_bn_relu.1} parent=0 // pred_check
    _
  $region19: #{fused_relu_gconv_bn_relu.1} parent=0 // pred_check_branch
    %5560 = sbr.rel (0) target = $region21
  $region20: #{fused_relu_gconv_bn_relu.1} parent=0 // pred_region
    _
  $region21: #{fused_relu_gconv_bn_relu.1} parent=0 // pred_fallthru
    _

</llo_original>
